<compile_context>
chip_gen: v5e
topology: v5e:2x2
jax: 0.10.0
libtpu: 0.0.40
codegen_flags: <defaults>
</compile_context>

<pallas_src>
import functools

import jax
import jax.numpy as jnp
from jax.experimental import pallas as pl
from jax.experimental.pallas import tpu as pltpu

LANE = 128


def _round_up(x, m):
    return (x + m - 1) // m * m


def _resblock_kernel(x_ref, w_ref, b_ref, o_ref, acc_ref, *, H, W, Cp):
    """One batch image per grid step.

    x_ref  : [1, H+2, W+2, Cin_p]  bf16, spatially padded (pad=1), lane-padded
    w_ref  : [3, 3, Cin_p, 2*Cp]   bf16, conv1 / conv_skip stacked on out-chan
    b_ref  : [1, 2*Cp]             f32, biases stacked the same way
    o_ref  : [1, H*W, Cp]          f32 (lane-dense flattened spatial output)
    acc_ref: [H*W, 2*Cp]           f32 VMEM scratch accumulator
    """
    hw = H * W
    acc_ref[...] = jnp.zeros_like(acc_ref)
    xv = x_ref[0]  # [H+2, W+2, Cin_p] bf16, loaded once per image

    # 3x3 conv as 9 shifted-tap matmuls on the MXU (static unrolled loop).
    for di in range(3):
        for dj in range(3):
            tap = xv[di:di + H, dj:dj + W, :].reshape(hw, -1)  # [HW, Cin_p]
            acc_ref[...] += jnp.dot(tap, w_ref[di, dj],
                                    preferred_element_type=jnp.float32)

    y = acc_ref[...] + b_ref[...]
    y1 = y[:, :Cp]   # conv1 path
    ys = y[:, Cp:]   # conv_skip path
    o_ref[0] = (jnp.maximum(y1, 0.0) + ys).astype(o_ref.dtype)


@functools.partial(jax.jit, static_argnames=("stride",))
def resblock_conv_skip_forward(x_nchw, w1, b1, ws, bs, *, stride=1):
    """Forward pass of ResBlockConvSkip (use_bn=False, use_1x1=False).

    x_nchw : [N, Cin, H, W] f32 (PyTorch layout)
    w1, ws : [Cout, Cin, 3, 3] f32 (PyTorch Conv2d weight layout)
    b1, bs : [Cout] f32
    Returns: [N, Cout, Ho, Wo] f32 == relu(conv1(x)) + conv_skip(x)
    """
    # TODO(synk): `use_1x1` branch (1x1 Conv2d(1, in_channel) pre-conv) not implemented.
    # TODO(synk): `use_bn` branch (BatchNorm2d with batch statistics) not implemented.
    N, Cin, H, W = x_nchw.shape
    Cout = w1.shape[0]
    Cin_p = _round_up(Cin, LANE)
    Cout_p = _round_up(Cout, LANE)
    Hp2, Wp2, HW = H + 2, W + 2, H * W

    # NHWC, spatial pad=1, lane-pad channels, bf16 for the MXU.
    x = jnp.transpose(x_nchw, (0, 2, 3, 1))
    x = jnp.pad(x, ((0, 0), (1, 1), (1, 1), (0, Cin_p - Cin)))
    x = x.astype(jnp.bfloat16)

    def prep_w(w):
        w = jnp.transpose(w, (2, 3, 1, 0))  # [3, 3, Cin, Cout]
        w = jnp.pad(w, ((0, 0), (0, 0), (0, Cin_p - Cin), (0, Cout_p - Cout)))
        return w.astype(jnp.bfloat16)

    def prep_b(b):
        return jnp.pad(b, (0, Cout_p - Cout)).astype(jnp.float32)

    w_cat = jnp.concatenate([prep_w(w1), prep_w(ws)], axis=-1)          # [3,3,Cin_p,2*Cout_p]
    b_cat = jnp.concatenate([prep_b(b1), prep_b(bs)])[None, :]          # [1, 2*Cout_p]

    kernel = functools.partial(_resblock_kernel, H=H, W=W, Cp=Cout_p)

    out_flat = pl.pallas_call(
        kernel,
        out_shape=jax.ShapeDtypeStruct((N, HW, Cout_p), jnp.float32),
        grid=(N,),
        in_specs=[
            pl.BlockSpec((1, Hp2, Wp2, Cin_p), lambda n: (n, 0, 0, 0)),
            pl.BlockSpec((3, 3, Cin_p, 2 * Cout_p), lambda n: (0, 0, 0, 0)),
            pl.BlockSpec((1, 2 * Cout_p), lambda n: (0, 0)),
        ],
        out_specs=pl.BlockSpec((1, HW, Cout_p), lambda n: (n, 0, 0)),
        scratch_shapes=[pltpu.VMEM((HW, 2 * Cout_p), jnp.float32)],
        compiler_params=pltpu.CompilerParams(
            dimension_semantics=("parallel",)),
    )(x, w_cat, b_cat)

    out = out_flat.reshape(N, H, W, Cout_p)
    if stride > 1:
        # k=3, pad=1, stride=s  ==  stride-1 conv output subsampled at [::s, ::s]
        out = out[:, ::stride, ::stride, :]
    out = out[..., :Cout]
    return jnp.transpose(out, (0, 3, 1, 2))  # back to NCHW


def reference_forward(x_nchw, w1, b1, ws, bs, *, stride=1):
    """Pure-JAX reference (matches the kernel's bf16 input rounding)."""
    def conv(x, w, b):
        xr = x.astype(jnp.bfloat16).astype(jnp.float32)
        wr = w.astype(jnp.bfloat16).astype(jnp.float32)
        y = jax.lax.conv_general_dilated(
            xr, wr, window_strides=(stride, stride),
            padding=((1, 1), (1, 1)),
            dimension_numbers=("NCHW", "OIHW", "NCHW"),
            precision=jax.lax.Precision.HIGHEST)
        return y + b.reshape(1, -1, 1, 1)

    return jax.nn.relu(conv(x_nchw, w1, b1)) + conv(x_nchw, ws, bs)


if __name__ == "__main__":
    key = jax.random.PRNGKey(0)
    k1, k2, k3, k4, kx = jax.random.split(key, 5)

    N, Cin, H, W = 2, 4, 16, 16
    Cout = 8

    fan_in = Cin * 3 * 3
    bound = 1.0 / (fan_in ** 0.5)
    w1 = jax.random.uniform(k1, (Cout, Cin, 3, 3), jnp.float32,
                            minval=-bound, maxval=bound)
    b1 = jax.random.uniform(k2, (Cout,), jnp.float32,
                            minval=-bound, maxval=bound)
    ws = jax.random.uniform(k3, (Cout, Cin, 3, 3), jnp.float32,
                            minval=-bound, maxval=bound)
    bs = jax.random.uniform(k4, (Cout,), jnp.float32,
                            minval=-bound, maxval=bound)
    x = jax.random.normal(kx, (N, Cin, H, W), jnp.float32)

    # stride = 1
    out = jax.block_until_ready(
        resblock_conv_skip_forward(x, w1, b1, ws, bs, stride=1))
    ref = reference_forward(x, w1, b1, ws, bs, stride=1)
    assert out.shape == ref.shape, (out.shape, ref.shape)
    err1 = float(jnp.max(jnp.abs(out - ref)))
    assert jnp.allclose(out, ref, atol=1e-3, rtol=1e-3), err1

    # stride = 2 (exercises the module's stride argument)
    out2 = jax.block_until_ready(
        resblock_conv_skip_forward(x, w1, b1, ws, bs, stride=2))
    ref2 = reference_forward(x, w1, b1, ws, bs, stride=2)
    assert out2.shape == ref2.shape, (out2.shape, ref2.shape)
    err2 = float(jnp.max(jnp.abs(out2 - ref2)))
    assert jnp.allclose(out2, ref2, atol=1e-3, rtol=1e-3), err2

    print("KERNEL_OK")
</pallas_src>

<mosaic_0001>
module attributes {stable_mosaic.version = 11 : i64} {
  func.func @_resblock_kernel(%arg0: i32, %arg1: memref<1x18x18x128xbf16, #tpu.memory_space<vmem>>, %arg2: memref<3x3x128x256xbf16, #tpu.memory_space<vmem>>, %arg3: memref<1x256xf32, #tpu.memory_space<vmem>>, %arg4: memref<1x256x128xf32, #tpu.memory_space<vmem>>, %arg5: memref<256x256xf32, #tpu.memory_space<vmem>>) attributes {dimension_semantics = [#tpu.dimension_semantics<parallel>], iteration_bounds = array<i64: 2>, scalar_prefetch = 0 : i64, scratch_operands = 1 : i64, tpu.core_type = #tpu.core_type<tc>, window_params = [{transform_indices = @transform_0, window_bounds = array<i64: 1, 18, 18, 128>}, {pipeline_mode = #tpu.pipeline_mode<synchronous>, transform_indices = @transform_1, window_bounds = array<i64: 3, 3, 128, 256>}, {pipeline_mode = #tpu.pipeline_mode<synchronous>, transform_indices = @transform_2, window_bounds = array<i64: 1, 256>}, {transform_indices = @transform_3, window_bounds = array<i64: 1, 256, 128>}]} {
    %cst = arith.constant 0.000000e+00 : f32
    %0 = vector.broadcast %cst : f32 to vector<256x256xf32>
    %c0 = arith.constant 0 : index
    %c0_0 = arith.constant 0 : index
    %1 = vector.load %arg5[%c0, %c0_0] : memref<256x256xf32, #tpu.memory_space<vmem>>, vector<256x256xf32>
    tpu.vector_store %arg5[%c0, %c0_0], %0 {strides = array<i32>} : memref<256x256xf32, #tpu.memory_space<vmem>>, vector<256x256xf32>,
    %c0_1 = arith.constant 0 : index
    %c0_2 = arith.constant 0 : index
    %c0_3 = arith.constant 0 : index
    %c0_4 = arith.constant 0 : index
    %2 = vector.load %arg1[%c0_1, %c0_2, %c0_3, %c0_4] : memref<1x18x18x128xbf16, #tpu.memory_space<vmem>>, vector<1x18x18x128xbf16>
    %3 = vector.shape_cast %2 : vector<1x18x18x128xbf16> to vector<18x18x128xbf16>
    %4 = vector.extract_strided_slice %3 {offsets = [0, 0, 0], sizes = [16, 16, 128], strides = [1, 1, 1]} : vector<18x18x128xbf16> to vector<16x16x128xbf16>
    %5 = vector.shape_cast %4 : vector<16x16x128xbf16> to vector<256x128xbf16>
    %c0_5 = arith.constant 0 : index
    %c0_6 = arith.constant 0 : index
    %6 = vector.load %arg5[%c0_5, %c0_6] : memref<256x256xf32, #tpu.memory_space<vmem>>, vector<256x256xf32>
    %c0_7 = arith.constant 0 : index
    %c0_8 = arith.constant 0 : index
    %c0_9 = arith.constant 0 : index
    %c0_10 = arith.constant 0 : index
    %7 = vector.load %arg2[%c0_7, %c0_8, %c0_9, %c0_10] : memref<3x3x128x256xbf16, #tpu.memory_space<vmem>>, vector<1x1x128x256xbf16>
    %8 = vector.shape_cast %7 : vector<1x1x128x256xbf16> to vector<128x256xbf16>
    %cst_11 = arith.constant dense<0.000000e+00> : vector<256x256xf32>
    %9 = tpu.matmul %5, %8, %cst_11 {dimension_numbers = #tpu.dot_dimension_numbers<[1], [0], [0], [1], [0, 0, 1, 1], [], []>} : vector<256x128xbf16>, vector<128x256xbf16>, vector<256x256xf32> -> vector<256x256xf32>
    %10 = arith.addf %6, %9 : vector<256x256xf32>
    %c0_12 = arith.constant 0 : index
    %c0_13 = arith.constant 0 : index
    %11 = vector.load %arg5[%c0_12, %c0_13] : memref<256x256xf32, #tpu.memory_space<vmem>>, vector<256x256xf32>
    tpu.vector_store %arg5[%c0_12, %c0_13], %10 {strides = array<i32>} : memref<256x256xf32, #tpu.memory_space<vmem>>, vector<256x256xf32>,
    %12 = vector.extract_strided_slice %3 {offsets = [0, 1, 0], sizes = [16, 16, 128], strides = [1, 1, 1]} : vector<18x18x128xbf16> to vector<16x16x128xbf16>
    %13 = vector.shape_cast %12 : vector<16x16x128xbf16> to vector<256x128xbf16>
    %c0_14 = arith.constant 0 : index
    %c0_15 = arith.constant 0 : index
    %14 = vector.load %arg5[%c0_14, %c0_15] : memref<256x256xf32, #tpu.memory_space<vmem>>, vector<256x256xf32>
    %c0_16 = arith.constant 0 : index
    %c1 = arith.constant 1 : index
    %c0_17 = arith.constant 0 : index
    %c0_18 = arith.constant 0 : index
    %15 = vector.load %arg2[%c0_16, %c1, %c0_17, %c0_18] : memref<3x3x128x256xbf16, #tpu.memory_space<vmem>>, vector<1x1x128x256xbf16>
    %16 = vector.shape_cast %15 : vector<1x1x128x256xbf16> to vector<128x256xbf16>
    %cst_19 = arith.constant dense<0.000000e+00> : vector<256x256xf32>
    %17 = tpu.matmul %13, %16, %cst_19 {dimension_numbers = #tpu.dot_dimension_numbers<[1], [0], [0], [1], [0, 0, 1, 1], [], []>} : vector<256x128xbf16>, vector<128x256xbf16>, vector<256x256xf32> -> vector<256x256xf32>
    %18 = arith.addf %14, %17 : vector<256x256xf32>
    %c0_20 = arith.constant 0 : index
    %c0_21 = arith.constant 0 : index
    %19 = vector.load %arg5[%c0_20, %c0_21] : memref<256x256xf32, #tpu.memory_space<vmem>>, vector<256x256xf32>
    tpu.vector_store %arg5[%c0_20, %c0_21], %18 {strides = array<i32>} : memref<256x256xf32, #tpu.memory_space<vmem>>, vector<256x256xf32>,
    %20 = vector.extract_strided_slice %3 {offsets = [0, 2, 0], sizes = [16, 16, 128], strides = [1, 1, 1]} : vector<18x18x128xbf16> to vector<16x16x128xbf16>
    %21 = vector.shape_cast %20 : vector<16x16x128xbf16> to vector<256x128xbf16>
    %c0_22 = arith.constant 0 : index
    %c0_23 = arith.constant 0 : index
    %22 = vector.load %arg5[%c0_22, %c0_23] : memref<256x256xf32, #tpu.memory_space<vmem>>, vector<256x256xf32>
    %c0_24 = arith.constant 0 : index
    %c2 = arith.constant 2 : index
    %c0_25 = arith.constant 0 : index
    %c0_26 = arith.constant 0 : index
    %23 = vector.load %arg2[%c0_24, %c2, %c0_25, %c0_26] : memref<3x3x128x256xbf16, #tpu.memory_space<vmem>>, vector<1x1x128x256xbf16>
    %24 = vector.shape_cast %23 : vector<1x1x128x256xbf16> to vector<128x256xbf16>
    %cst_27 = arith.constant dense<0.000000e+00> : vector<256x256xf32>
    %25 = tpu.matmul %21, %24, %cst_27 {dimension_numbers = #tpu.dot_dimension_numbers<[1], [0], [0], [1], [0, 0, 1, 1], [], []>} : vector<256x128xbf16>, vector<128x256xbf16>, vector<256x256xf32> -> vector<256x256xf32>
    %26 = arith.addf %22, %25 : vector<256x256xf32>
    %c0_28 = arith.constant 0 : index
    %c0_29 = arith.constant 0 : index
    %27 = vector.load %arg5[%c0_28, %c0_29] : memref<256x256xf32, #tpu.memory_space<vmem>>, vector<256x256xf32>
    tpu.vector_store %arg5[%c0_28, %c0_29], %26 {strides = array<i32>} : memref<256x256xf32, #tpu.memory_space<vmem>>, vector<256x256xf32>,
    %28 = vector.extract_strided_slice %3 {offsets = [1, 0, 0], sizes = [16, 16, 128], strides = [1, 1, 1]} : vector<18x18x128xbf16> to vector<16x16x128xbf16>
    %29 = vector.shape_cast %28 : vector<16x16x128xbf16> to vector<256x128xbf16>
    %c0_30 = arith.constant 0 : index
    %c0_31 = arith.constant 0 : index
    %30 = vector.load %arg5[%c0_30, %c0_31] : memref<256x256xf32, #tpu.memory_space<vmem>>, vector<256x256xf32>
    %c1_32 = arith.constant 1 : index
    %c0_33 = arith.constant 0 : index
    %c0_34 = arith.constant 0 : index
    %c0_35 = arith.constant 0 : index
    %31 = vector.load %arg2[%c1_32, %c0_33, %c0_34, %c0_35] : memref<3x3x128x256xbf16, #tpu.memory_space<vmem>>, vector<1x1x128x256xbf16>
    %32 = vector.shape_cast %31 : vector<1x1x128x256xbf16> to vector<128x256xbf16>
    %cst_36 = arith.constant dense<0.000000e+00> : vector<256x256xf32>
    %33 = tpu.matmul %29, %32, %cst_36 {dimension_numbers = #tpu.dot_dimension_numbers<[1], [0], [0], [1], [0, 0, 1, 1], [], []>} : vector<256x128xbf16>, vector<128x256xbf16>, vector<256x256xf32> -> vector<256x256xf32>
    %34 = arith.addf %30, %33 : vector<256x256xf32>
    %c0_37 = arith.constant 0 : index
    %c0_38 = arith.constant 0 : index
    %35 = vector.load %arg5[%c0_37, %c0_38] : memref<256x256xf32, #tpu.memory_space<vmem>>, vector<256x256xf32>
    tpu.vector_store %arg5[%c0_37, %c0_38], %34 {strides = array<i32>} : memref<256x256xf32, #tpu.memory_space<vmem>>, vector<256x256xf32>,
    %36 = vector.extract_strided_slice %3 {offsets = [1, 1, 0], sizes = [16, 16, 128], strides = [1, 1, 1]} : vector<18x18x128xbf16> to vector<16x16x128xbf16>
    %37 = vector.shape_cast %36 : vector<16x16x128xbf16> to vector<256x128xbf16>
    %c0_39 = arith.constant 0 : index
    %c0_40 = arith.constant 0 : index
    %38 = vector.load %arg5[%c0_39, %c0_40] : memref<256x256xf32, #tpu.memory_space<vmem>>, vector<256x256xf32>
    %c1_41 = arith.constant 1 : index
    %c1_42 = arith.constant 1 : index
    %c0_43 = arith.constant 0 : index
    %c0_44 = arith.constant 0 : index
    %39 = vector.load %arg2[%c1_41, %c1_42, %c0_43, %c0_44] : memref<3x3x128x256xbf16, #tpu.memory_space<vmem>>, vector<1x1x128x256xbf16>
    %40 = vector.shape_cast %39 : vector<1x1x128x256xbf16> to vector<128x256xbf16>
    %cst_45 = arith.constant dense<0.000000e+00> : vector<256x256xf32>
    %41 = tpu.matmul %37, %40, %cst_45 {dimension_numbers = #tpu.dot_dimension_numbers<[1], [0], [0], [1], [0, 0, 1, 1], [], []>} : vector<256x128xbf16>, vector<128x256xbf16>, vector<256x256xf32> -> vector<256x256xf32>
    %42 = arith.addf %38, %41 : vector<256x256xf32>
    %c0_46 = arith.constant 0 : index
    %c0_47 = arith.constant 0 : index
    %43 = vector.load %arg5[%c0_46, %c0_47] : memref<256x256xf32, #tpu.memory_space<vmem>>, vector<256x256xf32>
    tpu.vector_store %arg5[%c0_46, %c0_47], %42 {strides = array<i32>} : memref<256x256xf32, #tpu.memory_space<vmem>>, vector<256x256xf32>,
    %44 = vector.extract_strided_slice %3 {offsets = [1, 2, 0], sizes = [16, 16, 128], strides = [1, 1, 1]} : vector<18x18x128xbf16> to vector<16x16x128xbf16>
    %45 = vector.shape_cast %44 : vector<16x16x128xbf16> to vector<256x128xbf16>
    %c0_48 = arith.constant 0 : index
    %c0_49 = arith.constant 0 : index
    %46 = vector.load %arg5[%c0_48, %c0_49] : memref<256x256xf32, #tpu.memory_space<vmem>>, vector<256x256xf32>
    %c1_50 = arith.constant 1 : index
    %c2_51 = arith.constant 2 : index
    %c0_52 = arith.constant 0 : index
    %c0_53 = arith.constant 0 : index
    %47 = vector.load %arg2[%c1_50, %c2_51, %c0_52, %c0_53] : memref<3x3x128x256xbf16, #tpu.memory_space<vmem>>, vector<1x1x128x256xbf16>
    %48 = vector.shape_cast %47 : vector<1x1x128x256xbf16> to vector<128x256xbf16>
    %cst_54 = arith.constant dense<0.000000e+00> : vector<256x256xf32>
    %49 = tpu.matmul %45, %48, %cst_54 {dimension_numbers = #tpu.dot_dimension_numbers<[1], [0], [0], [1], [0, 0, 1, 1], [], []>} : vector<256x128xbf16>, vector<128x256xbf16>, vector<256x256xf32> -> vector<256x256xf32>
    %50 = arith.addf %46, %49 : vector<256x256xf32>
    %c0_55 = arith.constant 0 : index
    %c0_56 = arith.constant 0 : index
    %51 = vector.load %arg5[%c0_55, %c0_56] : memref<256x256xf32, #tpu.memory_space<vmem>>, vector<256x256xf32>
    tpu.vector_store %arg5[%c0_55, %c0_56], %50 {strides = array<i32>} : memref<256x256xf32, #tpu.memory_space<vmem>>, vector<256x256xf32>,
    %52 = vector.extract_strided_slice %3 {offsets = [2, 0, 0], sizes = [16, 16, 128], strides = [1, 1, 1]} : vector<18x18x128xbf16> to vector<16x16x128xbf16>
    %53 = vector.shape_cast %52 : vector<16x16x128xbf16> to vector<256x128xbf16>
    %c0_57 = arith.constant 0 : index
    %c0_58 = arith.constant 0 : index
    %54 = vector.load %arg5[%c0_57, %c0_58] : memref<256x256xf32, #tpu.memory_space<vmem>>, vector<256x256xf32>
    %c2_59 = arith.constant 2 : index
    %c0_60 = arith.constant 0 : index
    %c0_61 = arith.constant 0 : index
    %c0_62 = arith.constant 0 : index
    %55 = vector.load %arg2[%c2_59, %c0_60, %c0_61, %c0_62] : memref<3x3x128x256xbf16, #tpu.memory_space<vmem>>, vector<1x1x128x256xbf16>
    %56 = vector.shape_cast %55 : vector<1x1x128x256xbf16> to vector<128x256xbf16>
    %cst_63 = arith.constant dense<0.000000e+00> : vector<256x256xf32>
    %57 = tpu.matmul %53, %56, %cst_63 {dimension_numbers = #tpu.dot_dimension_numbers<[1], [0], [0], [1], [0, 0, 1, 1], [], []>} : vector<256x128xbf16>, vector<128x256xbf16>, vector<256x256xf32> -> vector<256x256xf32>
    %58 = arith.addf %54, %57 : vector<256x256xf32>
    %c0_64 = arith.constant 0 : index
    %c0_65 = arith.constant 0 : index
    %59 = vector.load %arg5[%c0_64, %c0_65] : memref<256x256xf32, #tpu.memory_space<vmem>>, vector<256x256xf32>
    tpu.vector_store %arg5[%c0_64, %c0_65], %58 {strides = array<i32>} : memref<256x256xf32, #tpu.memory_space<vmem>>, vector<256x256xf32>,
    %60 = vector.extract_strided_slice %3 {offsets = [2, 1, 0], sizes = [16, 16, 128], strides = [1, 1, 1]} : vector<18x18x128xbf16> to vector<16x16x128xbf16>
    %61 = vector.shape_cast %60 : vector<16x16x128xbf16> to vector<256x128xbf16>
    %c0_66 = arith.constant 0 : index
    %c0_67 = arith.constant 0 : index
    %62 = vector.load %arg5[%c0_66, %c0_67] : memref<256x256xf32, #tpu.memory_space<vmem>>, vector<256x256xf32>
    %c2_68 = arith.constant 2 : index
    %c1_69 = arith.constant 1 : index
    %c0_70 = arith.constant 0 : index
    %c0_71 = arith.constant 0 : index
    %63 = vector.load %arg2[%c2_68, %c1_69, %c0_70, %c0_71] : memref<3x3x128x256xbf16, #tpu.memory_space<vmem>>, vector<1x1x128x256xbf16>
    %64 = vector.shape_cast %63 : vector<1x1x128x256xbf16> to vector<128x256xbf16>
    %cst_72 = arith.constant dense<0.000000e+00> : vector<256x256xf32>
    %65 = tpu.matmul %61, %64, %cst_72 {dimension_numbers = #tpu.dot_dimension_numbers<[1], [0], [0], [1], [0, 0, 1, 1], [], []>} : vector<256x128xbf16>, vector<128x256xbf16>, vector<256x256xf32> -> vector<256x256xf32>
    %66 = arith.addf %62, %65 : vector<256x256xf32>
    %c0_73 = arith.constant 0 : index
    %c0_74 = arith.constant 0 : index
    %67 = vector.load %arg5[%c0_73, %c0_74] : memref<256x256xf32, #tpu.memory_space<vmem>>, vector<256x256xf32>
    tpu.vector_store %arg5[%c0_73, %c0_74], %66 {strides = array<i32>} : memref<256x256xf32, #tpu.memory_space<vmem>>, vector<256x256xf32>,
    %68 = vector.extract_strided_slice %3 {offsets = [2, 2, 0], sizes = [16, 16, 128], strides = [1, 1, 1]} : vector<18x18x128xbf16> to vector<16x16x128xbf16>
    %69 = vector.shape_cast %68 : vector<16x16x128xbf16> to vector<256x128xbf16>
    %c0_75 = arith.constant 0 : index
    %c0_76 = arith.constant 0 : index
    %70 = vector.load %arg5[%c0_75, %c0_76] : memref<256x256xf32, #tpu.memory_space<vmem>>, vector<256x256xf32>
    %c2_77 = arith.constant 2 : index
    %c2_78 = arith.constant 2 : index
    %c0_79 = arith.constant 0 : index
    %c0_80 = arith.constant 0 : index
    %71 = vector.load %arg2[%c2_77, %c2_78, %c0_79, %c0_80] : memref<3x3x128x256xbf16, #tpu.memory_space<vmem>>, vector<1x1x128x256xbf16>
    %72 = vector.shape_cast %71 : vector<1x1x128x256xbf16> to vector<128x256xbf16>
    %cst_81 = arith.constant dense<0.000000e+00> : vector<256x256xf32>
    %73 = tpu.matmul %69, %72, %cst_81 {dimension_numbers = #tpu.dot_dimension_numbers<[1], [0], [0], [1], [0, 0, 1, 1], [], []>} : vector<256x128xbf16>, vector<128x256xbf16>, vector<256x256xf32> -> vector<256x256xf32>
    %74 = arith.addf %70, %73 : vector<256x256xf32>
    %c0_82 = arith.constant 0 : index
    %c0_83 = arith.constant 0 : index
    %75 = vector.load %arg5[%c0_82, %c0_83] : memref<256x256xf32, #tpu.memory_space<vmem>>, vector<256x256xf32>
    tpu.vector_store %arg5[%c0_82, %c0_83], %74 {strides = array<i32>} : memref<256x256xf32, #tpu.memory_space<vmem>>, vector<256x256xf32>,
    %c0_84 = arith.constant 0 : index
    %c0_85 = arith.constant 0 : index
    %76 = vector.load %arg5[%c0_84, %c0_85] : memref<256x256xf32, #tpu.memory_space<vmem>>, vector<256x256xf32>
    %c0_86 = arith.constant 0 : index
    %c0_87 = arith.constant 0 : index
    %77 = vector.load %arg3[%c0_86, %c0_87] : memref<1x256xf32, #tpu.memory_space<vmem>>, vector<1x256xf32>
    %78 = vector.broadcast %77 : vector<1x256xf32> to vector<256x256xf32>
    %79 = arith.addf %76, %78 : vector<256x256xf32>
    %80 = vector.extract_strided_slice %79 {offsets = [0, 0], sizes = [256, 128], strides = [1, 1]} : vector<256x256xf32> to vector<256x128xf32>
    %81 = vector.extract_strided_slice %79 {offsets = [0, 128], sizes = [256, 128], strides = [1, 1]} : vector<256x256xf32> to vector<256x128xf32>
    %cst_88 = arith.constant 0.000000e+00 : f32
    %82 = vector.broadcast %cst_88 : f32 to vector<256x128xf32>
    %83 = arith.maximumf %80, %82 : vector<256x128xf32>
    %84 = arith.addf %83, %81 : vector<256x128xf32>
    %c0_89 = arith.constant 0 : index
    %c0_90 = arith.constant 0 : index
    %c0_91 = arith.constant 0 : index
    %85 = vector.load %arg4[%c0_89, %c0_90, %c0_91] : memref<1x256x128xf32, #tpu.memory_space<vmem>>, vector<1x256x128xf32>
    %86 = vector.shape_cast %85 : vector<1x256x128xf32> to vector<256x128xf32>
    %87 = vector.shape_cast %84 : vector<256x128xf32> to vector<1x256x128xf32>
    tpu.vector_store %arg4[%c0_89, %c0_90, %c0_91], %87 {strides = array<i32>} : memref<1x256x128xf32, #tpu.memory_space<vmem>>, vector<1x256x128xf32>,
    return
  }
  func.func @transform_0(%arg0: i32) -> (i32, i32, i32, i32) {
    %c0_i32 = arith.constant 0 : i32
    %c0_i32_0 = arith.constant 0 : i32
    %c0_i32_1 = arith.constant 0 : i32
    %c0_i32_2 = arith.constant 0 : i32
    return %arg0, %c0_i32, %c0_i32_0, %c0_i32_1 : i32, i32, i32, i32
  }
  func.func @transform_1(%arg0: i32) -> (i32, i32, i32, i32) {
    %c0_i32 = arith.constant 0 : i32
    %c0_i32_0 = arith.constant 0 : i32
    %c0_i32_1 = arith.constant 0 : i32
    %c0_i32_2 = arith.constant 0 : i32
    %c0_i32_3 = arith.constant 0 : i32
    return %c0_i32, %c0_i32_0, %c0_i32_1, %c0_i32_2 : i32, i32, i32, i32
  }
  func.func @transform_2(%arg0: i32) -> (i32, i32) {
    %c0_i32 = arith.constant 0 : i32
    %c0_i32_0 = arith.constant 0 : i32
    %c0_i32_1 = arith.constant 0 : i32
    return %c0_i32, %c0_i32_0 : i32, i32
  }
  func.func @transform_3(%arg0: i32) -> (i32, i32, i32) {
    %c0_i32 = arith.constant 0 : i32
    %c0_i32_0 = arith.constant 0 : i32
    %c0_i32_1 = arith.constant 0 : i32
    return %arg0, %c0_i32, %c0_i32_0 : i32, i32, i32
  }
}

</mosaic_0001>

<llo_original>
// kernel: resblock_conv_skip_forward.1
$region0: #{resblock_conv_skip_forward.1}
  #allocation0 [shape = 'u32[]', space=smem, size = 0x4, offset = 0x4, fixed_abs, tag = 'smem constant byte address 0x4 - core index']
  #allocation1 [shape = 'u32[72,128]{1,0:T(1,128)}', space=vmem, size = 0x9000, scoped, tag = 'internal scratch']
  #allocation2 [shape = 'f32[256,256]{1,0:T(8,128)}', space=vmem, size = 0x40000, scoped, tag = 'scratch operand']
  %s0 = inlined_call_operand.vmem [shape: bf16[2,18,18,128], index: 0, kind: input, shape index: {}]
  %s1 = inlined_call_operand.vmem [shape: bf16[3,3,128,256], index: 1, kind: input, shape index: {}]
  %s2 = inlined_call_operand.vmem [shape: f32[1,256], index: 2, kind: input, shape index: {}]
  %s3 = inlined_call_operand.vmem [shape: f32[2,256,128], index: 3, kind: output, shape index: {}]
  %s4 = sld [smem:[#allocation0]]
  $region45: #{resblock_conv_skip_forward.1} parent=0
    _
  %s6 = ssub.s32 1, %s4
  %s7 = scalar_select 0, %s6, %s4
  loop: start=0, step=1, limit=4
  $region2: #{resblock_conv_skip_forward.1} parent=0 // loop_pre_header
    _
  $region3: #{resblock_conv_skip_forward.1} parent=0 // loop_header
    %s9 = sphi 0, %s13
    %p10 = scmp.ge.s32.totalorder %s9, 4
    %s19 = sphi 0, %s21
    %s22 = sphi 0, %s19
    %s23 = sphi 0, %s22
    %s39 = sphi 0, %s23
    %s43 = sphi 0, %s43
    %s45 = sphi 0, %s43
    %s46 = sphi 0, %s45
    %s60 = sphi 0, %s46
    %s64 = sphi 0, %s64
    %s66 = sphi 0, %s64
    %s67 = sphi 0, %s66
    %s81 = sphi 0, %s67
    %s87 = sphi 0, %s89
    %s90 = sphi 0, %s87
    %s91 = sphi 0, %s90
    %s107 = sphi 0, %s91
  $region4: #{resblock_conv_skip_forward.1} parent=0 // loop_header_branch
    %12 = sbr.rel (%p10) target = $region8
  $region5: #{resblock_conv_skip_forward.1} parent=0 // loop_body
    %s14 = ssub.s32 %s9, 1
    %s15 = ssub.s32 %s9, 2
    %s16 = sadd.s32 %s9, 1
    %s17 = ssub.s32 %s9, %s16
    %p18 = scmp.eq.s32.totalorder %s17, 0
    %s20 = sadd.s32 %s19, 1
    %s21 = scalar_select %p18, %s19, %s20
    %p24 = pneg %p18
    %p25 = scmp.eq.s32.totalorder %s9, 1
    %p26 = por %p24, %p25
    %p27 = scmp.ne.s32.totalorder %s19, %s22
    %p28 = scmp.eq.s32.totalorder %s9, 0
    %p29 = por %p27, %p28
    %p30 = scmp.ne.s32.totalorder %s19, %s22
    %p31 = scmp.eq.s32.totalorder %s14, 1
    %p32 = por %p30, %p31
    %p33 = scmp.ne.s32.totalorder %s22, %s23
    %p34 = scmp.eq.s32.totalorder %s14, 0
    %p35 = por %p33, %p34
    %p36 = scmp.ne.s32.totalorder %s22, %s23
    %p37 = scmp.eq.s32.totalorder %s15, 1
    %p38 = por %p36, %p37
    %p40 = scmp.ne.s32.totalorder %s23, %s39
    %p41 = scmp.eq.s32.totalorder %s15, 0
    %p42 = por %p40, %p41
    %s44 = sadd.s32 %s43, 1
    %p47 = scmp.eq.s32.totalorder %s9, 1
    %p48 = scmp.ne.s32.totalorder %s43, %s45
    %p49 = scmp.eq.s32.totalorder %s9, 0
    %p50 = por %p48, %p49
    %p51 = scmp.ne.s32.totalorder %s43, %s45
    %p52 = scmp.eq.s32.totalorder %s14, 1
    %p53 = por %p51, %p52
    %p54 = scmp.ne.s32.totalorder %s45, %s46
    %p55 = scmp.eq.s32.totalorder %s14, 0
    %p56 = por %p54, %p55
    %p57 = scmp.ne.s32.totalorder %s45, %s46
    %p58 = scmp.eq.s32.totalorder %s15, 1
    %p59 = por %p57, %p58
    %p61 = scmp.ne.s32.totalorder %s46, %s60
    %p62 = scmp.eq.s32.totalorder %s15, 0
    %p63 = por %p61, %p62
    %s65 = sadd.s32 %s64, 1
    %p68 = scmp.eq.s32.totalorder %s9, 1
    %p69 = scmp.ne.s32.totalorder %s64, %s66
    %p70 = scmp.eq.s32.totalorder %s9, 0
    %p71 = por %p69, %p70
    %p72 = scmp.ne.s32.totalorder %s64, %s66
    %p73 = scmp.eq.s32.totalorder %s14, 1
    %p74 = por %p72, %p73
    %p75 = scmp.ne.s32.totalorder %s66, %s67
    %p76 = scmp.eq.s32.totalorder %s14, 0
    %p77 = por %p75, %p76
    %p78 = scmp.ne.s32.totalorder %s66, %s67
    %p79 = scmp.eq.s32.totalorder %s15, 1
    %p80 = por %p78, %p79
    %p82 = scmp.ne.s32.totalorder %s67, %s81
    %p83 = scmp.eq.s32.totalorder %s15, 0
    %p84 = por %p82, %p83
    %s85 = ssub.s32 %s9, %s16
    %p86 = scmp.eq.s32.totalorder %s85, 0
    %s88 = sadd.s32 %s87, 1
    %s89 = scalar_select %p86, %s87, %s88
    %p92 = pneg %p86
    %p93 = scmp.eq.s32.totalorder %s9, 1
    %p94 = por %p92, %p93
    %p95 = scmp.ne.s32.totalorder %s87, %s90
    %p96 = scmp.eq.s32.totalorder %s9, 0
    %p97 = por %p95, %p96
    %p98 = scmp.ne.s32.totalorder %s87, %s90
    %p99 = scmp.eq.s32.totalorder %s14, 1
    %p100 = por %p98, %p99
    %p101 = scmp.ne.s32.totalorder %s90, %s91
    %p102 = scmp.eq.s32.totalorder %s14, 0
    %p103 = por %p101, %p102
    %p104 = scmp.ne.s32.totalorder %s90, %s91
    %p105 = scmp.eq.s32.totalorder %s15, 1
    %p106 = por %p104, %p105
    %p108 = scmp.ne.s32.totalorder %s91, %s107
    %p109 = scmp.eq.s32.totalorder %s15, 0
    %p110 = por %p108, %p109
    %p111 = scmp.le.s32.totalorder 1, %s9
    %p112 = scmp.lt.s32.totalorder %s9, 3
    %p113 = pnand %p111, %p112
    %p114 = pneg %p113
    // Predicated region
    $region9: #{resblock_conv_skip_forward.1} parent=5 // pred_check
      _
    $region10: #{resblock_conv_skip_forward.1} parent=5 // pred_check_branch
      %116 = sbr.rel (%p113) target = $region12
    $region11: #{resblock_conv_skip_forward.1} parent=5 // pred_region
      %s117 = ssub.s32 %s9, 1
      // Predicated region
      $region13: #{resblock_conv_skip_forward.1} parent=11 // pred_check
        %p118 = pneg %p56
      $region14: #{resblock_conv_skip_forward.1} parent=11 // pred_check_branch
        %120 = sbr.rel (%p118) target = $region16
      $region15: #{resblock_conv_skip_forward.1} parent=11 // pred_region
        _
      $region16: #{resblock_conv_skip_forward.1} parent=11 // pred_fallthru
        _
      // Predicated region
      $region17: #{resblock_conv_skip_forward.1} parent=11 // pred_check
        %p121 = pneg %p77
      $region18: #{resblock_conv_skip_forward.1} parent=11 // pred_check_branch
        %123 = sbr.rel (%p121) target = $region20
      $region19: #{resblock_conv_skip_forward.1} parent=11 // pred_region
        _
      $region20: #{resblock_conv_skip_forward.1} parent=11 // pred_fallthru
        _
    $region12: #{resblock_conv_skip_forward.1} parent=5 // pred_fallthru
      _
    %p124 = scmp.lt.s32.totalorder %s9, 2
    // Predicated region
    $region21: #{resblock_conv_skip_forward.1} parent=5 // pred_check
      %p125 = pneg %p124
    $region22: #{resblock_conv_skip_forward.1} parent=5 // pred_check_branch
      %127 = sbr.rel (%p125) target = $region24
    $region23: #{resblock_conv_skip_forward.1} parent=5 // pred_region
      // Predicated region
      $region25: #{resblock_conv_skip_forward.1} parent=23 // pred_check
        %p128 = pneg %p29
      $region26: #{resblock_conv_skip_forward.1} parent=23 // pred_check_branch
        %130 = sbr.rel (%p128) target = $region28
      $region27: #{resblock_conv_skip_forward.1} parent=23 // pred_region
        %p131 = scmp.lt.s32.totalorder %s9, 1
        %s132 = scalar_select %p131, %s9, 1
        %s133 = smul.addr %s132, 54
        %s134 = smul.addr %s133, 4
        %s135 = scalar_lea.vmem %s0, %s134
      $region28: #{resblock_conv_skip_forward.1} parent=23 // pred_fallthru
        _
    $region24: #{resblock_conv_skip_forward.1} parent=5 // pred_fallthru
      _
    %p136 = scmp.le.s32.totalorder 1, %s9
    %p137 = scmp.lt.s32.totalorder %s9, 3
    %p138 = pnand %p136, %p137
    %p139 = pneg %p138
    // Predicated region
    $region29: #{resblock_conv_skip_forward.1} parent=5 // pred_check
      _
    $region30: #{resblock_conv_skip_forward.1} parent=5 // pred_check_branch
      %141 = sbr.rel (%p138) target = $region32
    $region31: #{resblock_conv_skip_forward.1} parent=5 // pred_region
      %s142 = ssub.s32 %s9, 1
      %p143 = scmp.lt.s32.totalorder %s14, 1
      %s144 = scalar_select %p143, %s14, 1
      %s145 = smul.addr %s144, 54
      %s146 = smul.addr %s145, 4
      %s147 = scalar_lea.vmem %s0, %s146
      %p148 = pneg %p35
      %p149 = pneg %p32
      %p150 = pneg %p56
      %p151 = pneg %p53
      %p152 = pneg %p77
      %p153 = pneg %p74
      %p154 = pneg %p103
      %p155 = pneg %p100
      %p156 = scmp.lt.s32.totalorder %s14, 1
      %s157 = scalar_select %p156, %s14, 1
      %s158 = smul.addr %s157, 32
      %s159 = smul.addr %s158, 8
      %s160 = scalar_lea.vmem %s3, %s159
      %p161 = scmp.lt.s32.totalorder %s14, 1
      %s162 = scalar_select %p161, %s14, 1
      %s163 = smul.addr %s162, 54
      %s164 = smul.addr %s163, 4
      %s165 = scalar_lea.vmem %s0, %s164
      %p166 = scmp.lt.s32.totalorder %s14, 1
      %s167 = scalar_select %p166, %s14, 1
      %s168 = smul.addr %s167, 32
      %s169 = smul.addr %s168, 8
      %s170 = scalar_lea.vmem %s3, %s169
      %171 = vst [vmem:[#allocation2] sm:$0xff] 0.0
      %172 = vst [vmem:[#allocation2 + $0x8] sm:$0xff] 0.0
      %173 = vst [vmem:[#allocation2 + $0x10] sm:$0xff] 0.0
      %174 = vst [vmem:[#allocation2 + $0x18] sm:$0xff] 0.0
      %175 = vst [vmem:[#allocation2 + $0x20] sm:$0xff] 0.0
      %176 = vst [vmem:[#allocation2 + $0x28] sm:$0xff] 0.0
      %177 = vst [vmem:[#allocation2 + $0x30] sm:$0xff] 0.0
      %178 = vst [vmem:[#allocation2 + $0x38] sm:$0xff] 0.0
      %179 = vst [vmem:[#allocation2 + $0x40] sm:$0xff] 0.0
      %180 = vst [vmem:[#allocation2 + $0x48] sm:$0xff] 0.0
      %181 = vst [vmem:[#allocation2 + $0x50] sm:$0xff] 0.0
      %182 = vst [vmem:[#allocation2 + $0x58] sm:$0xff] 0.0
      %183 = vst [vmem:[#allocation2 + $0x60] sm:$0xff] 0.0
      %184 = vst [vmem:[#allocation2 + $0x68] sm:$0xff] 0.0
      %185 = vst [vmem:[#allocation2 + $0x70] sm:$0xff] 0.0
      %186 = vst [vmem:[#allocation2 + $0x78] sm:$0xff] 0.0
      %187 = vst [vmem:[#allocation2 + $0x80] sm:$0xff] 0.0
      %188 = vst [vmem:[#allocation2 + $0x88] sm:$0xff] 0.0
      %189 = vst [vmem:[#allocation2 + $0x90] sm:$0xff] 0.0
      %190 = vst [vmem:[#allocation2 + $0x98] sm:$0xff] 0.0
      %191 = vst [vmem:[#allocation2 + $0xa0] sm:$0xff] 0.0
      %192 = vst [vmem:[#allocation2 + $0xa8] sm:$0xff] 0.0
      %193 = vst [vmem:[#allocation2 + $0xb0] sm:$0xff] 0.0
      %194 = vst [vmem:[#allocation2 + $0xb8] sm:$0xff] 0.0
      %195 = vst [vmem:[#allocation2 + $0xc0] sm:$0xff] 0.0
      %196 = vst [vmem:[#allocation2 + $0xc8] sm:$0xff] 0.0
      %197 = vst [vmem:[#allocation2 + $0xd0] sm:$0xff] 0.0
      %198 = vst [vmem:[#allocation2 + $0xd8] sm:$0xff] 0.0
      %199 = vst [vmem:[#allocation2 + $0xe0] sm:$0xff] 0.0
      %200 = vst [vmem:[#allocation2 + $0xe8] sm:$0xff] 0.0
      %201 = vst [vmem:[#allocation2 + $0xf0] sm:$0xff] 0.0
      %202 = vst [vmem:[#allocation2 + $0xf8] sm:$0xff] 0.0
      %203 = vst [vmem:[#allocation2 + $0x100] sm:$0xff] 0.0
      %204 = vst [vmem:[#allocation2 + $0x108] sm:$0xff] 0.0
      %205 = vst [vmem:[#allocation2 + $0x110] sm:$0xff] 0.0
      %206 = vst [vmem:[#allocation2 + $0x118] sm:$0xff] 0.0
      %207 = vst [vmem:[#allocation2 + $0x120] sm:$0xff] 0.0
      %208 = vst [vmem:[#allocation2 + $0x128] sm:$0xff] 0.0
      %209 = vst [vmem:[#allocation2 + $0x130] sm:$0xff] 0.0
      %210 = vst [vmem:[#allocation2 + $0x138] sm:$0xff] 0.0
      %211 = vst [vmem:[#allocation2 + $0x140] sm:$0xff] 0.0
      %212 = vst [vmem:[#allocation2 + $0x148] sm:$0xff] 0.0
      %213 = vst [vmem:[#allocation2 + $0x150] sm:$0xff] 0.0
      %214 = vst [vmem:[#allocation2 + $0x158] sm:$0xff] 0.0
      %215 = vst [vmem:[#allocation2 + $0x160] sm:$0xff] 0.0
      %216 = vst [vmem:[#allocation2 + $0x168] sm:$0xff] 0.0
      %217 = vst [vmem:[#allocation2 + $0x170] sm:$0xff] 0.0
      %218 = vst [vmem:[#allocation2 + $0x178] sm:$0xff] 0.0
      %219 = vst [vmem:[#allocation2 + $0x180] sm:$0xff] 0.0
      %220 = vst [vmem:[#allocation2 + $0x188] sm:$0xff] 0.0
      %221 = vst [vmem:[#allocation2 + $0x190] sm:$0xff] 0.0
      %222 = vst [vmem:[#allocation2 + $0x198] sm:$0xff] 0.0
      %223 = vst [vmem:[#allocation2 + $0x1a0] sm:$0xff] 0.0
      %224 = vst [vmem:[#allocation2 + $0x1a8] sm:$0xff] 0.0
      %225 = vst [vmem:[#allocation2 + $0x1b0] sm:$0xff] 0.0
      %226 = vst [vmem:[#allocation2 + $0x1b8] sm:$0xff] 0.0
      %227 = vst [vmem:[#allocation2 + $0x1c0] sm:$0xff] 0.0
      %228 = vst [vmem:[#allocation2 + $0x1c8] sm:$0xff] 0.0
      %229 = vst [vmem:[#allocation2 + $0x1d0] sm:$0xff] 0.0
      %230 = vst [vmem:[#allocation2 + $0x1d8] sm:$0xff] 0.0
      %231 = vst [vmem:[#allocation2 + $0x1e0] sm:$0xff] 0.0
      %232 = vst [vmem:[#allocation2 + $0x1e8] sm:$0xff] 0.0
      %233 = vst [vmem:[#allocation2 + $0x1f0] sm:$0xff] 0.0
      %234 = vst [vmem:[#allocation2 + $0x1f8] sm:$0xff] 0.0
      %v235 = vld [vmem:[%s165] sm:$0xf]
      %v236 = vld [vmem:[%s165 + $0x4] sm:$0xf]
      %v237 = vld [vmem:[%s165 + $0x8] sm:$0x1]
      %v238 = vld [vmem:[%s165 + $0xc] sm:$0xf]
      %v239 = vld [vmem:[%s165 + $0x10] sm:$0xf]
      %v240 = vld [vmem:[%s165 + $0x14] sm:$0x1]
      %v241 = vld [vmem:[%s165 + $0x18] sm:$0xf]
      %v242 = vld [vmem:[%s165 + $0x1c] sm:$0xf]
      %v243 = vld [vmem:[%s165 + $0x20] sm:$0x1]
      %v244 = vld [vmem:[%s165 + $0x24] sm:$0xf]
      %v245 = vld [vmem:[%s165 + $0x28] sm:$0xf]
      %v246 = vld [vmem:[%s165 + $0x2c] sm:$0x1]
      %v247 = vld [vmem:[%s165 + $0x30] sm:$0xf]
      %v248 = vld [vmem:[%s165 + $0x34] sm:$0xf]
      %v249 = vld [vmem:[%s165 + $0x38] sm:$0x1]
      %v250 = vld [vmem:[%s165 + $0x3c] sm:$0xf]
      %v251 = vld [vmem:[%s165 + $0x40] sm:$0xf]
      %v252 = vld [vmem:[%s165 + $0x44] sm:$0x1]
      %v253 = vld [vmem:[%s165 + $0x48] sm:$0xf]
      %v254 = vld [vmem:[%s165 + $0x4c] sm:$0xf]
      %v255 = vld [vmem:[%s165 + $0x50] sm:$0x1]
      %v256 = vld [vmem:[%s165 + $0x54] sm:$0xf]
      %v257 = vld [vmem:[%s165 + $0x58] sm:$0xf]
      %v258 = vld [vmem:[%s165 + $0x5c] sm:$0x1]
      %v259 = vld [vmem:[%s165 + $0x60] sm:$0xf]
      %v260 = vld [vmem:[%s165 + $0x64] sm:$0xf]
      %v261 = vld [vmem:[%s165 + $0x68] sm:$0x1]
      %v262 = vld [vmem:[%s165 + $0x6c] sm:$0xf]
      %v263 = vld [vmem:[%s165 + $0x70] sm:$0xf]
      %v264 = vld [vmem:[%s165 + $0x74] sm:$0x1]
      %v265 = vld [vmem:[%s165 + $0x78] sm:$0xf]
      %v266 = vld [vmem:[%s165 + $0x7c] sm:$0xf]
      %v267 = vld [vmem:[%s165 + $0x80] sm:$0x1]
      %v268 = vld [vmem:[%s165 + $0x84] sm:$0xf]
      %v269 = vld [vmem:[%s165 + $0x88] sm:$0xf]
      %v270 = vld [vmem:[%s165 + $0x8c] sm:$0x1]
      %v271 = vld [vmem:[%s165 + $0x90] sm:$0xf]
      %v272 = vld [vmem:[%s165 + $0x94] sm:$0xf]
      %v273 = vld [vmem:[%s165 + $0x98] sm:$0x1]
      %v274 = vld [vmem:[%s165 + $0x9c] sm:$0xf]
      %v275 = vld [vmem:[%s165 + $0xa0] sm:$0xf]
      %v276 = vld [vmem:[%s165 + $0xa4] sm:$0x1]
      %v277 = vld [vmem:[%s165 + $0xa8] sm:$0xf]
      %v278 = vld [vmem:[%s165 + $0xac] sm:$0xf]
      %v279 = vld [vmem:[%s165 + $0xb0] sm:$0x1]
      %v280 = vld [vmem:[%s165 + $0xb4] sm:$0xf]
      %v281 = vld [vmem:[%s165 + $0xb8] sm:$0xf]
      %v282 = vld [vmem:[%s165 + $0xbc] sm:$0x1]
      %v283 = vld [vmem:[%s165 + $0xc0] sm:$0xf]
      %v284 = vld [vmem:[%s165 + $0xc4] sm:$0xf]
      %v285 = vld [vmem:[%s165 + $0xc8] sm:$0x1]
      %v286 = vld [vmem:[%s165 + $0xcc] sm:$0xf]
      %v287 = vld [vmem:[%s165 + $0xd0] sm:$0xf]
      %v288 = vld [vmem:[%s165 + $0xd4] sm:$0x1]
      %v289 = vld [vmem:[#allocation2] sm:$0xff]
      %v290 = vld [vmem:[#allocation2 + $0x8] sm:$0xff]
      %v291 = vld [vmem:[#allocation2 + $0x10] sm:$0xff]
      %v292 = vld [vmem:[#allocation2 + $0x18] sm:$0xff]
      %v293 = vld [vmem:[#allocation2 + $0x20] sm:$0xff]
      %v294 = vld [vmem:[#allocation2 + $0x28] sm:$0xff]
      %v295 = vld [vmem:[#allocation2 + $0x30] sm:$0xff]
      %v296 = vld [vmem:[#allocation2 + $0x38] sm:$0xff]
      %v297 = vld [vmem:[#allocation2 + $0x40] sm:$0xff]
      %v298 = vld [vmem:[#allocation2 + $0x48] sm:$0xff]
      %v299 = vld [vmem:[#allocation2 + $0x50] sm:$0xff]
      %v300 = vld [vmem:[#allocation2 + $0x58] sm:$0xff]
      %v301 = vld [vmem:[#allocation2 + $0x60] sm:$0xff]
      %v302 = vld [vmem:[#allocation2 + $0x68] sm:$0xff]
      %v303 = vld [vmem:[#allocation2 + $0x70] sm:$0xff]
      %v304 = vld [vmem:[#allocation2 + $0x78] sm:$0xff]
      %v305 = vld [vmem:[#allocation2 + $0x80] sm:$0xff]
      %v306 = vld [vmem:[#allocation2 + $0x88] sm:$0xff]
      %v307 = vld [vmem:[#allocation2 + $0x90] sm:$0xff]
      %v308 = vld [vmem:[#allocation2 + $0x98] sm:$0xff]
      %v309 = vld [vmem:[#allocation2 + $0xa0] sm:$0xff]
      %v310 = vld [vmem:[#allocation2 + $0xa8] sm:$0xff]
      %v311 = vld [vmem:[#allocation2 + $0xb0] sm:$0xff]
      %v312 = vld [vmem:[#allocation2 + $0xb8] sm:$0xff]
      %v313 = vld [vmem:[#allocation2 + $0xc0] sm:$0xff]
      %v314 = vld [vmem:[#allocation2 + $0xc8] sm:$0xff]
      %v315 = vld [vmem:[#allocation2 + $0xd0] sm:$0xff]
      %v316 = vld [vmem:[#allocation2 + $0xd8] sm:$0xff]
      %v317 = vld [vmem:[#allocation2 + $0xe0] sm:$0xff]
      %v318 = vld [vmem:[#allocation2 + $0xe8] sm:$0xff]
      %v319 = vld [vmem:[#allocation2 + $0xf0] sm:$0xff]
      %v320 = vld [vmem:[#allocation2 + $0xf8] sm:$0xff]
      %v321 = vld [vmem:[#allocation2 + $0x100] sm:$0xff]
      %v322 = vld [vmem:[#allocation2 + $0x108] sm:$0xff]
      %v323 = vld [vmem:[#allocation2 + $0x110] sm:$0xff]
      %v324 = vld [vmem:[#allocation2 + $0x118] sm:$0xff]
      %v325 = vld [vmem:[#allocation2 + $0x120] sm:$0xff]
      %v326 = vld [vmem:[#allocation2 + $0x128] sm:$0xff]
      %v327 = vld [vmem:[#allocation2 + $0x130] sm:$0xff]
      %v328 = vld [vmem:[#allocation2 + $0x138] sm:$0xff]
      %v329 = vld [vmem:[#allocation2 + $0x140] sm:$0xff]
      %v330 = vld [vmem:[#allocation2 + $0x148] sm:$0xff]
      %v331 = vld [vmem:[#allocation2 + $0x150] sm:$0xff]
      %v332 = vld [vmem:[#allocation2 + $0x158] sm:$0xff]
      %v333 = vld [vmem:[#allocation2 + $0x160] sm:$0xff]
      %v334 = vld [vmem:[#allocation2 + $0x168] sm:$0xff]
      %v335 = vld [vmem:[#allocation2 + $0x170] sm:$0xff]
      %v336 = vld [vmem:[#allocation2 + $0x178] sm:$0xff]
      %v337 = vld [vmem:[#allocation2 + $0x180] sm:$0xff]
      %v338 = vld [vmem:[#allocation2 + $0x188] sm:$0xff]
      %v339 = vld [vmem:[#allocation2 + $0x190] sm:$0xff]
      %v340 = vld [vmem:[#allocation2 + $0x198] sm:$0xff]
      %v341 = vld [vmem:[#allocation2 + $0x1a0] sm:$0xff]
      %v342 = vld [vmem:[#allocation2 + $0x1a8] sm:$0xff]
      %v343 = vld [vmem:[#allocation2 + $0x1b0] sm:$0xff]
      %v344 = vld [vmem:[#allocation2 + $0x1b8] sm:$0xff]
      %v345 = vld [vmem:[#allocation2 + $0x1c0] sm:$0xff]
      %v346 = vld [vmem:[#allocation2 + $0x1c8] sm:$0xff]
      %v347 = vld [vmem:[#allocation2 + $0x1d0] sm:$0xff]
      %v348 = vld [vmem:[#allocation2 + $0x1d8] sm:$0xff]
      %v349 = vld [vmem:[#allocation2 + $0x1e0] sm:$0xff]
      %v350 = vld [vmem:[#allocation2 + $0x1e8] sm:$0xff]
      %v351 = vld [vmem:[#allocation2 + $0x1f0] sm:$0xff]
      %v352 = vld [vmem:[#allocation2 + $0x1f8] sm:$0xff]
      %v353 = vld [vmem:[%s1] sm:$0xff]
      %v354 = vld [vmem:[%s1 + $0x8] sm:$0xff]
      %v355 = vld [vmem:[%s1 + $0x10] sm:$0xff]
      %v356 = vld [vmem:[%s1 + $0x18] sm:$0xff]
      %v357 = vld [vmem:[%s1 + $0x20] sm:$0xff]
      %v358 = vld [vmem:[%s1 + $0x28] sm:$0xff]
      %v359 = vld [vmem:[%s1 + $0x30] sm:$0xff]
      %v360 = vld [vmem:[%s1 + $0x38] sm:$0xff]
      %v361 = vld [vmem:[%s1 + $0x40] sm:$0xff]
      %v362 = vld [vmem:[%s1 + $0x48] sm:$0xff]
      %v363 = vld [vmem:[%s1 + $0x50] sm:$0xff]
      %v364 = vld [vmem:[%s1 + $0x58] sm:$0xff]
      %v365 = vld [vmem:[%s1 + $0x60] sm:$0xff]
      %v366 = vld [vmem:[%s1 + $0x68] sm:$0xff]
      %v367 = vld [vmem:[%s1 + $0x70] sm:$0xff]
      %v368 = vld [vmem:[%s1 + $0x78] sm:$0xff]
      %v401 = vunpack.c.l.b16 %v235
      %v402 = vunpack.c.l.b16 %v236
      %v403 = vunpack.c.l.b16 %v238
      %v404 = vunpack.c.l.b16 %v239
      %v405 = vunpack.c.l.b16 %v241
      %v406 = vunpack.c.l.b16 %v242
      %v407 = vunpack.c.l.b16 %v244
      %v408 = vunpack.c.l.b16 %v245
      %v409 = vunpack.c.l.b16 %v247
      %v410 = vunpack.c.l.b16 %v248
      %v411 = vunpack.c.l.b16 %v250
      %v412 = vunpack.c.l.b16 %v251
      %v413 = vunpack.c.l.b16 %v253
      %v414 = vunpack.c.l.b16 %v254
      %v415 = vunpack.c.l.b16 %v256
      %v416 = vunpack.c.l.b16 %v257
      %v417 = vunpack.c.l.b16 %v259
      %v418 = vunpack.c.l.b16 %v260
      %v419 = vunpack.c.l.b16 %v262
      %v420 = vunpack.c.l.b16 %v263
      %v421 = vunpack.c.l.b16 %v265
      %v422 = vunpack.c.l.b16 %v266
      %v423 = vunpack.c.l.b16 %v268
      %v424 = vunpack.c.l.b16 %v269
      %v425 = vunpack.c.l.b16 %v271
      %v426 = vunpack.c.l.b16 %v272
      %v427 = vunpack.c.l.b16 %v274
      %v428 = vunpack.c.l.b16 %v275
      %v429 = vunpack.c.l.b16 %v277
      %v430 = vunpack.c.l.b16 %v278
      %v431 = vunpack.c.l.b16 %v280
      %v432 = vunpack.c.l.b16 %v281
      %v433 = vpack.c.b16 %v402, %v401
      %v434 = vpack.c.b16 %v404, %v403
      %v435 = vpack.c.b16 %v406, %v405
      %v436 = vpack.c.b16 %v408, %v407
      %v437 = vpack.c.b16 %v410, %v409
      %v438 = vpack.c.b16 %v412, %v411
      %v439 = vpack.c.b16 %v414, %v413
      %v440 = vpack.c.b16 %v416, %v415
      %v441 = vpack.c.b16 %v418, %v417
      %v442 = vpack.c.b16 %v420, %v419
      %v443 = vpack.c.b16 %v422, %v421
      %v444 = vpack.c.b16 %v424, %v423
      %v445 = vpack.c.b16 %v426, %v425
      %v446 = vpack.c.b16 %v428, %v427
      %v447 = vpack.c.b16 %v430, %v429
      %v448 = vpack.c.b16 %v432, %v431
      %v481 = vunpack.c.l.b16 %v353
      %v482 = vunpack.c.h.b16 %v353
      %v483 = vunpack.c.l.b16 %v354
      %v484 = vunpack.c.h.b16 %v354
      %v485 = vunpack.c.l.b16 %v355
      %v486 = vunpack.c.h.b16 %v355
      %v487 = vunpack.c.l.b16 %v356
      %v488 = vunpack.c.h.b16 %v356
      %v489 = vunpack.c.l.b16 %v357
      %v490 = vunpack.c.h.b16 %v357
      %v491 = vunpack.c.l.b16 %v358
      %v492 = vunpack.c.h.b16 %v358
      %v493 = vunpack.c.l.b16 %v359
      %v494 = vunpack.c.h.b16 %v359
      %v495 = vunpack.c.l.b16 %v360
      %v496 = vunpack.c.h.b16 %v360
      %v497 = vunpack.c.l.b16 %v361
      %v498 = vunpack.c.h.b16 %v361
      %v499 = vunpack.c.l.b16 %v362
      %v500 = vunpack.c.h.b16 %v362
      %v501 = vunpack.c.l.b16 %v363
      %v502 = vunpack.c.h.b16 %v363
      %v503 = vunpack.c.l.b16 %v364
      %v504 = vunpack.c.h.b16 %v364
      %v505 = vunpack.c.l.b16 %v365
      %v506 = vunpack.c.h.b16 %v365
      %v507 = vunpack.c.l.b16 %v366
      %v508 = vunpack.c.h.b16 %v366
      %v509 = vunpack.c.l.b16 %v367
      %v510 = vunpack.c.h.b16 %v367
      %v511 = vunpack.c.l.b16 %v368
      %v512 = vunpack.c.h.b16 %v368
      %v513 = vpack.c.b16 %v483, %v481
      %v514 = vpack.c.b16 %v484, %v482
      %v515 = vpack.c.b16 %v487, %v485
      %v516 = vpack.c.b16 %v488, %v486
      %v517 = vpack.c.b16 %v491, %v489
      %v518 = vpack.c.b16 %v492, %v490
      %v519 = vpack.c.b16 %v495, %v493
      %v520 = vpack.c.b16 %v496, %v494
      %v521 = vpack.c.b16 %v499, %v497
      %v522 = vpack.c.b16 %v500, %v498
      %v523 = vpack.c.b16 %v503, %v501
      %v524 = vpack.c.b16 %v504, %v502
      %v525 = vpack.c.b16 %v507, %v505
      %v526 = vpack.c.b16 %v508, %v506
      %v527 = vpack.c.b16 %v511, %v509
      %v528 = vpack.c.b16 %v512, %v510
      %545 = vmatpush.bf16.msra.mxu0 %v527
      %546 = vmatpush.bf16.msra.mxu0 %v525
      %547 = vmatpush.bf16.msra.mxu0 %v523
      %548 = vmatpush.bf16.msra.mxu0 %v521
      %549 = vmatpush.bf16.msra.mxu0 %v519
      %550 = vmatpush.bf16.msra.mxu0 %v517
      %551 = vmatpush.bf16.msra.mxu0 %v515
      %552 = vmatpush.bf16.msra.mxu0 %v513
      %553 = vmatmul.bf16.gmra.mxu0 %v433
      %v554 = vpop.f32.mrf.mxu0
      %v555 = vadd.f32 0.0, %v554
      %v556 = vpop.f32.mrf.mxu0
      %v557 = vadd.f32 0.0, %v556
      %558 = vmatmul.bf16.gmra.mxu0 %v434
      %v559 = vpop.f32.mrf.mxu0
      %v560 = vadd.f32 0.0, %v559
      %v561 = vpop.f32.mrf.mxu0
      %v562 = vadd.f32 0.0, %v561
      %563 = vmatmul.bf16.gmra.mxu0 %v435
      %v564 = vpop.f32.mrf.mxu0
      %v565 = vadd.f32 0.0, %v564
      %v566 = vpop.f32.mrf.mxu0
      %v567 = vadd.f32 0.0, %v566
      %568 = vmatmul.bf16.gmra.mxu0 %v436
      %v569 = vpop.f32.mrf.mxu0
      %v570 = vadd.f32 0.0, %v569
      %v571 = vpop.f32.mrf.mxu0
      %v572 = vadd.f32 0.0, %v571
      %573 = vmatmul.bf16.gmra.mxu0 %v437
      %v574 = vpop.f32.mrf.mxu0
      %v575 = vadd.f32 0.0, %v574
      %v576 = vpop.f32.mrf.mxu0
      %v577 = vadd.f32 0.0, %v576
      %578 = vmatmul.bf16.gmra.mxu0 %v438
      %v579 = vpop.f32.mrf.mxu0
      %v580 = vadd.f32 0.0, %v579
      %v581 = vpop.f32.mrf.mxu0
      %v582 = vadd.f32 0.0, %v581
      %583 = vmatmul.bf16.gmra.mxu0 %v439
      %v584 = vpop.f32.mrf.mxu0
      %v585 = vadd.f32 0.0, %v584
      %v586 = vpop.f32.mrf.mxu0
      %v587 = vadd.f32 0.0, %v586
      %588 = vmatmul.bf16.gmra.mxu0 %v440
      %v589 = vpop.f32.mrf.mxu0
      %v590 = vadd.f32 0.0, %v589
      %v591 = vpop.f32.mrf.mxu0
      %v592 = vadd.f32 0.0, %v591
      %593 = vmatmul.bf16.gmra.mxu0 %v441
      %v594 = vpop.f32.mrf.mxu0
      %v595 = vadd.f32 0.0, %v594
      %v596 = vpop.f32.mrf.mxu0
      %v597 = vadd.f32 0.0, %v596
      %598 = vmatmul.bf16.gmra.mxu0 %v442
      %v599 = vpop.f32.mrf.mxu0
      %v600 = vadd.f32 0.0, %v599
      %v601 = vpop.f32.mrf.mxu0
      %v602 = vadd.f32 0.0, %v601
      %603 = vmatmul.bf16.gmra.mxu0 %v443
      %v604 = vpop.f32.mrf.mxu0
      %v605 = vadd.f32 0.0, %v604
      %v606 = vpop.f32.mrf.mxu0
      %v607 = vadd.f32 0.0, %v606
      %608 = vmatmul.bf16.gmra.mxu0 %v444
      %v609 = vpop.f32.mrf.mxu0
      %v610 = vadd.f32 0.0, %v609
      %v611 = vpop.f32.mrf.mxu0
      %v612 = vadd.f32 0.0, %v611
      %613 = vmatmul.bf16.gmra.mxu0 %v445
      %v614 = vpop.f32.mrf.mxu0
      %v615 = vadd.f32 0.0, %v614
      %v616 = vpop.f32.mrf.mxu0
      %v617 = vadd.f32 0.0, %v616
      %618 = vmatmul.bf16.gmra.mxu0 %v446
      %v619 = vpop.f32.mrf.mxu0
      %v620 = vadd.f32 0.0, %v619
      %v621 = vpop.f32.mrf.mxu0
      %v622 = vadd.f32 0.0, %v621
      %623 = vmatmul.bf16.gmra.mxu0 %v447
      %v624 = vpop.f32.mrf.mxu0
      %v625 = vadd.f32 0.0, %v624
      %v626 = vpop.f32.mrf.mxu0
      %v627 = vadd.f32 0.0, %v626
      %628 = vmatmul.bf16.gmra.mxu0 %v448
      %v629 = vpop.f32.mrf.mxu0
      %v630 = vadd.f32 0.0, %v629
      %v631 = vpop.f32.mrf.mxu0
      %v632 = vadd.f32 0.0, %v631
      %633 = vdwg.mxu0
      %634 = vmatpush.bf16.msra.mxu0 %v528
      %635 = vmatpush.bf16.msra.mxu0 %v526
      %636 = vmatpush.bf16.msra.mxu0 %v524
      %637 = vmatpush.bf16.msra.mxu0 %v522
      %638 = vmatpush.bf16.msra.mxu0 %v520
      %639 = vmatpush.bf16.msra.mxu0 %v518
      %640 = vmatpush.bf16.msra.mxu0 %v516
      %641 = vmatpush.bf16.msra.mxu0 %v514
      %642 = vmatmul.bf16.gmra.mxu0 %v433
      %v643 = vpop.f32.mrf.mxu0
      %v644 = vadd.f32 0.0, %v643
      %v645 = vpop.f32.mrf.mxu0
      %v646 = vadd.f32 0.0, %v645
      %647 = vmatmul.bf16.gmra.mxu0 %v434
      %v648 = vpop.f32.mrf.mxu0
      %v649 = vadd.f32 0.0, %v648
      %v650 = vpop.f32.mrf.mxu0
      %v651 = vadd.f32 0.0, %v650
      %652 = vmatmul.bf16.gmra.mxu0 %v435
      %v653 = vpop.f32.mrf.mxu0
      %v654 = vadd.f32 0.0, %v653
      %v655 = vpop.f32.mrf.mxu0
      %v656 = vadd.f32 0.0, %v655
      %657 = vmatmul.bf16.gmra.mxu0 %v436
      %v658 = vpop.f32.mrf.mxu0
      %v659 = vadd.f32 0.0, %v658
      %v660 = vpop.f32.mrf.mxu0
      %v661 = vadd.f32 0.0, %v660
      %662 = vmatmul.bf16.gmra.mxu0 %v437
      %v663 = vpop.f32.mrf.mxu0
      %v664 = vadd.f32 0.0, %v663
      %v665 = vpop.f32.mrf.mxu0
      %v666 = vadd.f32 0.0, %v665
      %667 = vmatmul.bf16.gmra.mxu0 %v438
      %v668 = vpop.f32.mrf.mxu0
      %v669 = vadd.f32 0.0, %v668
      %v670 = vpop.f32.mrf.mxu0
      %v671 = vadd.f32 0.0, %v670
      %672 = vmatmul.bf16.gmra.mxu0 %v439
      %v673 = vpop.f32.mrf.mxu0
      %v674 = vadd.f32 0.0, %v673
      %v675 = vpop.f32.mrf.mxu0
      %v676 = vadd.f32 0.0, %v675
      %677 = vmatmul.bf16.gmra.mxu0 %v440
      %v678 = vpop.f32.mrf.mxu0
      %v679 = vadd.f32 0.0, %v678
      %v680 = vpop.f32.mrf.mxu0
      %v681 = vadd.f32 0.0, %v680
      %682 = vmatmul.bf16.gmra.mxu0 %v441
      %v683 = vpop.f32.mrf.mxu0
      %v684 = vadd.f32 0.0, %v683
      %v685 = vpop.f32.mrf.mxu0
      %v686 = vadd.f32 0.0, %v685
      %687 = vmatmul.bf16.gmra.mxu0 %v442
      %v688 = vpop.f32.mrf.mxu0
      %v689 = vadd.f32 0.0, %v688
      %v690 = vpop.f32.mrf.mxu0
      %v691 = vadd.f32 0.0, %v690
      %692 = vmatmul.bf16.gmra.mxu0 %v443
      %v693 = vpop.f32.mrf.mxu0
      %v694 = vadd.f32 0.0, %v693
      %v695 = vpop.f32.mrf.mxu0
      %v696 = vadd.f32 0.0, %v695
      %697 = vmatmul.bf16.gmra.mxu0 %v444
      %v698 = vpop.f32.mrf.mxu0
      %v699 = vadd.f32 0.0, %v698
      %v700 = vpop.f32.mrf.mxu0
      %v701 = vadd.f32 0.0, %v700
      %702 = vmatmul.bf16.gmra.mxu0 %v445
      %v703 = vpop.f32.mrf.mxu0
      %v704 = vadd.f32 0.0, %v703
      %v705 = vpop.f32.mrf.mxu0
      %v706 = vadd.f32 0.0, %v705
      %707 = vmatmul.bf16.gmra.mxu0 %v446
      %v708 = vpop.f32.mrf.mxu0
      %v709 = vadd.f32 0.0, %v708
      %v710 = vpop.f32.mrf.mxu0
      %v711 = vadd.f32 0.0, %v710
      %712 = vmatmul.bf16.gmra.mxu0 %v447
      %v713 = vpop.f32.mrf.mxu0
      %v714 = vadd.f32 0.0, %v713
      %v715 = vpop.f32.mrf.mxu0
      %v716 = vadd.f32 0.0, %v715
      %717 = vmatmul.bf16.gmra.mxu0 %v448
      %v718 = vpop.f32.mrf.mxu0
      %v719 = vadd.f32 0.0, %v718
      %v720 = vpop.f32.mrf.mxu0
      %v721 = vadd.f32 0.0, %v720
      %722 = vdwg.mxu0
      %v723 = vadd.f32 %v289, %v555
      %v724 = vadd.f32 %v290, %v644
      %v725 = vadd.f32 %v291, %v557
      %v726 = vadd.f32 %v292, %v646
      %v727 = vadd.f32 %v293, %v560
      %v728 = vadd.f32 %v294, %v649
      %v729 = vadd.f32 %v295, %v562
      %v730 = vadd.f32 %v296, %v651
      %v731 = vadd.f32 %v297, %v565
      %v732 = vadd.f32 %v298, %v654
      %v733 = vadd.f32 %v299, %v567
      %v734 = vadd.f32 %v300, %v656
      %v735 = vadd.f32 %v301, %v570
      %v736 = vadd.f32 %v302, %v659
      %v737 = vadd.f32 %v303, %v572
      %v738 = vadd.f32 %v304, %v661
      %v739 = vadd.f32 %v305, %v575
      %v740 = vadd.f32 %v306, %v664
      %v741 = vadd.f32 %v307, %v577
      %v742 = vadd.f32 %v308, %v666
      %v743 = vadd.f32 %v309, %v580
      %v744 = vadd.f32 %v310, %v669
      %v745 = vadd.f32 %v311, %v582
      %v746 = vadd.f32 %v312, %v671
      %v747 = vadd.f32 %v313, %v585
      %v748 = vadd.f32 %v314, %v674
      %v749 = vadd.f32 %v315, %v587
      %v750 = vadd.f32 %v316, %v676
      %v751 = vadd.f32 %v317, %v590
      %v752 = vadd.f32 %v318, %v679
      %v753 = vadd.f32 %v319, %v592
      %v754 = vadd.f32 %v320, %v681
      %v755 = vadd.f32 %v321, %v595
      %v756 = vadd.f32 %v322, %v684
      %v757 = vadd.f32 %v323, %v597
      %v758 = vadd.f32 %v324, %v686
      %v759 = vadd.f32 %v325, %v600
      %v760 = vadd.f32 %v326, %v689
      %v761 = vadd.f32 %v327, %v602
      %v762 = vadd.f32 %v328, %v691
      %v763 = vadd.f32 %v329, %v605
      %v764 = vadd.f32 %v330, %v694
      %v765 = vadd.f32 %v331, %v607
      %v766 = vadd.f32 %v332, %v696
      %v767 = vadd.f32 %v333, %v610
      %v768 = vadd.f32 %v334, %v699
      %v769 = vadd.f32 %v335, %v612
      %v770 = vadd.f32 %v336, %v701
      %v771 = vadd.f32 %v337, %v615
      %v772 = vadd.f32 %v338, %v704
      %v773 = vadd.f32 %v339, %v617
      %v774 = vadd.f32 %v340, %v706
      %v775 = vadd.f32 %v341, %v620
      %v776 = vadd.f32 %v342, %v709
      %v777 = vadd.f32 %v343, %v622
      %v778 = vadd.f32 %v344, %v711
      %v779 = vadd.f32 %v345, %v625
      %v780 = vadd.f32 %v346, %v714
      %v781 = vadd.f32 %v347, %v627
      %v782 = vadd.f32 %v348, %v716
      %v783 = vadd.f32 %v349, %v630
      %v784 = vadd.f32 %v350, %v719
      %v785 = vadd.f32 %v351, %v632
      %v786 = vadd.f32 %v352, %v721
      %787 = vst [vmem:[#allocation2] sm:$0xff] %v723
      %788 = vst [vmem:[#allocation2 + $0x8] sm:$0xff] %v724
      %789 = vst [vmem:[#allocation2 + $0x10] sm:$0xff] %v725
      %790 = vst [vmem:[#allocation2 + $0x18] sm:$0xff] %v726
      %791 = vst [vmem:[#allocation2 + $0x20] sm:$0xff] %v727
      %792 = vst [vmem:[#allocation2 + $0x28] sm:$0xff] %v728
      %793 = vst [vmem:[#allocation2 + $0x30] sm:$0xff] %v729
      %794 = vst [vmem:[#allocation2 + $0x38] sm:$0xff] %v730
      %795 = vst [vmem:[#allocation2 + $0x40] sm:$0xff] %v731
      %796 = vst [vmem:[#allocation2 + $0x48] sm:$0xff] %v732
      %797 = vst [vmem:[#allocation2 + $0x50] sm:$0xff] %v733
      %798 = vst [vmem:[#allocation2 + $0x58] sm:$0xff] %v734
      %799 = vst [vmem:[#allocation2 + $0x60] sm:$0xff] %v735
      %800 = vst [vmem:[#allocation2 + $0x68] sm:$0xff] %v736
      %801 = vst [vmem:[#allocation2 + $0x70] sm:$0xff] %v737
      %802 = vst [vmem:[#allocation2 + $0x78] sm:$0xff] %v738
      %803 = vst [vmem:[#allocation2 + $0x80] sm:$0xff] %v739
      %804 = vst [vmem:[#allocation2 + $0x88] sm:$0xff] %v740
      %805 = vst [vmem:[#allocation2 + $0x90] sm:$0xff] %v741
      %806 = vst [vmem:[#allocation2 + $0x98] sm:$0xff] %v742
      %807 = vst [vmem:[#allocation2 + $0xa0] sm:$0xff] %v743
      %808 = vst [vmem:[#allocation2 + $0xa8] sm:$0xff] %v744
      %809 = vst [vmem:[#allocation2 + $0xb0] sm:$0xff] %v745
      %810 = vst [vmem:[#allocation2 + $0xb8] sm:$0xff] %v746
      %811 = vst [vmem:[#allocation2 + $0xc0] sm:$0xff] %v747
      %812 = vst [vmem:[#allocation2 + $0xc8] sm:$0xff] %v748
      %813 = vst [vmem:[#allocation2 + $0xd0] sm:$0xff] %v749
      %814 = vst [vmem:[#allocation2 + $0xd8] sm:$0xff] %v750
      %815 = vst [vmem:[#allocation2 + $0xe0] sm:$0xff] %v751
      %816 = vst [vmem:[#allocation2 + $0xe8] sm:$0xff] %v752
      %817 = vst [vmem:[#allocation2 + $0xf0] sm:$0xff] %v753
      %818 = vst [vmem:[#allocation2 + $0xf8] sm:$0xff] %v754
      %819 = vst [vmem:[#allocation2 + $0x100] sm:$0xff] %v755
      %820 = vst [vmem:[#allocation2 + $0x108] sm:$0xff] %v756
      %821 = vst [vmem:[#allocation2 + $0x110] sm:$0xff] %v757
      %822 = vst [vmem:[#allocation2 + $0x118] sm:$0xff] %v758
      %823 = vst [vmem:[#allocation2 + $0x120] sm:$0xff] %v759
      %824 = vst [vmem:[#allocation2 + $0x128] sm:$0xff] %v760
      %825 = vst [vmem:[#allocation2 + $0x130] sm:$0xff] %v761
      %826 = vst [vmem:[#allocation2 + $0x138] sm:$0xff] %v762
      %827 = vst [vmem:[#allocation2 + $0x140] sm:$0xff] %v763
      %828 = vst [vmem:[#allocation2 + $0x148] sm:$0xff] %v764
      %829 = vst [vmem:[#allocation2 + $0x150] sm:$0xff] %v765
      %830 = vst [vmem:[#allocation2 + $0x158] sm:$0xff] %v766
      %831 = vst [vmem:[#allocation2 + $0x160] sm:$0xff] %v767
      %832 = vst [vmem:[#allocation2 + $0x168] sm:$0xff] %v768
      %833 = vst [vmem:[#allocation2 + $0x170] sm:$0xff] %v769
      %834 = vst [vmem:[#allocation2 + $0x178] sm:$0xff] %v770
      %835 = vst [vmem:[#allocation2 + $0x180] sm:$0xff] %v771
      %836 = vst [vmem:[#allocation2 + $0x188] sm:$0xff] %v772
      %837 = vst [vmem:[#allocation2 + $0x190] sm:$0xff] %v773
      %838 = vst [vmem:[#allocation2 + $0x198] sm:$0xff] %v774
      %839 = vst [vmem:[#allocation2 + $0x1a0] sm:$0xff] %v775
      %840 = vst [vmem:[#allocation2 + $0x1a8] sm:$0xff] %v776
      %841 = vst [vmem:[#allocation2 + $0x1b0] sm:$0xff] %v777
      %842 = vst [vmem:[#allocation2 + $0x1b8] sm:$0xff] %v778
      %843 = vst [vmem:[#allocation2 + $0x1c0] sm:$0xff] %v779
      %844 = vst [vmem:[#allocation2 + $0x1c8] sm:$0xff] %v780
      %845 = vst [vmem:[#allocation2 + $0x1d0] sm:$0xff] %v781
      %846 = vst [vmem:[#allocation2 + $0x1d8] sm:$0xff] %v782
      %847 = vst [vmem:[#allocation2 + $0x1e0] sm:$0xff] %v783
      %848 = vst [vmem:[#allocation2 + $0x1e8] sm:$0xff] %v784
      %849 = vst [vmem:[#allocation2 + $0x1f0] sm:$0xff] %v785
      %850 = vst [vmem:[#allocation2 + $0x1f8] sm:$0xff] %v786
      %vm851 = vsmask.f32 3328
      %vm852 = vsmask.f32 7440
      %vm853 = vmor %vm851, %vm852
      %v855 = vshrl.u32 %v235, 16
      %v857 = vrot.slane %v855, 4
      %v858 = vshll.u32 %v235, 16
      %v860 = vrot.slane %v858, 5
      %v861 = vor.u32 %v857, %v860
      %v862 = vrot.slane %v861, 4
      %v864 = vshll.u32 %v236, 16
      %v866 = vrot.slane %v864, 5
      %v867 = vsel %vm853, %v862, %v866
      %v868 = vshrl.u32 %v236, 16
      %v870 = vrot.slane %v868, 4
      %v871 = vor.u32 %v870, %v866
      %v872 = vrot.slane %v871, 4
      %v874 = vshll.u32 %v237, 16
      %v876 = vrot.slane %v874, 5
      %v877 = vsel %vm853, %v872, %v876
      %v879 = vshrl.u32 %v238, 16
      %v881 = vrot.slane %v879, 4
      %v882 = vshll.u32 %v238, 16
      %v884 = vrot.slane %v882, 5
      %v885 = vor.u32 %v881, %v884
      %v886 = vrot.slane %v885, 4
      %v888 = vshll.u32 %v239, 16
      %v890 = vrot.slane %v888, 5
      %v891 = vsel %vm853, %v886, %v890
      %v892 = vshrl.u32 %v239, 16
      %v894 = vrot.slane %v892, 4
      %v895 = vor.u32 %v894, %v890
      %v896 = vrot.slane %v895, 4
      %v898 = vshll.u32 %v240, 16
      %v900 = vrot.slane %v898, 5
      %v901 = vsel %vm853, %v896, %v900
      %v903 = vshrl.u32 %v241, 16
      %v905 = vrot.slane %v903, 4
      %v906 = vshll.u32 %v241, 16
      %v908 = vrot.slane %v906, 5
      %v909 = vor.u32 %v905, %v908
      %v910 = vrot.slane %v909, 4
      %v912 = vshll.u32 %v242, 16
      %v914 = vrot.slane %v912, 5
      %v915 = vsel %vm853, %v910, %v914
      %v916 = vshrl.u32 %v242, 16
      %v918 = vrot.slane %v916, 4
      %v919 = vor.u32 %v918, %v914
      %v920 = vrot.slane %v919, 4
      %v922 = vshll.u32 %v243, 16
      %v924 = vrot.slane %v922, 5
      %v925 = vsel %vm853, %v920, %v924
      %v927 = vshrl.u32 %v244, 16
      %v929 = vrot.slane %v927, 4
      %v930 = vshll.u32 %v244, 16
      %v932 = vrot.slane %v930, 5
      %v933 = vor.u32 %v929, %v932
      %v934 = vrot.slane %v933, 4
      %v936 = vshll.u32 %v245, 16
      %v938 = vrot.slane %v936, 5
      %v939 = vsel %vm853, %v934, %v938
      %v940 = vshrl.u32 %v245, 16
      %v942 = vrot.slane %v940, 4
      %v943 = vor.u32 %v942, %v938
      %v944 = vrot.slane %v943, 4
      %v946 = vshll.u32 %v246, 16
      %v948 = vrot.slane %v946, 5
      %v949 = vsel %vm853, %v944, %v948
      %v951 = vshrl.u32 %v247, 16
      %v953 = vrot.slane %v951, 4
      %v954 = vshll.u32 %v247, 16
      %v956 = vrot.slane %v954, 5
      %v957 = vor.u32 %v953, %v956
      %v958 = vrot.slane %v957, 4
      %v960 = vshll.u32 %v248, 16
      %v962 = vrot.slane %v960, 5
      %v963 = vsel %vm853, %v958, %v962
      %v964 = vshrl.u32 %v248, 16
      %v966 = vrot.slane %v964, 4
      %v967 = vor.u32 %v966, %v962
      %v968 = vrot.slane %v967, 4
      %v970 = vshll.u32 %v249, 16
      %v972 = vrot.slane %v970, 5
      %v973 = vsel %vm853, %v968, %v972
      %v975 = vshrl.u32 %v250, 16
      %v977 = vrot.slane %v975, 4
      %v978 = vshll.u32 %v250, 16
      %v980 = vrot.slane %v978, 5
      %v981 = vor.u32 %v977, %v980
      %v982 = vrot.slane %v981, 4
      %v984 = vshll.u32 %v251, 16
      %v986 = vrot.slane %v984, 5
      %v987 = vsel %vm853, %v982, %v986
      %v988 = vshrl.u32 %v251, 16
      %v990 = vrot.slane %v988, 4
      %v991 = vor.u32 %v990, %v986
      %v992 = vrot.slane %v991, 4
      %v994 = vshll.u32 %v252, 16
      %v996 = vrot.slane %v994, 5
      %v997 = vsel %vm853, %v992, %v996
      %v999 = vshrl.u32 %v253, 16
      %v1001 = vrot.slane %v999, 4
      %v1002 = vshll.u32 %v253, 16
      %v1004 = vrot.slane %v1002, 5
      %v1005 = vor.u32 %v1001, %v1004
      %v1006 = vrot.slane %v1005, 4
      %v1008 = vshll.u32 %v254, 16
      %v1010 = vrot.slane %v1008, 5
      %v1011 = vsel %vm853, %v1006, %v1010
      %v1012 = vshrl.u32 %v254, 16
      %v1014 = vrot.slane %v1012, 4
      %v1015 = vor.u32 %v1014, %v1010
      %v1016 = vrot.slane %v1015, 4
      %v1018 = vshll.u32 %v255, 16
      %v1020 = vrot.slane %v1018, 5
      %v1021 = vsel %vm853, %v1016, %v1020
      %v1023 = vshrl.u32 %v256, 16
      %v1025 = vrot.slane %v1023, 4
      %v1026 = vshll.u32 %v256, 16
      %v1028 = vrot.slane %v1026, 5
      %v1029 = vor.u32 %v1025, %v1028
      %v1030 = vrot.slane %v1029, 4
      %v1032 = vshll.u32 %v257, 16
      %v1034 = vrot.slane %v1032, 5
      %v1035 = vsel %vm853, %v1030, %v1034
      %v1036 = vshrl.u32 %v257, 16
      %v1038 = vrot.slane %v1036, 4
      %v1039 = vor.u32 %v1038, %v1034
      %v1040 = vrot.slane %v1039, 4
      %v1042 = vshll.u32 %v258, 16
      %v1044 = vrot.slane %v1042, 5
      %v1045 = vsel %vm853, %v1040, %v1044
      %v1047 = vshrl.u32 %v259, 16
      %v1049 = vrot.slane %v1047, 4
      %v1050 = vshll.u32 %v259, 16
      %v1052 = vrot.slane %v1050, 5
      %v1053 = vor.u32 %v1049, %v1052
      %v1054 = vrot.slane %v1053, 4
      %v1056 = vshll.u32 %v260, 16
      %v1058 = vrot.slane %v1056, 5
      %v1059 = vsel %vm853, %v1054, %v1058
      %v1060 = vshrl.u32 %v260, 16
      %v1062 = vrot.slane %v1060, 4
      %v1063 = vor.u32 %v1062, %v1058
      %v1064 = vrot.slane %v1063, 4
      %v1066 = vshll.u32 %v261, 16
      %v1068 = vrot.slane %v1066, 5
      %v1069 = vsel %vm853, %v1064, %v1068
      %v1071 = vshrl.u32 %v262, 16
      %v1073 = vrot.slane %v1071, 4
      %v1074 = vshll.u32 %v262, 16
      %v1076 = vrot.slane %v1074, 5
      %v1077 = vor.u32 %v1073, %v1076
      %v1078 = vrot.slane %v1077, 4
      %v1080 = vshll.u32 %v263, 16
      %v1082 = vrot.slane %v1080, 5
      %v1083 = vsel %vm853, %v1078, %v1082
      %v1084 = vshrl.u32 %v263, 16
      %v1086 = vrot.slane %v1084, 4
      %v1087 = vor.u32 %v1086, %v1082
      %v1088 = vrot.slane %v1087, 4
      %v1090 = vshll.u32 %v264, 16
      %v1092 = vrot.slane %v1090, 5
      %v1093 = vsel %vm853, %v1088, %v1092
      %v1095 = vshrl.u32 %v265, 16
      %v1097 = vrot.slane %v1095, 4
      %v1098 = vshll.u32 %v265, 16
      %v1100 = vrot.slane %v1098, 5
      %v1101 = vor.u32 %v1097, %v1100
      %v1102 = vrot.slane %v1101, 4
      %v1104 = vshll.u32 %v266, 16
      %v1106 = vrot.slane %v1104, 5
      %v1107 = vsel %vm853, %v1102, %v1106
      %v1108 = vshrl.u32 %v266, 16
      %v1110 = vrot.slane %v1108, 4
      %v1111 = vor.u32 %v1110, %v1106
      %v1112 = vrot.slane %v1111, 4
      %v1114 = vshll.u32 %v267, 16
      %v1116 = vrot.slane %v1114, 5
      %v1117 = vsel %vm853, %v1112, %v1116
      %v1119 = vshrl.u32 %v268, 16
      %v1121 = vrot.slane %v1119, 4
      %v1122 = vshll.u32 %v268, 16
      %v1124 = vrot.slane %v1122, 5
      %v1125 = vor.u32 %v1121, %v1124
      %v1126 = vrot.slane %v1125, 4
      %v1128 = vshll.u32 %v269, 16
      %v1130 = vrot.slane %v1128, 5
      %v1131 = vsel %vm853, %v1126, %v1130
      %v1132 = vshrl.u32 %v269, 16
      %v1134 = vrot.slane %v1132, 4
      %v1135 = vor.u32 %v1134, %v1130
      %v1136 = vrot.slane %v1135, 4
      %v1138 = vshll.u32 %v270, 16
      %v1140 = vrot.slane %v1138, 5
      %v1141 = vsel %vm853, %v1136, %v1140
      %v1143 = vshrl.u32 %v271, 16
      %v1145 = vrot.slane %v1143, 4
      %v1146 = vshll.u32 %v271, 16
      %v1148 = vrot.slane %v1146, 5
      %v1149 = vor.u32 %v1145, %v1148
      %v1150 = vrot.slane %v1149, 4
      %v1152 = vshll.u32 %v272, 16
      %v1154 = vrot.slane %v1152, 5
      %v1155 = vsel %vm853, %v1150, %v1154
      %v1156 = vshrl.u32 %v272, 16
      %v1158 = vrot.slane %v1156, 4
      %v1159 = vor.u32 %v1158, %v1154
      %v1160 = vrot.slane %v1159, 4
      %v1162 = vshll.u32 %v273, 16
      %v1164 = vrot.slane %v1162, 5
      %v1165 = vsel %vm853, %v1160, %v1164
      %v1167 = vshrl.u32 %v274, 16
      %v1169 = vrot.slane %v1167, 4
      %v1170 = vshll.u32 %v274, 16
      %v1172 = vrot.slane %v1170, 5
      %v1173 = vor.u32 %v1169, %v1172
      %v1174 = vrot.slane %v1173, 4
      %v1176 = vshll.u32 %v275, 16
      %v1178 = vrot.slane %v1176, 5
      %v1179 = vsel %vm853, %v1174, %v1178
      %v1180 = vshrl.u32 %v275, 16
      %v1182 = vrot.slane %v1180, 4
      %v1183 = vor.u32 %v1182, %v1178
      %v1184 = vrot.slane %v1183, 4
      %v1186 = vshll.u32 %v276, 16
      %v1188 = vrot.slane %v1186, 5
      %v1189 = vsel %vm853, %v1184, %v1188
      %v1191 = vshrl.u32 %v277, 16
      %v1193 = vrot.slane %v1191, 4
      %v1194 = vshll.u32 %v277, 16
      %v1196 = vrot.slane %v1194, 5
      %v1197 = vor.u32 %v1193, %v1196
      %v1198 = vrot.slane %v1197, 4
      %v1200 = vshll.u32 %v278, 16
      %v1202 = vrot.slane %v1200, 5
      %v1203 = vsel %vm853, %v1198, %v1202
      %v1204 = vshrl.u32 %v278, 16
      %v1206 = vrot.slane %v1204, 4
      %v1207 = vor.u32 %v1206, %v1202
      %v1208 = vrot.slane %v1207, 4
      %v1210 = vshll.u32 %v279, 16
      %v1212 = vrot.slane %v1210, 5
      %v1213 = vsel %vm853, %v1208, %v1212
      %v1215 = vshrl.u32 %v280, 16
      %v1217 = vrot.slane %v1215, 4
      %v1218 = vshll.u32 %v280, 16
      %v1220 = vrot.slane %v1218, 5
      %v1221 = vor.u32 %v1217, %v1220
      %v1222 = vrot.slane %v1221, 4
      %v1224 = vshll.u32 %v281, 16
      %v1226 = vrot.slane %v1224, 5
      %v1227 = vsel %vm853, %v1222, %v1226
      %v1228 = vshrl.u32 %v281, 16
      %v1230 = vrot.slane %v1228, 4
      %v1231 = vor.u32 %v1230, %v1226
      %v1232 = vrot.slane %v1231, 4
      %v1234 = vshll.u32 %v282, 16
      %v1236 = vrot.slane %v1234, 5
      %v1237 = vsel %vm853, %v1232, %v1236
      %v1238 = vld [vmem:[#allocation2] sm:$0xff]
      %v1239 = vld [vmem:[#allocation2 + $0x8] sm:$0xff]
      %v1240 = vld [vmem:[#allocation2 + $0x10] sm:$0xff]
      %v1241 = vld [vmem:[#allocation2 + $0x18] sm:$0xff]
      %v1242 = vld [vmem:[#allocation2 + $0x20] sm:$0xff]
      %v1243 = vld [vmem:[#allocation2 + $0x28] sm:$0xff]
      %v1244 = vld [vmem:[#allocation2 + $0x30] sm:$0xff]
      %v1245 = vld [vmem:[#allocation2 + $0x38] sm:$0xff]
      %v1246 = vld [vmem:[#allocation2 + $0x40] sm:$0xff]
      %v1247 = vld [vmem:[#allocation2 + $0x48] sm:$0xff]
      %v1248 = vld [vmem:[#allocation2 + $0x50] sm:$0xff]
      %v1249 = vld [vmem:[#allocation2 + $0x58] sm:$0xff]
      %v1250 = vld [vmem:[#allocation2 + $0x60] sm:$0xff]
      %v1251 = vld [vmem:[#allocation2 + $0x68] sm:$0xff]
      %v1252 = vld [vmem:[#allocation2 + $0x70] sm:$0xff]
      %v1253 = vld [vmem:[#allocation2 + $0x78] sm:$0xff]
      %v1254 = vld [vmem:[#allocation2 + $0x80] sm:$0xff]
      %v1255 = vld [vmem:[#allocation2 + $0x88] sm:$0xff]
      %v1256 = vld [vmem:[#allocation2 + $0x90] sm:$0xff]
      %v1257 = vld [vmem:[#allocation2 + $0x98] sm:$0xff]
      %v1258 = vld [vmem:[#allocation2 + $0xa0] sm:$0xff]
      %v1259 = vld [vmem:[#allocation2 + $0xa8] sm:$0xff]
      %v1260 = vld [vmem:[#allocation2 + $0xb0] sm:$0xff]
      %v1261 = vld [vmem:[#allocation2 + $0xb8] sm:$0xff]
      %v1262 = vld [vmem:[#allocation2 + $0xc0] sm:$0xff]
      %v1263 = vld [vmem:[#allocation2 + $0xc8] sm:$0xff]
      %v1264 = vld [vmem:[#allocation2 + $0xd0] sm:$0xff]
      %v1265 = vld [vmem:[#allocation2 + $0xd8] sm:$0xff]
      %v1266 = vld [vmem:[#allocation2 + $0xe0] sm:$0xff]
      %v1267 = vld [vmem:[#allocation2 + $0xe8] sm:$0xff]
      %v1268 = vld [vmem:[#allocation2 + $0xf0] sm:$0xff]
      %v1269 = vld [vmem:[#allocation2 + $0xf8] sm:$0xff]
      %v1270 = vld [vmem:[#allocation2 + $0x100] sm:$0xff]
      %v1271 = vld [vmem:[#allocation2 + $0x108] sm:$0xff]
      %v1272 = vld [vmem:[#allocation2 + $0x110] sm:$0xff]
      %v1273 = vld [vmem:[#allocation2 + $0x118] sm:$0xff]
      %v1274 = vld [vmem:[#allocation2 + $0x120] sm:$0xff]
      %v1275 = vld [vmem:[#allocation2 + $0x128] sm:$0xff]
      %v1276 = vld [vmem:[#allocation2 + $0x130] sm:$0xff]
      %v1277 = vld [vmem:[#allocation2 + $0x138] sm:$0xff]
      %v1278 = vld [vmem:[#allocation2 + $0x140] sm:$0xff]
      %v1279 = vld [vmem:[#allocation2 + $0x148] sm:$0xff]
      %v1280 = vld [vmem:[#allocation2 + $0x150] sm:$0xff]
      %v1281 = vld [vmem:[#allocation2 + $0x158] sm:$0xff]
      %v1282 = vld [vmem:[#allocation2 + $0x160] sm:$0xff]
      %v1283 = vld [vmem:[#allocation2 + $0x168] sm:$0xff]
      %v1284 = vld [vmem:[#allocation2 + $0x170] sm:$0xff]
      %v1285 = vld [vmem:[#allocation2 + $0x178] sm:$0xff]
      %v1286 = vld [vmem:[#allocation2 + $0x180] sm:$0xff]
      %v1287 = vld [vmem:[#allocation2 + $0x188] sm:$0xff]
      %v1288 = vld [vmem:[#allocation2 + $0x190] sm:$0xff]
      %v1289 = vld [vmem:[#allocation2 + $0x198] sm:$0xff]
      %v1290 = vld [vmem:[#allocation2 + $0x1a0] sm:$0xff]
      %v1291 = vld [vmem:[#allocation2 + $0x1a8] sm:$0xff]
      %v1292 = vld [vmem:[#allocation2 + $0x1b0] sm:$0xff]
      %v1293 = vld [vmem:[#allocation2 + $0x1b8] sm:$0xff]
      %v1294 = vld [vmem:[#allocation2 + $0x1c0] sm:$0xff]
      %v1295 = vld [vmem:[#allocation2 + $0x1c8] sm:$0xff]
      %v1296 = vld [vmem:[#allocation2 + $0x1d0] sm:$0xff]
      %v1297 = vld [vmem:[#allocation2 + $0x1d8] sm:$0xff]
      %v1298 = vld [vmem:[#allocation2 + $0x1e0] sm:$0xff]
      %v1299 = vld [vmem:[#allocation2 + $0x1e8] sm:$0xff]
      %v1300 = vld [vmem:[#allocation2 + $0x1f0] sm:$0xff]
      %v1301 = vld [vmem:[#allocation2 + $0x1f8] sm:$0xff]
      %s1302 = scalar_lea.vmem %s1, 128
      %v1303 = vld [vmem:[%s1302] sm:$0xff]
      %v1304 = vld [vmem:[%s1302 + $0x8] sm:$0xff]
      %v1305 = vld [vmem:[%s1302 + $0x10] sm:$0xff]
      %v1306 = vld [vmem:[%s1302 + $0x18] sm:$0xff]
      %v1307 = vld [vmem:[%s1302 + $0x20] sm:$0xff]
      %v1308 = vld [vmem:[%s1302 + $0x28] sm:$0xff]
      %v1309 = vld [vmem:[%s1302 + $0x30] sm:$0xff]
      %v1310 = vld [vmem:[%s1302 + $0x38] sm:$0xff]
      %v1311 = vld [vmem:[%s1302 + $0x40] sm:$0xff]
      %v1312 = vld [vmem:[%s1302 + $0x48] sm:$0xff]
      %v1313 = vld [vmem:[%s1302 + $0x50] sm:$0xff]
      %v1314 = vld [vmem:[%s1302 + $0x58] sm:$0xff]
      %v1315 = vld [vmem:[%s1302 + $0x60] sm:$0xff]
      %v1316 = vld [vmem:[%s1302 + $0x68] sm:$0xff]
      %v1317 = vld [vmem:[%s1302 + $0x70] sm:$0xff]
      %v1318 = vld [vmem:[%s1302 + $0x78] sm:$0xff]
      %v1319 = vunpack.c.l.b16 %v867
      %v1320 = vunpack.c.l.b16 %v877
      %v1321 = vunpack.c.l.b16 %v891
      %v1322 = vunpack.c.l.b16 %v901
      %v1323 = vunpack.c.l.b16 %v915
      %v1324 = vunpack.c.l.b16 %v925
      %v1325 = vunpack.c.l.b16 %v939
      %v1326 = vunpack.c.l.b16 %v949
      %v1327 = vunpack.c.l.b16 %v963
      %v1328 = vunpack.c.l.b16 %v973
      %v1329 = vunpack.c.l.b16 %v987
      %v1330 = vunpack.c.l.b16 %v997
      %v1331 = vunpack.c.l.b16 %v1011
      %v1332 = vunpack.c.l.b16 %v1021
      %v1333 = vunpack.c.l.b16 %v1035
      %v1334 = vunpack.c.l.b16 %v1045
      %v1335 = vunpack.c.l.b16 %v1059
      %v1336 = vunpack.c.l.b16 %v1069
      %v1337 = vunpack.c.l.b16 %v1083
      %v1338 = vunpack.c.l.b16 %v1093
      %v1339 = vunpack.c.l.b16 %v1107
      %v1340 = vunpack.c.l.b16 %v1117
      %v1341 = vunpack.c.l.b16 %v1131
      %v1342 = vunpack.c.l.b16 %v1141
      %v1343 = vunpack.c.l.b16 %v1155
      %v1344 = vunpack.c.l.b16 %v1165
      %v1345 = vunpack.c.l.b16 %v1179
      %v1346 = vunpack.c.l.b16 %v1189
      %v1347 = vunpack.c.l.b16 %v1203
      %v1348 = vunpack.c.l.b16 %v1213
      %v1349 = vunpack.c.l.b16 %v1227
      %v1350 = vunpack.c.l.b16 %v1237
      %v1351 = vpack.c.b16 %v1320, %v1319
      %v1352 = vpack.c.b16 %v1322, %v1321
      %v1353 = vpack.c.b16 %v1324, %v1323
      %v1354 = vpack.c.b16 %v1326, %v1325
      %v1355 = vpack.c.b16 %v1328, %v1327
      %v1356 = vpack.c.b16 %v1330, %v1329
      %v1357 = vpack.c.b16 %v1332, %v1331
      %v1358 = vpack.c.b16 %v1334, %v1333
      %v1359 = vpack.c.b16 %v1336, %v1335
      %v1360 = vpack.c.b16 %v1338, %v1337
      %v1361 = vpack.c.b16 %v1340, %v1339
      %v1362 = vpack.c.b16 %v1342, %v1341
      %v1363 = vpack.c.b16 %v1344, %v1343
      %v1364 = vpack.c.b16 %v1346, %v1345
      %v1365 = vpack.c.b16 %v1348, %v1347
      %v1366 = vpack.c.b16 %v1350, %v1349
      %v1399 = vunpack.c.l.b16 %v1303
      %v1400 = vunpack.c.h.b16 %v1303
      %v1401 = vunpack.c.l.b16 %v1304
      %v1402 = vunpack.c.h.b16 %v1304
      %v1403 = vunpack.c.l.b16 %v1305
      %v1404 = vunpack.c.h.b16 %v1305
      %v1405 = vunpack.c.l.b16 %v1306
      %v1406 = vunpack.c.h.b16 %v1306
      %v1407 = vunpack.c.l.b16 %v1307
      %v1408 = vunpack.c.h.b16 %v1307
      %v1409 = vunpack.c.l.b16 %v1308
      %v1410 = vunpack.c.h.b16 %v1308
      %v1411 = vunpack.c.l.b16 %v1309
      %v1412 = vunpack.c.h.b16 %v1309
      %v1413 = vunpack.c.l.b16 %v1310
      %v1414 = vunpack.c.h.b16 %v1310
      %v1415 = vunpack.c.l.b16 %v1311
      %v1416 = vunpack.c.h.b16 %v1311
      %v1417 = vunpack.c.l.b16 %v1312
      %v1418 = vunpack.c.h.b16 %v1312
      %v1419 = vunpack.c.l.b16 %v1313
      %v1420 = vunpack.c.h.b16 %v1313
      %v1421 = vunpack.c.l.b16 %v1314
      %v1422 = vunpack.c.h.b16 %v1314
      %v1423 = vunpack.c.l.b16 %v1315
      %v1424 = vunpack.c.h.b16 %v1315
      %v1425 = vunpack.c.l.b16 %v1316
      %v1426 = vunpack.c.h.b16 %v1316
      %v1427 = vunpack.c.l.b16 %v1317
      %v1428 = vunpack.c.h.b16 %v1317
      %v1429 = vunpack.c.l.b16 %v1318
      %v1430 = vunpack.c.h.b16 %v1318
      %v1431 = vpack.c.b16 %v1401, %v1399
      %v1432 = vpack.c.b16 %v1402, %v1400
      %v1433 = vpack.c.b16 %v1405, %v1403
      %v1434 = vpack.c.b16 %v1406, %v1404
      %v1435 = vpack.c.b16 %v1409, %v1407
      %v1436 = vpack.c.b16 %v1410, %v1408
      %v1437 = vpack.c.b16 %v1413, %v1411
      %v1438 = vpack.c.b16 %v1414, %v1412
      %v1439 = vpack.c.b16 %v1417, %v1415
      %v1440 = vpack.c.b16 %v1418, %v1416
      %v1441 = vpack.c.b16 %v1421, %v1419
      %v1442 = vpack.c.b16 %v1422, %v1420
      %v1443 = vpack.c.b16 %v1425, %v1423
      %v1444 = vpack.c.b16 %v1426, %v1424
      %v1445 = vpack.c.b16 %v1429, %v1427
      %v1446 = vpack.c.b16 %v1430, %v1428
      %1463 = vmatpush.bf16.msra.mxu0 %v1445
      %1464 = vmatpush.bf16.msra.mxu0 %v1443
      %1465 = vmatpush.bf16.msra.mxu0 %v1441
      %1466 = vmatpush.bf16.msra.mxu0 %v1439
      %1467 = vmatpush.bf16.msra.mxu0 %v1437
      %1468 = vmatpush.bf16.msra.mxu0 %v1435
      %1469 = vmatpush.bf16.msra.mxu0 %v1433
      %1470 = vmatpush.bf16.msra.mxu0 %v1431
      %1471 = vmatmul.bf16.gmra.mxu0 %v1351
      %v1472 = vpop.f32.mrf.mxu0
      %v1473 = vadd.f32 0.0, %v1472
      %v1474 = vpop.f32.mrf.mxu0
      %v1475 = vadd.f32 0.0, %v1474
      %1476 = vmatmul.bf16.gmra.mxu0 %v1352
      %v1477 = vpop.f32.mrf.mxu0
      %v1478 = vadd.f32 0.0, %v1477
      %v1479 = vpop.f32.mrf.mxu0
      %v1480 = vadd.f32 0.0, %v1479
      %1481 = vmatmul.bf16.gmra.mxu0 %v1353
      %v1482 = vpop.f32.mrf.mxu0
      %v1483 = vadd.f32 0.0, %v1482
      %v1484 = vpop.f32.mrf.mxu0
      %v1485 = vadd.f32 0.0, %v1484
      %1486 = vmatmul.bf16.gmra.mxu0 %v1354
      %v1487 = vpop.f32.mrf.mxu0
      %v1488 = vadd.f32 0.0, %v1487
      %v1489 = vpop.f32.mrf.mxu0
      %v1490 = vadd.f32 0.0, %v1489
      %1491 = vmatmul.bf16.gmra.mxu0 %v1355
      %v1492 = vpop.f32.mrf.mxu0
      %v1493 = vadd.f32 0.0, %v1492
      %v1494 = vpop.f32.mrf.mxu0
      %v1495 = vadd.f32 0.0, %v1494
      %1496 = vmatmul.bf16.gmra.mxu0 %v1356
      %v1497 = vpop.f32.mrf.mxu0
      %v1498 = vadd.f32 0.0, %v1497
      %v1499 = vpop.f32.mrf.mxu0
      %v1500 = vadd.f32 0.0, %v1499
      %1501 = vmatmul.bf16.gmra.mxu0 %v1357
      %v1502 = vpop.f32.mrf.mxu0
      %v1503 = vadd.f32 0.0, %v1502
      %v1504 = vpop.f32.mrf.mxu0
      %v1505 = vadd.f32 0.0, %v1504
      %1506 = vmatmul.bf16.gmra.mxu0 %v1358
      %v1507 = vpop.f32.mrf.mxu0
      %v1508 = vadd.f32 0.0, %v1507
      %v1509 = vpop.f32.mrf.mxu0
      %v1510 = vadd.f32 0.0, %v1509
      %1511 = vmatmul.bf16.gmra.mxu0 %v1359
      %v1512 = vpop.f32.mrf.mxu0
      %v1513 = vadd.f32 0.0, %v1512
      %v1514 = vpop.f32.mrf.mxu0
      %v1515 = vadd.f32 0.0, %v1514
      %1516 = vmatmul.bf16.gmra.mxu0 %v1360
      %v1517 = vpop.f32.mrf.mxu0
      %v1518 = vadd.f32 0.0, %v1517
      %v1519 = vpop.f32.mrf.mxu0
      %v1520 = vadd.f32 0.0, %v1519
      %1521 = vmatmul.bf16.gmra.mxu0 %v1361
      %v1522 = vpop.f32.mrf.mxu0
      %v1523 = vadd.f32 0.0, %v1522
      %v1524 = vpop.f32.mrf.mxu0
      %v1525 = vadd.f32 0.0, %v1524
      %1526 = vmatmul.bf16.gmra.mxu0 %v1362
      %v1527 = vpop.f32.mrf.mxu0
      %v1528 = vadd.f32 0.0, %v1527
      %v1529 = vpop.f32.mrf.mxu0
      %v1530 = vadd.f32 0.0, %v1529
      %1531 = vmatmul.bf16.gmra.mxu0 %v1363
      %v1532 = vpop.f32.mrf.mxu0
      %v1533 = vadd.f32 0.0, %v1532
      %v1534 = vpop.f32.mrf.mxu0
      %v1535 = vadd.f32 0.0, %v1534
      %1536 = vmatmul.bf16.gmra.mxu0 %v1364
      %v1537 = vpop.f32.mrf.mxu0
      %v1538 = vadd.f32 0.0, %v1537
      %v1539 = vpop.f32.mrf.mxu0
      %v1540 = vadd.f32 0.0, %v1539
      %1541 = vmatmul.bf16.gmra.mxu0 %v1365
      %v1542 = vpop.f32.mrf.mxu0
      %v1543 = vadd.f32 0.0, %v1542
      %v1544 = vpop.f32.mrf.mxu0
      %v1545 = vadd.f32 0.0, %v1544
      %1546 = vmatmul.bf16.gmra.mxu0 %v1366
      %v1547 = vpop.f32.mrf.mxu0
      %v1548 = vadd.f32 0.0, %v1547
      %v1549 = vpop.f32.mrf.mxu0
      %v1550 = vadd.f32 0.0, %v1549
      %1551 = vdwg.mxu0
      %1552 = vmatpush.bf16.msra.mxu0 %v1446
      %1553 = vmatpush.bf16.msra.mxu0 %v1444
      %1554 = vmatpush.bf16.msra.mxu0 %v1442
      %1555 = vmatpush.bf16.msra.mxu0 %v1440
      %1556 = vmatpush.bf16.msra.mxu0 %v1438
      %1557 = vmatpush.bf16.msra.mxu0 %v1436
      %1558 = vmatpush.bf16.msra.mxu0 %v1434
      %1559 = vmatpush.bf16.msra.mxu0 %v1432
      %1560 = vmatmul.bf16.gmra.mxu0 %v1351
      %v1561 = vpop.f32.mrf.mxu0
      %v1562 = vadd.f32 0.0, %v1561
      %v1563 = vpop.f32.mrf.mxu0
      %v1564 = vadd.f32 0.0, %v1563
      %1565 = vmatmul.bf16.gmra.mxu0 %v1352
      %v1566 = vpop.f32.mrf.mxu0
      %v1567 = vadd.f32 0.0, %v1566
      %v1568 = vpop.f32.mrf.mxu0
      %v1569 = vadd.f32 0.0, %v1568
      %1570 = vmatmul.bf16.gmra.mxu0 %v1353
      %v1571 = vpop.f32.mrf.mxu0
      %v1572 = vadd.f32 0.0, %v1571
      %v1573 = vpop.f32.mrf.mxu0
      %v1574 = vadd.f32 0.0, %v1573
      %1575 = vmatmul.bf16.gmra.mxu0 %v1354
      %v1576 = vpop.f32.mrf.mxu0
      %v1577 = vadd.f32 0.0, %v1576
      %v1578 = vpop.f32.mrf.mxu0
      %v1579 = vadd.f32 0.0, %v1578
      %1580 = vmatmul.bf16.gmra.mxu0 %v1355
      %v1581 = vpop.f32.mrf.mxu0
      %v1582 = vadd.f32 0.0, %v1581
      %v1583 = vpop.f32.mrf.mxu0
      %v1584 = vadd.f32 0.0, %v1583
      %1585 = vmatmul.bf16.gmra.mxu0 %v1356
      %v1586 = vpop.f32.mrf.mxu0
      %v1587 = vadd.f32 0.0, %v1586
      %v1588 = vpop.f32.mrf.mxu0
      %v1589 = vadd.f32 0.0, %v1588
      %1590 = vmatmul.bf16.gmra.mxu0 %v1357
      %v1591 = vpop.f32.mrf.mxu0
      %v1592 = vadd.f32 0.0, %v1591
      %v1593 = vpop.f32.mrf.mxu0
      %v1594 = vadd.f32 0.0, %v1593
      %1595 = vmatmul.bf16.gmra.mxu0 %v1358
      %v1596 = vpop.f32.mrf.mxu0
      %v1597 = vadd.f32 0.0, %v1596
      %v1598 = vpop.f32.mrf.mxu0
      %v1599 = vadd.f32 0.0, %v1598
      %1600 = vmatmul.bf16.gmra.mxu0 %v1359
      %v1601 = vpop.f32.mrf.mxu0
      %v1602 = vadd.f32 0.0, %v1601
      %v1603 = vpop.f32.mrf.mxu0
      %v1604 = vadd.f32 0.0, %v1603
      %1605 = vmatmul.bf16.gmra.mxu0 %v1360
      %v1606 = vpop.f32.mrf.mxu0
      %v1607 = vadd.f32 0.0, %v1606
      %v1608 = vpop.f32.mrf.mxu0
      %v1609 = vadd.f32 0.0, %v1608
      %1610 = vmatmul.bf16.gmra.mxu0 %v1361
      %v1611 = vpop.f32.mrf.mxu0
      %v1612 = vadd.f32 0.0, %v1611
      %v1613 = vpop.f32.mrf.mxu0
      %v1614 = vadd.f32 0.0, %v1613
      %1615 = vmatmul.bf16.gmra.mxu0 %v1362
      %v1616 = vpop.f32.mrf.mxu0
      %v1617 = vadd.f32 0.0, %v1616
      %v1618 = vpop.f32.mrf.mxu0
      %v1619 = vadd.f32 0.0, %v1618
      %1620 = vmatmul.bf16.gmra.mxu0 %v1363
      %v1621 = vpop.f32.mrf.mxu0
      %v1622 = vadd.f32 0.0, %v1621
      %v1623 = vpop.f32.mrf.mxu0
      %v1624 = vadd.f32 0.0, %v1623
      %1625 = vmatmul.bf16.gmra.mxu0 %v1364
      %v1626 = vpop.f32.mrf.mxu0
      %v1627 = vadd.f32 0.0, %v1626
      %v1628 = vpop.f32.mrf.mxu0
      %v1629 = vadd.f32 0.0, %v1628
      %1630 = vmatmul.bf16.gmra.mxu0 %v1365
      %v1631 = vpop.f32.mrf.mxu0
      %v1632 = vadd.f32 0.0, %v1631
      %v1633 = vpop.f32.mrf.mxu0
      %v1634 = vadd.f32 0.0, %v1633
      %1635 = vmatmul.bf16.gmra.mxu0 %v1366
      %v1636 = vpop.f32.mrf.mxu0
      %v1637 = vadd.f32 0.0, %v1636
      %v1638 = vpop.f32.mrf.mxu0
      %v1639 = vadd.f32 0.0, %v1638
      %1640 = vdwg.mxu0
      %v1641 = vadd.f32 %v1238, %v1473
      %v1642 = vadd.f32 %v1239, %v1562
      %v1643 = vadd.f32 %v1240, %v1475
      %v1644 = vadd.f32 %v1241, %v1564
      %v1645 = vadd.f32 %v1242, %v1478
      %v1646 = vadd.f32 %v1243, %v1567
      %v1647 = vadd.f32 %v1244, %v1480
      %v1648 = vadd.f32 %v1245, %v1569
      %v1649 = vadd.f32 %v1246, %v1483
      %v1650 = vadd.f32 %v1247, %v1572
      %v1651 = vadd.f32 %v1248, %v1485
      %v1652 = vadd.f32 %v1249, %v1574
      %v1653 = vadd.f32 %v1250, %v1488
      %v1654 = vadd.f32 %v1251, %v1577
      %v1655 = vadd.f32 %v1252, %v1490
      %v1656 = vadd.f32 %v1253, %v1579
      %v1657 = vadd.f32 %v1254, %v1493
      %v1658 = vadd.f32 %v1255, %v1582
      %v1659 = vadd.f32 %v1256, %v1495
      %v1660 = vadd.f32 %v1257, %v1584
      %v1661 = vadd.f32 %v1258, %v1498
      %v1662 = vadd.f32 %v1259, %v1587
      %v1663 = vadd.f32 %v1260, %v1500
      %v1664 = vadd.f32 %v1261, %v1589
      %v1665 = vadd.f32 %v1262, %v1503
      %v1666 = vadd.f32 %v1263, %v1592
      %v1667 = vadd.f32 %v1264, %v1505
      %v1668 = vadd.f32 %v1265, %v1594
      %v1669 = vadd.f32 %v1266, %v1508
      %v1670 = vadd.f32 %v1267, %v1597
      %v1671 = vadd.f32 %v1268, %v1510
      %v1672 = vadd.f32 %v1269, %v1599
      %v1673 = vadd.f32 %v1270, %v1513
      %v1674 = vadd.f32 %v1271, %v1602
      %v1675 = vadd.f32 %v1272, %v1515
      %v1676 = vadd.f32 %v1273, %v1604
      %v1677 = vadd.f32 %v1274, %v1518
      %v1678 = vadd.f32 %v1275, %v1607
      %v1679 = vadd.f32 %v1276, %v1520
      %v1680 = vadd.f32 %v1277, %v1609
      %v1681 = vadd.f32 %v1278, %v1523
      %v1682 = vadd.f32 %v1279, %v1612
      %v1683 = vadd.f32 %v1280, %v1525
      %v1684 = vadd.f32 %v1281, %v1614
      %v1685 = vadd.f32 %v1282, %v1528
      %v1686 = vadd.f32 %v1283, %v1617
      %v1687 = vadd.f32 %v1284, %v1530
      %v1688 = vadd.f32 %v1285, %v1619
      %v1689 = vadd.f32 %v1286, %v1533
      %v1690 = vadd.f32 %v1287, %v1622
      %v1691 = vadd.f32 %v1288, %v1535
      %v1692 = vadd.f32 %v1289, %v1624
      %v1693 = vadd.f32 %v1290, %v1538
      %v1694 = vadd.f32 %v1291, %v1627
      %v1695 = vadd.f32 %v1292, %v1540
      %v1696 = vadd.f32 %v1293, %v1629
      %v1697 = vadd.f32 %v1294, %v1543
      %v1698 = vadd.f32 %v1295, %v1632
      %v1699 = vadd.f32 %v1296, %v1545
      %v1700 = vadd.f32 %v1297, %v1634
      %v1701 = vadd.f32 %v1298, %v1548
      %v1702 = vadd.f32 %v1299, %v1637
      %v1703 = vadd.f32 %v1300, %v1550
      %v1704 = vadd.f32 %v1301, %v1639
      %1705 = vst [vmem:[#allocation2] sm:$0xff] %v1641
      %1706 = vst [vmem:[#allocation2 + $0x8] sm:$0xff] %v1642
      %1707 = vst [vmem:[#allocation2 + $0x10] sm:$0xff] %v1643
      %1708 = vst [vmem:[#allocation2 + $0x18] sm:$0xff] %v1644
      %1709 = vst [vmem:[#allocation2 + $0x20] sm:$0xff] %v1645
      %1710 = vst [vmem:[#allocation2 + $0x28] sm:$0xff] %v1646
      %1711 = vst [vmem:[#allocation2 + $0x30] sm:$0xff] %v1647
      %1712 = vst [vmem:[#allocation2 + $0x38] sm:$0xff] %v1648
      %1713 = vst [vmem:[#allocation2 + $0x40] sm:$0xff] %v1649
      %1714 = vst [vmem:[#allocation2 + $0x48] sm:$0xff] %v1650
      %1715 = vst [vmem:[#allocation2 + $0x50] sm:$0xff] %v1651
      %1716 = vst [vmem:[#allocation2 + $0x58] sm:$0xff] %v1652
      %1717 = vst [vmem:[#allocation2 + $0x60] sm:$0xff] %v1653
      %1718 = vst [vmem:[#allocation2 + $0x68] sm:$0xff] %v1654
      %1719 = vst [vmem:[#allocation2 + $0x70] sm:$0xff] %v1655
      %1720 = vst [vmem:[#allocation2 + $0x78] sm:$0xff] %v1656
      %1721 = vst [vmem:[#allocation2 + $0x80] sm:$0xff] %v1657
      %1722 = vst [vmem:[#allocation2 + $0x88] sm:$0xff] %v1658
      %1723 = vst [vmem:[#allocation2 + $0x90] sm:$0xff] %v1659
      %1724 = vst [vmem:[#allocation2 + $0x98] sm:$0xff] %v1660
      %1725 = vst [vmem:[#allocation2 + $0xa0] sm:$0xff] %v1661
      %1726 = vst [vmem:[#allocation2 + $0xa8] sm:$0xff] %v1662
      %1727 = vst [vmem:[#allocation2 + $0xb0] sm:$0xff] %v1663
      %1728 = vst [vmem:[#allocation2 + $0xb8] sm:$0xff] %v1664
      %1729 = vst [vmem:[#allocation2 + $0xc0] sm:$0xff] %v1665
      %1730 = vst [vmem:[#allocation2 + $0xc8] sm:$0xff] %v1666
      %1731 = vst [vmem:[#allocation2 + $0xd0] sm:$0xff] %v1667
      %1732 = vst [vmem:[#allocation2 + $0xd8] sm:$0xff] %v1668
      %1733 = vst [vmem:[#allocation2 + $0xe0] sm:$0xff] %v1669
      %1734 = vst [vmem:[#allocation2 + $0xe8] sm:$0xff] %v1670
      %1735 = vst [vmem:[#allocation2 + $0xf0] sm:$0xff] %v1671
      %1736 = vst [vmem:[#allocation2 + $0xf8] sm:$0xff] %v1672
      %1737 = vst [vmem:[#allocation2 + $0x100] sm:$0xff] %v1673
      %1738 = vst [vmem:[#allocation2 + $0x108] sm:$0xff] %v1674
      %1739 = vst [vmem:[#allocation2 + $0x110] sm:$0xff] %v1675
      %1740 = vst [vmem:[#allocation2 + $0x118] sm:$0xff] %v1676
      %1741 = vst [vmem:[#allocation2 + $0x120] sm:$0xff] %v1677
      %1742 = vst [vmem:[#allocation2 + $0x128] sm:$0xff] %v1678
      %1743 = vst [vmem:[#allocation2 + $0x130] sm:$0xff] %v1679
      %1744 = vst [vmem:[#allocation2 + $0x138] sm:$0xff] %v1680
      %1745 = vst [vmem:[#allocation2 + $0x140] sm:$0xff] %v1681
      %1746 = vst [vmem:[#allocation2 + $0x148] sm:$0xff] %v1682
      %1747 = vst [vmem:[#allocation2 + $0x150] sm:$0xff] %v1683
      %1748 = vst [vmem:[#allocation2 + $0x158] sm:$0xff] %v1684
      %1749 = vst [vmem:[#allocation2 + $0x160] sm:$0xff] %v1685
      %1750 = vst [vmem:[#allocation2 + $0x168] sm:$0xff] %v1686
      %1751 = vst [vmem:[#allocation2 + $0x170] sm:$0xff] %v1687
      %1752 = vst [vmem:[#allocation2 + $0x178] sm:$0xff] %v1688
      %1753 = vst [vmem:[#allocation2 + $0x180] sm:$0xff] %v1689
      %1754 = vst [vmem:[#allocation2 + $0x188] sm:$0xff] %v1690
      %1755 = vst [vmem:[#allocation2 + $0x190] sm:$0xff] %v1691
      %1756 = vst [vmem:[#allocation2 + $0x198] sm:$0xff] %v1692
      %1757 = vst [vmem:[#allocation2 + $0x1a0] sm:$0xff] %v1693
      %1758 = vst [vmem:[#allocation2 + $0x1a8] sm:$0xff] %v1694
      %1759 = vst [vmem:[#allocation2 + $0x1b0] sm:$0xff] %v1695
      %1760 = vst [vmem:[#allocation2 + $0x1b8] sm:$0xff] %v1696
      %1761 = vst [vmem:[#allocation2 + $0x1c0] sm:$0xff] %v1697
      %1762 = vst [vmem:[#allocation2 + $0x1c8] sm:$0xff] %v1698
      %1763 = vst [vmem:[#allocation2 + $0x1d0] sm:$0xff] %v1699
      %1764 = vst [vmem:[#allocation2 + $0x1d8] sm:$0xff] %v1700
      %1765 = vst [vmem:[#allocation2 + $0x1e0] sm:$0xff] %v1701
      %1766 = vst [vmem:[#allocation2 + $0x1e8] sm:$0xff] %v1702
      %1767 = vst [vmem:[#allocation2 + $0x1f0] sm:$0xff] %v1703
      %1768 = vst [vmem:[#allocation2 + $0x1f8] sm:$0xff] %v1704
      %vm1785 = vcmask 1042432
      %vm1786 = vcmask 1046532
      %vm1787 = vmor %vm1785, %vm1786
      %v1788 = vrot.slane %v235, 5
      %v1789 = vrot.slane %v1788, 4
      %v1790 = vrot.slane %v236, 5
      %v1791 = vsel %vm1787, %v1789, %v1790
      %v1792 = vrot.slane %v1790, 4
      %v1793 = vrot.slane %v237, 5
      %v1794 = vsel %vm1787, %v1792, %v1793
      %v1795 = vrot.slane %v238, 5
      %v1796 = vrot.slane %v1795, 4
      %v1797 = vrot.slane %v239, 5
      %v1798 = vsel %vm1787, %v1796, %v1797
      %v1799 = vrot.slane %v1797, 4
      %v1800 = vrot.slane %v240, 5
      %v1801 = vsel %vm1787, %v1799, %v1800
      %v1802 = vrot.slane %v241, 5
      %v1803 = vrot.slane %v1802, 4
      %v1804 = vrot.slane %v242, 5
      %v1805 = vsel %vm1787, %v1803, %v1804
      %v1806 = vrot.slane %v1804, 4
      %v1807 = vrot.slane %v243, 5
      %v1808 = vsel %vm1787, %v1806, %v1807
      %v1809 = vrot.slane %v244, 5
      %v1810 = vrot.slane %v1809, 4
      %v1811 = vrot.slane %v245, 5
      %v1812 = vsel %vm1787, %v1810, %v1811
      %v1813 = vrot.slane %v1811, 4
      %v1814 = vrot.slane %v246, 5
      %v1815 = vsel %vm1787, %v1813, %v1814
      %v1816 = vrot.slane %v247, 5
      %v1817 = vrot.slane %v1816, 4
      %v1818 = vrot.slane %v248, 5
      %v1819 = vsel %vm1787, %v1817, %v1818
      %v1820 = vrot.slane %v1818, 4
      %v1821 = vrot.slane %v249, 5
      %v1822 = vsel %vm1787, %v1820, %v1821
      %v1823 = vrot.slane %v250, 5
      %v1824 = vrot.slane %v1823, 4
      %v1825 = vrot.slane %v251, 5
      %v1826 = vsel %vm1787, %v1824, %v1825
      %v1827 = vrot.slane %v1825, 4
      %v1828 = vrot.slane %v252, 5
      %v1829 = vsel %vm1787, %v1827, %v1828
      %v1830 = vrot.slane %v253, 5
      %v1831 = vrot.slane %v1830, 4
      %v1832 = vrot.slane %v254, 5
      %v1833 = vsel %vm1787, %v1831, %v1832
      %v1834 = vrot.slane %v1832, 4
      %v1835 = vrot.slane %v255, 5
      %v1836 = vsel %vm1787, %v1834, %v1835
      %v1837 = vrot.slane %v256, 5
      %v1838 = vrot.slane %v1837, 4
      %v1839 = vrot.slane %v257, 5
      %v1840 = vsel %vm1787, %v1838, %v1839
      %v1841 = vrot.slane %v1839, 4
      %v1842 = vrot.slane %v258, 5
      %v1843 = vsel %vm1787, %v1841, %v1842
      %v1844 = vrot.slane %v259, 5
      %v1845 = vrot.slane %v1844, 4
      %v1846 = vrot.slane %v260, 5
      %v1847 = vsel %vm1787, %v1845, %v1846
      %v1848 = vrot.slane %v1846, 4
      %v1849 = vrot.slane %v261, 5
      %v1850 = vsel %vm1787, %v1848, %v1849
      %v1851 = vrot.slane %v262, 5
      %v1852 = vrot.slane %v1851, 4
      %v1853 = vrot.slane %v263, 5
      %v1854 = vsel %vm1787, %v1852, %v1853
      %v1855 = vrot.slane %v1853, 4
      %v1856 = vrot.slane %v264, 5
      %v1857 = vsel %vm1787, %v1855, %v1856
      %v1858 = vrot.slane %v265, 5
      %v1859 = vrot.slane %v1858, 4
      %v1860 = vrot.slane %v266, 5
      %v1861 = vsel %vm1787, %v1859, %v1860
      %v1862 = vrot.slane %v1860, 4
      %v1863 = vrot.slane %v267, 5
      %v1864 = vsel %vm1787, %v1862, %v1863
      %v1865 = vrot.slane %v268, 5
      %v1866 = vrot.slane %v1865, 4
      %v1867 = vrot.slane %v269, 5
      %v1868 = vsel %vm1787, %v1866, %v1867
      %v1869 = vrot.slane %v1867, 4
      %v1870 = vrot.slane %v270, 5
      %v1871 = vsel %vm1787, %v1869, %v1870
      %v1872 = vrot.slane %v271, 5
      %v1873 = vrot.slane %v1872, 4
      %v1874 = vrot.slane %v272, 5
      %v1875 = vsel %vm1787, %v1873, %v1874
      %v1876 = vrot.slane %v1874, 4
      %v1877 = vrot.slane %v273, 5
      %v1878 = vsel %vm1787, %v1876, %v1877
      %v1879 = vrot.slane %v274, 5
      %v1880 = vrot.slane %v1879, 4
      %v1881 = vrot.slane %v275, 5
      %v1882 = vsel %vm1787, %v1880, %v1881
      %v1883 = vrot.slane %v1881, 4
      %v1884 = vrot.slane %v276, 5
      %v1885 = vsel %vm1787, %v1883, %v1884
      %v1886 = vrot.slane %v277, 5
      %v1887 = vrot.slane %v1886, 4
      %v1888 = vrot.slane %v278, 5
      %v1889 = vsel %vm1787, %v1887, %v1888
      %v1890 = vrot.slane %v1888, 4
      %v1891 = vrot.slane %v279, 5
      %v1892 = vsel %vm1787, %v1890, %v1891
      %v1893 = vrot.slane %v280, 5
      %v1894 = vrot.slane %v1893, 4
      %v1895 = vrot.slane %v281, 5
      %v1896 = vsel %vm1787, %v1894, %v1895
      %v1897 = vrot.slane %v1895, 4
      %v1898 = vrot.slane %v282, 5
      %v1899 = vsel %vm1787, %v1897, %v1898
      %v1900 = vld [vmem:[#allocation2] sm:$0xff]
      %v1901 = vld [vmem:[#allocation2 + $0x8] sm:$0xff]
      %v1902 = vld [vmem:[#allocation2 + $0x10] sm:$0xff]
      %v1903 = vld [vmem:[#allocation2 + $0x18] sm:$0xff]
      %v1904 = vld [vmem:[#allocation2 + $0x20] sm:$0xff]
      %v1905 = vld [vmem:[#allocation2 + $0x28] sm:$0xff]
      %v1906 = vld [vmem:[#allocation2 + $0x30] sm:$0xff]
      %v1907 = vld [vmem:[#allocation2 + $0x38] sm:$0xff]
      %v1908 = vld [vmem:[#allocation2 + $0x40] sm:$0xff]
      %v1909 = vld [vmem:[#allocation2 + $0x48] sm:$0xff]
      %v1910 = vld [vmem:[#allocation2 + $0x50] sm:$0xff]
      %v1911 = vld [vmem:[#allocation2 + $0x58] sm:$0xff]
      %v1912 = vld [vmem:[#allocation2 + $0x60] sm:$0xff]
      %v1913 = vld [vmem:[#allocation2 + $0x68] sm:$0xff]
      %v1914 = vld [vmem:[#allocation2 + $0x70] sm:$0xff]
      %v1915 = vld [vmem:[#allocation2 + $0x78] sm:$0xff]
      %v1916 = vld [vmem:[#allocation2 + $0x80] sm:$0xff]
      %v1917 = vld [vmem:[#allocation2 + $0x88] sm:$0xff]
      %v1918 = vld [vmem:[#allocation2 + $0x90] sm:$0xff]
      %v1919 = vld [vmem:[#allocation2 + $0x98] sm:$0xff]
      %v1920 = vld [vmem:[#allocation2 + $0xa0] sm:$0xff]
      %v1921 = vld [vmem:[#allocation2 + $0xa8] sm:$0xff]
      %v1922 = vld [vmem:[#allocation2 + $0xb0] sm:$0xff]
      %v1923 = vld [vmem:[#allocation2 + $0xb8] sm:$0xff]
      %v1924 = vld [vmem:[#allocation2 + $0xc0] sm:$0xff]
      %v1925 = vld [vmem:[#allocation2 + $0xc8] sm:$0xff]
      %v1926 = vld [vmem:[#allocation2 + $0xd0] sm:$0xff]
      %v1927 = vld [vmem:[#allocation2 + $0xd8] sm:$0xff]
      %v1928 = vld [vmem:[#allocation2 + $0xe0] sm:$0xff]
      %v1929 = vld [vmem:[#allocation2 + $0xe8] sm:$0xff]
      %v1930 = vld [vmem:[#allocation2 + $0xf0] sm:$0xff]
      %v1931 = vld [vmem:[#allocation2 + $0xf8] sm:$0xff]
      %v1932 = vld [vmem:[#allocation2 + $0x100] sm:$0xff]
      %v1933 = vld [vmem:[#allocation2 + $0x108] sm:$0xff]
      %v1934 = vld [vmem:[#allocation2 + $0x110] sm:$0xff]
      %v1935 = vld [vmem:[#allocation2 + $0x118] sm:$0xff]
      %v1936 = vld [vmem:[#allocation2 + $0x120] sm:$0xff]
      %v1937 = vld [vmem:[#allocation2 + $0x128] sm:$0xff]
      %v1938 = vld [vmem:[#allocation2 + $0x130] sm:$0xff]
      %v1939 = vld [vmem:[#allocation2 + $0x138] sm:$0xff]
      %v1940 = vld [vmem:[#allocation2 + $0x140] sm:$0xff]
      %v1941 = vld [vmem:[#allocation2 + $0x148] sm:$0xff]
      %v1942 = vld [vmem:[#allocation2 + $0x150] sm:$0xff]
      %v1943 = vld [vmem:[#allocation2 + $0x158] sm:$0xff]
      %v1944 = vld [vmem:[#allocation2 + $0x160] sm:$0xff]
      %v1945 = vld [vmem:[#allocation2 + $0x168] sm:$0xff]
      %v1946 = vld [vmem:[#allocation2 + $0x170] sm:$0xff]
      %v1947 = vld [vmem:[#allocation2 + $0x178] sm:$0xff]
      %v1948 = vld [vmem:[#allocation2 + $0x180] sm:$0xff]
      %v1949 = vld [vmem:[#allocation2 + $0x188] sm:$0xff]
      %v1950 = vld [vmem:[#allocation2 + $0x190] sm:$0xff]
      %v1951 = vld [vmem:[#allocation2 + $0x198] sm:$0xff]
      %v1952 = vld [vmem:[#allocation2 + $0x1a0] sm:$0xff]
      %v1953 = vld [vmem:[#allocation2 + $0x1a8] sm:$0xff]
      %v1954 = vld [vmem:[#allocation2 + $0x1b0] sm:$0xff]
      %v1955 = vld [vmem:[#allocation2 + $0x1b8] sm:$0xff]
      %v1956 = vld [vmem:[#allocation2 + $0x1c0] sm:$0xff]
      %v1957 = vld [vmem:[#allocation2 + $0x1c8] sm:$0xff]
      %v1958 = vld [vmem:[#allocation2 + $0x1d0] sm:$0xff]
      %v1959 = vld [vmem:[#allocation2 + $0x1d8] sm:$0xff]
      %v1960 = vld [vmem:[#allocation2 + $0x1e0] sm:$0xff]
      %v1961 = vld [vmem:[#allocation2 + $0x1e8] sm:$0xff]
      %v1962 = vld [vmem:[#allocation2 + $0x1f0] sm:$0xff]
      %v1963 = vld [vmem:[#allocation2 + $0x1f8] sm:$0xff]
      %s1964 = scalar_lea.vmem %s1, 256
      %v1965 = vld [vmem:[%s1964] sm:$0xff]
      %v1966 = vld [vmem:[%s1964 + $0x8] sm:$0xff]
      %v1967 = vld [vmem:[%s1964 + $0x10] sm:$0xff]
      %v1968 = vld [vmem:[%s1964 + $0x18] sm:$0xff]
      %v1969 = vld [vmem:[%s1964 + $0x20] sm:$0xff]
      %v1970 = vld [vmem:[%s1964 + $0x28] sm:$0xff]
      %v1971 = vld [vmem:[%s1964 + $0x30] sm:$0xff]
      %v1972 = vld [vmem:[%s1964 + $0x38] sm:$0xff]
      %v1973 = vld [vmem:[%s1964 + $0x40] sm:$0xff]
      %v1974 = vld [vmem:[%s1964 + $0x48] sm:$0xff]
      %v1975 = vld [vmem:[%s1964 + $0x50] sm:$0xff]
      %v1976 = vld [vmem:[%s1964 + $0x58] sm:$0xff]
      %v1977 = vld [vmem:[%s1964 + $0x60] sm:$0xff]
      %v1978 = vld [vmem:[%s1964 + $0x68] sm:$0xff]
      %v1979 = vld [vmem:[%s1964 + $0x70] sm:$0xff]
      %v1980 = vld [vmem:[%s1964 + $0x78] sm:$0xff]
      %v1981 = vunpack.c.l.b16 %v1791
      %v1982 = vunpack.c.l.b16 %v1794
      %v1983 = vunpack.c.l.b16 %v1798
      %v1984 = vunpack.c.l.b16 %v1801
      %v1985 = vunpack.c.l.b16 %v1805
      %v1986 = vunpack.c.l.b16 %v1808
      %v1987 = vunpack.c.l.b16 %v1812
      %v1988 = vunpack.c.l.b16 %v1815
      %v1989 = vunpack.c.l.b16 %v1819
      %v1990 = vunpack.c.l.b16 %v1822
      %v1991 = vunpack.c.l.b16 %v1826
      %v1992 = vunpack.c.l.b16 %v1829
      %v1993 = vunpack.c.l.b16 %v1833
      %v1994 = vunpack.c.l.b16 %v1836
      %v1995 = vunpack.c.l.b16 %v1840
      %v1996 = vunpack.c.l.b16 %v1843
      %v1997 = vunpack.c.l.b16 %v1847
      %v1998 = vunpack.c.l.b16 %v1850
      %v1999 = vunpack.c.l.b16 %v1854
      %v2000 = vunpack.c.l.b16 %v1857
      %v2001 = vunpack.c.l.b16 %v1861
      %v2002 = vunpack.c.l.b16 %v1864
      %v2003 = vunpack.c.l.b16 %v1868
      %v2004 = vunpack.c.l.b16 %v1871
      %v2005 = vunpack.c.l.b16 %v1875
      %v2006 = vunpack.c.l.b16 %v1878
      %v2007 = vunpack.c.l.b16 %v1882
      %v2008 = vunpack.c.l.b16 %v1885
      %v2009 = vunpack.c.l.b16 %v1889
      %v2010 = vunpack.c.l.b16 %v1892
      %v2011 = vunpack.c.l.b16 %v1896
      %v2012 = vunpack.c.l.b16 %v1899
      %v2013 = vpack.c.b16 %v1982, %v1981
      %v2014 = vpack.c.b16 %v1984, %v1983
      %v2015 = vpack.c.b16 %v1986, %v1985
      %v2016 = vpack.c.b16 %v1988, %v1987
      %v2017 = vpack.c.b16 %v1990, %v1989
      %v2018 = vpack.c.b16 %v1992, %v1991
      %v2019 = vpack.c.b16 %v1994, %v1993
      %v2020 = vpack.c.b16 %v1996, %v1995
      %v2021 = vpack.c.b16 %v1998, %v1997
      %v2022 = vpack.c.b16 %v2000, %v1999
      %v2023 = vpack.c.b16 %v2002, %v2001
      %v2024 = vpack.c.b16 %v2004, %v2003
      %v2025 = vpack.c.b16 %v2006, %v2005
      %v2026 = vpack.c.b16 %v2008, %v2007
      %v2027 = vpack.c.b16 %v2010, %v2009
      %v2028 = vpack.c.b16 %v2012, %v2011
      %v2061 = vunpack.c.l.b16 %v1965
      %v2062 = vunpack.c.h.b16 %v1965
      %v2063 = vunpack.c.l.b16 %v1966
      %v2064 = vunpack.c.h.b16 %v1966
      %v2065 = vunpack.c.l.b16 %v1967
      %v2066 = vunpack.c.h.b16 %v1967
      %v2067 = vunpack.c.l.b16 %v1968
      %v2068 = vunpack.c.h.b16 %v1968
      %v2069 = vunpack.c.l.b16 %v1969
      %v2070 = vunpack.c.h.b16 %v1969
      %v2071 = vunpack.c.l.b16 %v1970
      %v2072 = vunpack.c.h.b16 %v1970
      %v2073 = vunpack.c.l.b16 %v1971
      %v2074 = vunpack.c.h.b16 %v1971
      %v2075 = vunpack.c.l.b16 %v1972
      %v2076 = vunpack.c.h.b16 %v1972
      %v2077 = vunpack.c.l.b16 %v1973
      %v2078 = vunpack.c.h.b16 %v1973
      %v2079 = vunpack.c.l.b16 %v1974
      %v2080 = vunpack.c.h.b16 %v1974
      %v2081 = vunpack.c.l.b16 %v1975
      %v2082 = vunpack.c.h.b16 %v1975
      %v2083 = vunpack.c.l.b16 %v1976
      %v2084 = vunpack.c.h.b16 %v1976
      %v2085 = vunpack.c.l.b16 %v1977
      %v2086 = vunpack.c.h.b16 %v1977
      %v2087 = vunpack.c.l.b16 %v1978
      %v2088 = vunpack.c.h.b16 %v1978
      %v2089 = vunpack.c.l.b16 %v1979
      %v2090 = vunpack.c.h.b16 %v1979
      %v2091 = vunpack.c.l.b16 %v1980
      %v2092 = vunpack.c.h.b16 %v1980
      %v2093 = vpack.c.b16 %v2063, %v2061
      %v2094 = vpack.c.b16 %v2064, %v2062
      %v2095 = vpack.c.b16 %v2067, %v2065
      %v2096 = vpack.c.b16 %v2068, %v2066
      %v2097 = vpack.c.b16 %v2071, %v2069
      %v2098 = vpack.c.b16 %v2072, %v2070
      %v2099 = vpack.c.b16 %v2075, %v2073
      %v2100 = vpack.c.b16 %v2076, %v2074
      %v2101 = vpack.c.b16 %v2079, %v2077
      %v2102 = vpack.c.b16 %v2080, %v2078
      %v2103 = vpack.c.b16 %v2083, %v2081
      %v2104 = vpack.c.b16 %v2084, %v2082
      %v2105 = vpack.c.b16 %v2087, %v2085
      %v2106 = vpack.c.b16 %v2088, %v2086
      %v2107 = vpack.c.b16 %v2091, %v2089
      %v2108 = vpack.c.b16 %v2092, %v2090
      %2125 = vmatpush.bf16.msra.mxu0 %v2107
      %2126 = vmatpush.bf16.msra.mxu0 %v2105
      %2127 = vmatpush.bf16.msra.mxu0 %v2103
      %2128 = vmatpush.bf16.msra.mxu0 %v2101
      %2129 = vmatpush.bf16.msra.mxu0 %v2099
      %2130 = vmatpush.bf16.msra.mxu0 %v2097
      %2131 = vmatpush.bf16.msra.mxu0 %v2095
      %2132 = vmatpush.bf16.msra.mxu0 %v2093
      %2133 = vmatmul.bf16.gmra.mxu0 %v2013
      %v2134 = vpop.f32.mrf.mxu0
      %v2135 = vadd.f32 0.0, %v2134
      %v2136 = vpop.f32.mrf.mxu0
      %v2137 = vadd.f32 0.0, %v2136
      %2138 = vmatmul.bf16.gmra.mxu0 %v2014
      %v2139 = vpop.f32.mrf.mxu0
      %v2140 = vadd.f32 0.0, %v2139
      %v2141 = vpop.f32.mrf.mxu0
      %v2142 = vadd.f32 0.0, %v2141
      %2143 = vmatmul.bf16.gmra.mxu0 %v2015
      %v2144 = vpop.f32.mrf.mxu0
      %v2145 = vadd.f32 0.0, %v2144
      %v2146 = vpop.f32.mrf.mxu0
      %v2147 = vadd.f32 0.0, %v2146
      %2148 = vmatmul.bf16.gmra.mxu0 %v2016
      %v2149 = vpop.f32.mrf.mxu0
      %v2150 = vadd.f32 0.0, %v2149
      %v2151 = vpop.f32.mrf.mxu0
      %v2152 = vadd.f32 0.0, %v2151
      %2153 = vmatmul.bf16.gmra.mxu0 %v2017
      %v2154 = vpop.f32.mrf.mxu0
      %v2155 = vadd.f32 0.0, %v2154
      %v2156 = vpop.f32.mrf.mxu0
      %v2157 = vadd.f32 0.0, %v2156
      %2158 = vmatmul.bf16.gmra.mxu0 %v2018
      %v2159 = vpop.f32.mrf.mxu0
      %v2160 = vadd.f32 0.0, %v2159
      %v2161 = vpop.f32.mrf.mxu0
      %v2162 = vadd.f32 0.0, %v2161
      %2163 = vmatmul.bf16.gmra.mxu0 %v2019
      %v2164 = vpop.f32.mrf.mxu0
      %v2165 = vadd.f32 0.0, %v2164
      %v2166 = vpop.f32.mrf.mxu0
      %v2167 = vadd.f32 0.0, %v2166
      %2168 = vmatmul.bf16.gmra.mxu0 %v2020
      %v2169 = vpop.f32.mrf.mxu0
      %v2170 = vadd.f32 0.0, %v2169
      %v2171 = vpop.f32.mrf.mxu0
      %v2172 = vadd.f32 0.0, %v2171
      %2173 = vmatmul.bf16.gmra.mxu0 %v2021
      %v2174 = vpop.f32.mrf.mxu0
      %v2175 = vadd.f32 0.0, %v2174
      %v2176 = vpop.f32.mrf.mxu0
      %v2177 = vadd.f32 0.0, %v2176
      %2178 = vmatmul.bf16.gmra.mxu0 %v2022
      %v2179 = vpop.f32.mrf.mxu0
      %v2180 = vadd.f32 0.0, %v2179
      %v2181 = vpop.f32.mrf.mxu0
      %v2182 = vadd.f32 0.0, %v2181
      %2183 = vmatmul.bf16.gmra.mxu0 %v2023
      %v2184 = vpop.f32.mrf.mxu0
      %v2185 = vadd.f32 0.0, %v2184
      %v2186 = vpop.f32.mrf.mxu0
      %v2187 = vadd.f32 0.0, %v2186
      %2188 = vmatmul.bf16.gmra.mxu0 %v2024
      %v2189 = vpop.f32.mrf.mxu0
      %v2190 = vadd.f32 0.0, %v2189
      %v2191 = vpop.f32.mrf.mxu0
      %v2192 = vadd.f32 0.0, %v2191
      %2193 = vmatmul.bf16.gmra.mxu0 %v2025
      %v2194 = vpop.f32.mrf.mxu0
      %v2195 = vadd.f32 0.0, %v2194
      %v2196 = vpop.f32.mrf.mxu0
      %v2197 = vadd.f32 0.0, %v2196
      %2198 = vmatmul.bf16.gmra.mxu0 %v2026
      %v2199 = vpop.f32.mrf.mxu0
      %v2200 = vadd.f32 0.0, %v2199
      %v2201 = vpop.f32.mrf.mxu0
      %v2202 = vadd.f32 0.0, %v2201
      %2203 = vmatmul.bf16.gmra.mxu0 %v2027
      %v2204 = vpop.f32.mrf.mxu0
      %v2205 = vadd.f32 0.0, %v2204
      %v2206 = vpop.f32.mrf.mxu0
      %v2207 = vadd.f32 0.0, %v2206
      %2208 = vmatmul.bf16.gmra.mxu0 %v2028
      %v2209 = vpop.f32.mrf.mxu0
      %v2210 = vadd.f32 0.0, %v2209
      %v2211 = vpop.f32.mrf.mxu0
      %v2212 = vadd.f32 0.0, %v2211
      %2213 = vdwg.mxu0
      %2214 = vmatpush.bf16.msra.mxu0 %v2108
      %2215 = vmatpush.bf16.msra.mxu0 %v2106
      %2216 = vmatpush.bf16.msra.mxu0 %v2104
      %2217 = vmatpush.bf16.msra.mxu0 %v2102
      %2218 = vmatpush.bf16.msra.mxu0 %v2100
      %2219 = vmatpush.bf16.msra.mxu0 %v2098
      %2220 = vmatpush.bf16.msra.mxu0 %v2096
      %2221 = vmatpush.bf16.msra.mxu0 %v2094
      %2222 = vmatmul.bf16.gmra.mxu0 %v2013
      %v2223 = vpop.f32.mrf.mxu0
      %v2224 = vadd.f32 0.0, %v2223
      %v2225 = vpop.f32.mrf.mxu0
      %v2226 = vadd.f32 0.0, %v2225
      %2227 = vmatmul.bf16.gmra.mxu0 %v2014
      %v2228 = vpop.f32.mrf.mxu0
      %v2229 = vadd.f32 0.0, %v2228
      %v2230 = vpop.f32.mrf.mxu0
      %v2231 = vadd.f32 0.0, %v2230
      %2232 = vmatmul.bf16.gmra.mxu0 %v2015
      %v2233 = vpop.f32.mrf.mxu0
      %v2234 = vadd.f32 0.0, %v2233
      %v2235 = vpop.f32.mrf.mxu0
      %v2236 = vadd.f32 0.0, %v2235
      %2237 = vmatmul.bf16.gmra.mxu0 %v2016
      %v2238 = vpop.f32.mrf.mxu0
      %v2239 = vadd.f32 0.0, %v2238
      %v2240 = vpop.f32.mrf.mxu0
      %v2241 = vadd.f32 0.0, %v2240
      %2242 = vmatmul.bf16.gmra.mxu0 %v2017
      %v2243 = vpop.f32.mrf.mxu0
      %v2244 = vadd.f32 0.0, %v2243
      %v2245 = vpop.f32.mrf.mxu0
      %v2246 = vadd.f32 0.0, %v2245
      %2247 = vmatmul.bf16.gmra.mxu0 %v2018
      %v2248 = vpop.f32.mrf.mxu0
      %v2249 = vadd.f32 0.0, %v2248
      %v2250 = vpop.f32.mrf.mxu0
      %v2251 = vadd.f32 0.0, %v2250
      %2252 = vmatmul.bf16.gmra.mxu0 %v2019
      %v2253 = vpop.f32.mrf.mxu0
      %v2254 = vadd.f32 0.0, %v2253
      %v2255 = vpop.f32.mrf.mxu0
      %v2256 = vadd.f32 0.0, %v2255
      %2257 = vmatmul.bf16.gmra.mxu0 %v2020
      %v2258 = vpop.f32.mrf.mxu0
      %v2259 = vadd.f32 0.0, %v2258
      %v2260 = vpop.f32.mrf.mxu0
      %v2261 = vadd.f32 0.0, %v2260
      %2262 = vmatmul.bf16.gmra.mxu0 %v2021
      %v2263 = vpop.f32.mrf.mxu0
      %v2264 = vadd.f32 0.0, %v2263
      %v2265 = vpop.f32.mrf.mxu0
      %v2266 = vadd.f32 0.0, %v2265
      %2267 = vmatmul.bf16.gmra.mxu0 %v2022
      %v2268 = vpop.f32.mrf.mxu0
      %v2269 = vadd.f32 0.0, %v2268
      %v2270 = vpop.f32.mrf.mxu0
      %v2271 = vadd.f32 0.0, %v2270
      %2272 = vmatmul.bf16.gmra.mxu0 %v2023
      %v2273 = vpop.f32.mrf.mxu0
      %v2274 = vadd.f32 0.0, %v2273
      %v2275 = vpop.f32.mrf.mxu0
      %v2276 = vadd.f32 0.0, %v2275
      %2277 = vmatmul.bf16.gmra.mxu0 %v2024
      %v2278 = vpop.f32.mrf.mxu0
      %v2279 = vadd.f32 0.0, %v2278
      %v2280 = vpop.f32.mrf.mxu0
      %v2281 = vadd.f32 0.0, %v2280
      %2282 = vmatmul.bf16.gmra.mxu0 %v2025
      %v2283 = vpop.f32.mrf.mxu0
      %v2284 = vadd.f32 0.0, %v2283
      %v2285 = vpop.f32.mrf.mxu0
      %v2286 = vadd.f32 0.0, %v2285
      %2287 = vmatmul.bf16.gmra.mxu0 %v2026
      %v2288 = vpop.f32.mrf.mxu0
      %v2289 = vadd.f32 0.0, %v2288
      %v2290 = vpop.f32.mrf.mxu0
      %v2291 = vadd.f32 0.0, %v2290
      %2292 = vmatmul.bf16.gmra.mxu0 %v2027
      %v2293 = vpop.f32.mrf.mxu0
      %v2294 = vadd.f32 0.0, %v2293
      %v2295 = vpop.f32.mrf.mxu0
      %v2296 = vadd.f32 0.0, %v2295
      %2297 = vmatmul.bf16.gmra.mxu0 %v2028
      %v2298 = vpop.f32.mrf.mxu0
      %v2299 = vadd.f32 0.0, %v2298
      %v2300 = vpop.f32.mrf.mxu0
      %v2301 = vadd.f32 0.0, %v2300
      %2302 = vdwg.mxu0
      %v2303 = vadd.f32 %v1900, %v2135
      %v2304 = vadd.f32 %v1901, %v2224
      %v2305 = vadd.f32 %v1902, %v2137
      %v2306 = vadd.f32 %v1903, %v2226
      %v2307 = vadd.f32 %v1904, %v2140
      %v2308 = vadd.f32 %v1905, %v2229
      %v2309 = vadd.f32 %v1906, %v2142
      %v2310 = vadd.f32 %v1907, %v2231
      %v2311 = vadd.f32 %v1908, %v2145
      %v2312 = vadd.f32 %v1909, %v2234
      %v2313 = vadd.f32 %v1910, %v2147
      %v2314 = vadd.f32 %v1911, %v2236
      %v2315 = vadd.f32 %v1912, %v2150
      %v2316 = vadd.f32 %v1913, %v2239
      %v2317 = vadd.f32 %v1914, %v2152
      %v2318 = vadd.f32 %v1915, %v2241
      %v2319 = vadd.f32 %v1916, %v2155
      %v2320 = vadd.f32 %v1917, %v2244
      %v2321 = vadd.f32 %v1918, %v2157
      %v2322 = vadd.f32 %v1919, %v2246
      %v2323 = vadd.f32 %v1920, %v2160
      %v2324 = vadd.f32 %v1921, %v2249
      %v2325 = vadd.f32 %v1922, %v2162
      %v2326 = vadd.f32 %v1923, %v2251
      %v2327 = vadd.f32 %v1924, %v2165
      %v2328 = vadd.f32 %v1925, %v2254
      %v2329 = vadd.f32 %v1926, %v2167
      %v2330 = vadd.f32 %v1927, %v2256
      %v2331 = vadd.f32 %v1928, %v2170
      %v2332 = vadd.f32 %v1929, %v2259
      %v2333 = vadd.f32 %v1930, %v2172
      %v2334 = vadd.f32 %v1931, %v2261
      %v2335 = vadd.f32 %v1932, %v2175
      %v2336 = vadd.f32 %v1933, %v2264
      %v2337 = vadd.f32 %v1934, %v2177
      %v2338 = vadd.f32 %v1935, %v2266
      %v2339 = vadd.f32 %v1936, %v2180
      %v2340 = vadd.f32 %v1937, %v2269
      %v2341 = vadd.f32 %v1938, %v2182
      %v2342 = vadd.f32 %v1939, %v2271
      %v2343 = vadd.f32 %v1940, %v2185
      %v2344 = vadd.f32 %v1941, %v2274
      %v2345 = vadd.f32 %v1942, %v2187
      %v2346 = vadd.f32 %v1943, %v2276
      %v2347 = vadd.f32 %v1944, %v2190
      %v2348 = vadd.f32 %v1945, %v2279
      %v2349 = vadd.f32 %v1946, %v2192
      %v2350 = vadd.f32 %v1947, %v2281
      %v2351 = vadd.f32 %v1948, %v2195
      %v2352 = vadd.f32 %v1949, %v2284
      %v2353 = vadd.f32 %v1950, %v2197
      %v2354 = vadd.f32 %v1951, %v2286
      %v2355 = vadd.f32 %v1952, %v2200
      %v2356 = vadd.f32 %v1953, %v2289
      %v2357 = vadd.f32 %v1954, %v2202
      %v2358 = vadd.f32 %v1955, %v2291
      %v2359 = vadd.f32 %v1956, %v2205
      %v2360 = vadd.f32 %v1957, %v2294
      %v2361 = vadd.f32 %v1958, %v2207
      %v2362 = vadd.f32 %v1959, %v2296
      %v2363 = vadd.f32 %v1960, %v2210
      %v2364 = vadd.f32 %v1961, %v2299
      %v2365 = vadd.f32 %v1962, %v2212
      %v2366 = vadd.f32 %v1963, %v2301
      %2367 = vst [vmem:[#allocation2] sm:$0xff] %v2303
      %2368 = vst [vmem:[#allocation2 + $0x8] sm:$0xff] %v2304
      %2369 = vst [vmem:[#allocation2 + $0x10] sm:$0xff] %v2305
      %2370 = vst [vmem:[#allocation2 + $0x18] sm:$0xff] %v2306
      %2371 = vst [vmem:[#allocation2 + $0x20] sm:$0xff] %v2307
      %2372 = vst [vmem:[#allocation2 + $0x28] sm:$0xff] %v2308
      %2373 = vst [vmem:[#allocation2 + $0x30] sm:$0xff] %v2309
      %2374 = vst [vmem:[#allocation2 + $0x38] sm:$0xff] %v2310
      %2375 = vst [vmem:[#allocation2 + $0x40] sm:$0xff] %v2311
      %2376 = vst [vmem:[#allocation2 + $0x48] sm:$0xff] %v2312
      %2377 = vst [vmem:[#allocation2 + $0x50] sm:$0xff] %v2313
      %2378 = vst [vmem:[#allocation2 + $0x58] sm:$0xff] %v2314
      %2379 = vst [vmem:[#allocation2 + $0x60] sm:$0xff] %v2315
      %2380 = vst [vmem:[#allocation2 + $0x68] sm:$0xff] %v2316
      %2381 = vst [vmem:[#allocation2 + $0x70] sm:$0xff] %v2317
      %2382 = vst [vmem:[#allocation2 + $0x78] sm:$0xff] %v2318
      %2383 = vst [vmem:[#allocation2 + $0x80] sm:$0xff] %v2319
      %2384 = vst [vmem:[#allocation2 + $0x88] sm:$0xff] %v2320
      %2385 = vst [vmem:[#allocation2 + $0x90] sm:$0xff] %v2321
      %2386 = vst [vmem:[#allocation2 + $0x98] sm:$0xff] %v2322
      %2387 = vst [vmem:[#allocation2 + $0xa0] sm:$0xff] %v2323
      %2388 = vst [vmem:[#allocation2 + $0xa8] sm:$0xff] %v2324
      %2389 = vst [vmem:[#allocation2 + $0xb0] sm:$0xff] %v2325
      %2390 = vst [vmem:[#allocation2 + $0xb8] sm:$0xff] %v2326
      %2391 = vst [vmem:[#allocation2 + $0xc0] sm:$0xff] %v2327
      %2392 = vst [vmem:[#allocation2 + $0xc8] sm:$0xff] %v2328
      %2393 = vst [vmem:[#allocation2 + $0xd0] sm:$0xff] %v2329
      %2394 = vst [vmem:[#allocation2 + $0xd8] sm:$0xff] %v2330
      %2395 = vst [vmem:[#allocation2 + $0xe0] sm:$0xff] %v2331
      %2396 = vst [vmem:[#allocation2 + $0xe8] sm:$0xff] %v2332
      %2397 = vst [vmem:[#allocation2 + $0xf0] sm:$0xff] %v2333
      %2398 = vst [vmem:[#allocation2 + $0xf8] sm:$0xff] %v2334
      %2399 = vst [vmem:[#allocation2 + $0x100] sm:$0xff] %v2335
      %2400 = vst [vmem:[#allocation2 + $0x108] sm:$0xff] %v2336
      %2401 = vst [vmem:[#allocation2 + $0x110] sm:$0xff] %v2337
      %2402 = vst [vmem:[#allocation2 + $0x118] sm:$0xff] %v2338
      %2403 = vst [vmem:[#allocation2 + $0x120] sm:$0xff] %v2339
      %2404 = vst [vmem:[#allocation2 + $0x128] sm:$0xff] %v2340
      %2405 = vst [vmem:[#allocation2 + $0x130] sm:$0xff] %v2341
      %2406 = vst [vmem:[#allocation2 + $0x138] sm:$0xff] %v2342
      %2407 = vst [vmem:[#allocation2 + $0x140] sm:$0xff] %v2343
      %2408 = vst [vmem:[#allocation2 + $0x148] sm:$0xff] %v2344
      %2409 = vst [vmem:[#allocation2 + $0x150] sm:$0xff] %v2345
      %2410 = vst [vmem:[#allocation2 + $0x158] sm:$0xff] %v2346
      %2411 = vst [vmem:[#allocation2 + $0x160] sm:$0xff] %v2347
      %2412 = vst [vmem:[#allocation2 + $0x168] sm:$0xff] %v2348
      %2413 = vst [vmem:[#allocation2 + $0x170] sm:$0xff] %v2349
      %2414 = vst [vmem:[#allocation2 + $0x178] sm:$0xff] %v2350
      %2415 = vst [vmem:[#allocation2 + $0x180] sm:$0xff] %v2351
      %2416 = vst [vmem:[#allocation2 + $0x188] sm:$0xff] %v2352
      %2417 = vst [vmem:[#allocation2 + $0x190] sm:$0xff] %v2353
      %2418 = vst [vmem:[#allocation2 + $0x198] sm:$0xff] %v2354
      %2419 = vst [vmem:[#allocation2 + $0x1a0] sm:$0xff] %v2355
      %2420 = vst [vmem:[#allocation2 + $0x1a8] sm:$0xff] %v2356
      %2421 = vst [vmem:[#allocation2 + $0x1b0] sm:$0xff] %v2357
      %2422 = vst [vmem:[#allocation2 + $0x1b8] sm:$0xff] %v2358
      %2423 = vst [vmem:[#allocation2 + $0x1c0] sm:$0xff] %v2359
      %2424 = vst [vmem:[#allocation2 + $0x1c8] sm:$0xff] %v2360
      %2425 = vst [vmem:[#allocation2 + $0x1d0] sm:$0xff] %v2361
      %2426 = vst [vmem:[#allocation2 + $0x1d8] sm:$0xff] %v2362
      %2427 = vst [vmem:[#allocation2 + $0x1e0] sm:$0xff] %v2363
      %2428 = vst [vmem:[#allocation2 + $0x1e8] sm:$0xff] %v2364
      %2429 = vst [vmem:[#allocation2 + $0x1f0] sm:$0xff] %v2365
      %2430 = vst [vmem:[#allocation2 + $0x1f8] sm:$0xff] %v2366
      %v2431 = vld [vmem:[#allocation2] sm:$0xff]
      %v2432 = vld [vmem:[#allocation2 + $0x8] sm:$0xff]
      %v2433 = vld [vmem:[#allocation2 + $0x10] sm:$0xff]
      %v2434 = vld [vmem:[#allocation2 + $0x18] sm:$0xff]
      %v2435 = vld [vmem:[#allocation2 + $0x20] sm:$0xff]
      %v2436 = vld [vmem:[#allocation2 + $0x28] sm:$0xff]
      %v2437 = vld [vmem:[#allocation2 + $0x30] sm:$0xff]
      %v2438 = vld [vmem:[#allocation2 + $0x38] sm:$0xff]
      %v2439 = vld [vmem:[#allocation2 + $0x40] sm:$0xff]
      %v2440 = vld [vmem:[#allocation2 + $0x48] sm:$0xff]
      %v2441 = vld [vmem:[#allocation2 + $0x50] sm:$0xff]
      %v2442 = vld [vmem:[#allocation2 + $0x58] sm:$0xff]
      %v2443 = vld [vmem:[#allocation2 + $0x60] sm:$0xff]
      %v2444 = vld [vmem:[#allocation2 + $0x68] sm:$0xff]
      %v2445 = vld [vmem:[#allocation2 + $0x70] sm:$0xff]
      %v2446 = vld [vmem:[#allocation2 + $0x78] sm:$0xff]
      %v2447 = vld [vmem:[#allocation2 + $0x80] sm:$0xff]
      %v2448 = vld [vmem:[#allocation2 + $0x88] sm:$0xff]
      %v2449 = vld [vmem:[#allocation2 + $0x90] sm:$0xff]
      %v2450 = vld [vmem:[#allocation2 + $0x98] sm:$0xff]
      %v2451 = vld [vmem:[#allocation2 + $0xa0] sm:$0xff]
      %v2452 = vld [vmem:[#allocation2 + $0xa8] sm:$0xff]
      %v2453 = vld [vmem:[#allocation2 + $0xb0] sm:$0xff]
      %v2454 = vld [vmem:[#allocation2 + $0xb8] sm:$0xff]
      %v2455 = vld [vmem:[#allocation2 + $0xc0] sm:$0xff]
      %v2456 = vld [vmem:[#allocation2 + $0xc8] sm:$0xff]
      %v2457 = vld [vmem:[#allocation2 + $0xd0] sm:$0xff]
      %v2458 = vld [vmem:[#allocation2 + $0xd8] sm:$0xff]
      %v2459 = vld [vmem:[#allocation2 + $0xe0] sm:$0xff]
      %v2460 = vld [vmem:[#allocation2 + $0xe8] sm:$0xff]
      %v2461 = vld [vmem:[#allocation2 + $0xf0] sm:$0xff]
      %v2462 = vld [vmem:[#allocation2 + $0xf8] sm:$0xff]
      %v2463 = vld [vmem:[#allocation2 + $0x100] sm:$0xff]
      %v2464 = vld [vmem:[#allocation2 + $0x108] sm:$0xff]
      %v2465 = vld [vmem:[#allocation2 + $0x110] sm:$0xff]
      %v2466 = vld [vmem:[#allocation2 + $0x118] sm:$0xff]
      %v2467 = vld [vmem:[#allocation2 + $0x120] sm:$0xff]
      %v2468 = vld [vmem:[#allocation2 + $0x128] sm:$0xff]
      %v2469 = vld [vmem:[#allocation2 + $0x130] sm:$0xff]
      %v2470 = vld [vmem:[#allocation2 + $0x138] sm:$0xff]
      %v2471 = vld [vmem:[#allocation2 + $0x140] sm:$0xff]
      %v2472 = vld [vmem:[#allocation2 + $0x148] sm:$0xff]
      %v2473 = vld [vmem:[#allocation2 + $0x150] sm:$0xff]
      %v2474 = vld [vmem:[#allocation2 + $0x158] sm:$0xff]
      %v2475 = vld [vmem:[#allocation2 + $0x160] sm:$0xff]
      %v2476 = vld [vmem:[#allocation2 + $0x168] sm:$0xff]
      %v2477 = vld [vmem:[#allocation2 + $0x170] sm:$0xff]
      %v2478 = vld [vmem:[#allocation2 + $0x178] sm:$0xff]
      %v2479 = vld [vmem:[#allocation2 + $0x180] sm:$0xff]
      %v2480 = vld [vmem:[#allocation2 + $0x188] sm:$0xff]
      %v2481 = vld [vmem:[#allocation2 + $0x190] sm:$0xff]
      %v2482 = vld [vmem:[#allocation2 + $0x198] sm:$0xff]
      %v2483 = vld [vmem:[#allocation2 + $0x1a0] sm:$0xff]
      %v2484 = vld [vmem:[#allocation2 + $0x1a8] sm:$0xff]
      %v2485 = vld [vmem:[#allocation2 + $0x1b0] sm:$0xff]
      %v2486 = vld [vmem:[#allocation2 + $0x1b8] sm:$0xff]
      %v2487 = vld [vmem:[#allocation2 + $0x1c0] sm:$0xff]
      %v2488 = vld [vmem:[#allocation2 + $0x1c8] sm:$0xff]
      %v2489 = vld [vmem:[#allocation2 + $0x1d0] sm:$0xff]
      %v2490 = vld [vmem:[#allocation2 + $0x1d8] sm:$0xff]
      %v2491 = vld [vmem:[#allocation2 + $0x1e0] sm:$0xff]
      %v2492 = vld [vmem:[#allocation2 + $0x1e8] sm:$0xff]
      %v2493 = vld [vmem:[#allocation2 + $0x1f0] sm:$0xff]
      %v2494 = vld [vmem:[#allocation2 + $0x1f8] sm:$0xff]
      %s2495 = scalar_lea.vmem %s1, 384
      %v2496 = vld [vmem:[%s2495] sm:$0xff]
      %v2497 = vld [vmem:[%s2495 + $0x8] sm:$0xff]
      %v2498 = vld [vmem:[%s2495 + $0x10] sm:$0xff]
      %v2499 = vld [vmem:[%s2495 + $0x18] sm:$0xff]
      %v2500 = vld [vmem:[%s2495 + $0x20] sm:$0xff]
      %v2501 = vld [vmem:[%s2495 + $0x28] sm:$0xff]
      %v2502 = vld [vmem:[%s2495 + $0x30] sm:$0xff]
      %v2503 = vld [vmem:[%s2495 + $0x38] sm:$0xff]
      %v2504 = vld [vmem:[%s2495 + $0x40] sm:$0xff]
      %v2505 = vld [vmem:[%s2495 + $0x48] sm:$0xff]
      %v2506 = vld [vmem:[%s2495 + $0x50] sm:$0xff]
      %v2507 = vld [vmem:[%s2495 + $0x58] sm:$0xff]
      %v2508 = vld [vmem:[%s2495 + $0x60] sm:$0xff]
      %v2509 = vld [vmem:[%s2495 + $0x68] sm:$0xff]
      %v2510 = vld [vmem:[%s2495 + $0x70] sm:$0xff]
      %v2511 = vld [vmem:[%s2495 + $0x78] sm:$0xff]
      %v2514 = vunpack.c.l.b16 %v283
      %v2515 = vunpack.c.l.b16 %v284
      %v2516 = vpack.c.b16 %v2515, %v2514
      %v2534 = vunpack.c.l.b16 %v2496
      %v2535 = vunpack.c.h.b16 %v2496
      %v2536 = vunpack.c.l.b16 %v2497
      %v2537 = vunpack.c.h.b16 %v2497
      %v2538 = vunpack.c.l.b16 %v2498
      %v2539 = vunpack.c.h.b16 %v2498
      %v2540 = vunpack.c.l.b16 %v2499
      %v2541 = vunpack.c.h.b16 %v2499
      %v2542 = vunpack.c.l.b16 %v2500
      %v2543 = vunpack.c.h.b16 %v2500
      %v2544 = vunpack.c.l.b16 %v2501
      %v2545 = vunpack.c.h.b16 %v2501
      %v2546 = vunpack.c.l.b16 %v2502
      %v2547 = vunpack.c.h.b16 %v2502
      %v2548 = vunpack.c.l.b16 %v2503
      %v2549 = vunpack.c.h.b16 %v2503
      %v2550 = vunpack.c.l.b16 %v2504
      %v2551 = vunpack.c.h.b16 %v2504
      %v2552 = vunpack.c.l.b16 %v2505
      %v2553 = vunpack.c.h.b16 %v2505
      %v2554 = vunpack.c.l.b16 %v2506
      %v2555 = vunpack.c.h.b16 %v2506
      %v2556 = vunpack.c.l.b16 %v2507
      %v2557 = vunpack.c.h.b16 %v2507
      %v2558 = vunpack.c.l.b16 %v2508
      %v2559 = vunpack.c.h.b16 %v2508
      %v2560 = vunpack.c.l.b16 %v2509
      %v2561 = vunpack.c.h.b16 %v2509
      %v2562 = vunpack.c.l.b16 %v2510
      %v2563 = vunpack.c.h.b16 %v2510
      %v2564 = vunpack.c.l.b16 %v2511
      %v2565 = vunpack.c.h.b16 %v2511
      %v2566 = vpack.c.b16 %v2536, %v2534
      %v2567 = vpack.c.b16 %v2537, %v2535
      %v2568 = vpack.c.b16 %v2540, %v2538
      %v2569 = vpack.c.b16 %v2541, %v2539
      %v2570 = vpack.c.b16 %v2544, %v2542
      %v2571 = vpack.c.b16 %v2545, %v2543
      %v2572 = vpack.c.b16 %v2548, %v2546
      %v2573 = vpack.c.b16 %v2549, %v2547
      %v2574 = vpack.c.b16 %v2552, %v2550
      %v2575 = vpack.c.b16 %v2553, %v2551
      %v2576 = vpack.c.b16 %v2556, %v2554
      %v2577 = vpack.c.b16 %v2557, %v2555
      %v2578 = vpack.c.b16 %v2560, %v2558
      %v2579 = vpack.c.b16 %v2561, %v2559
      %v2580 = vpack.c.b16 %v2564, %v2562
      %v2581 = vpack.c.b16 %v2565, %v2563
      %2598 = vmatpush.bf16.msra.mxu0 %v2580
      %2599 = vmatpush.bf16.msra.mxu0 %v2578
      %2600 = vmatpush.bf16.msra.mxu0 %v2576
      %2601 = vmatpush.bf16.msra.mxu0 %v2574
      %2602 = vmatpush.bf16.msra.mxu0 %v2572
      %2603 = vmatpush.bf16.msra.mxu0 %v2570
      %2604 = vmatpush.bf16.msra.mxu0 %v2568
      %2605 = vmatpush.bf16.msra.mxu0 %v2566
      %2606 = vmatmul.bf16.gmra.mxu0 %v434
      %v2607 = vpop.f32.mrf.mxu0
      %v2608 = vadd.f32 0.0, %v2607
      %v2609 = vpop.f32.mrf.mxu0
      %v2610 = vadd.f32 0.0, %v2609
      %2611 = vmatmul.bf16.gmra.mxu0 %v435
      %v2612 = vpop.f32.mrf.mxu0
      %v2613 = vadd.f32 0.0, %v2612
      %v2614 = vpop.f32.mrf.mxu0
      %v2615 = vadd.f32 0.0, %v2614
      %2616 = vmatmul.bf16.gmra.mxu0 %v436
      %v2617 = vpop.f32.mrf.mxu0
      %v2618 = vadd.f32 0.0, %v2617
      %v2619 = vpop.f32.mrf.mxu0
      %v2620 = vadd.f32 0.0, %v2619
      %2621 = vmatmul.bf16.gmra.mxu0 %v437
      %v2622 = vpop.f32.mrf.mxu0
      %v2623 = vadd.f32 0.0, %v2622
      %v2624 = vpop.f32.mrf.mxu0
      %v2625 = vadd.f32 0.0, %v2624
      %2626 = vmatmul.bf16.gmra.mxu0 %v438
      %v2627 = vpop.f32.mrf.mxu0
      %v2628 = vadd.f32 0.0, %v2627
      %v2629 = vpop.f32.mrf.mxu0
      %v2630 = vadd.f32 0.0, %v2629
      %2631 = vmatmul.bf16.gmra.mxu0 %v439
      %v2632 = vpop.f32.mrf.mxu0
      %v2633 = vadd.f32 0.0, %v2632
      %v2634 = vpop.f32.mrf.mxu0
      %v2635 = vadd.f32 0.0, %v2634
      %2636 = vmatmul.bf16.gmra.mxu0 %v440
      %v2637 = vpop.f32.mrf.mxu0
      %v2638 = vadd.f32 0.0, %v2637
      %v2639 = vpop.f32.mrf.mxu0
      %v2640 = vadd.f32 0.0, %v2639
      %2641 = vmatmul.bf16.gmra.mxu0 %v441
      %v2642 = vpop.f32.mrf.mxu0
      %v2643 = vadd.f32 0.0, %v2642
      %v2644 = vpop.f32.mrf.mxu0
      %v2645 = vadd.f32 0.0, %v2644
      %2646 = vmatmul.bf16.gmra.mxu0 %v442
      %v2647 = vpop.f32.mrf.mxu0
      %v2648 = vadd.f32 0.0, %v2647
      %v2649 = vpop.f32.mrf.mxu0
      %v2650 = vadd.f32 0.0, %v2649
      %2651 = vmatmul.bf16.gmra.mxu0 %v443
      %v2652 = vpop.f32.mrf.mxu0
      %v2653 = vadd.f32 0.0, %v2652
      %v2654 = vpop.f32.mrf.mxu0
      %v2655 = vadd.f32 0.0, %v2654
      %2656 = vmatmul.bf16.gmra.mxu0 %v444
      %v2657 = vpop.f32.mrf.mxu0
      %v2658 = vadd.f32 0.0, %v2657
      %v2659 = vpop.f32.mrf.mxu0
      %v2660 = vadd.f32 0.0, %v2659
      %2661 = vmatmul.bf16.gmra.mxu0 %v445
      %v2662 = vpop.f32.mrf.mxu0
      %v2663 = vadd.f32 0.0, %v2662
      %v2664 = vpop.f32.mrf.mxu0
      %v2665 = vadd.f32 0.0, %v2664
      %2666 = vmatmul.bf16.gmra.mxu0 %v446
      %v2667 = vpop.f32.mrf.mxu0
      %v2668 = vadd.f32 0.0, %v2667
      %v2669 = vpop.f32.mrf.mxu0
      %v2670 = vadd.f32 0.0, %v2669
      %2671 = vmatmul.bf16.gmra.mxu0 %v447
      %v2672 = vpop.f32.mrf.mxu0
      %v2673 = vadd.f32 0.0, %v2672
      %v2674 = vpop.f32.mrf.mxu0
      %v2675 = vadd.f32 0.0, %v2674
      %2676 = vmatmul.bf16.gmra.mxu0 %v448
      %v2677 = vpop.f32.mrf.mxu0
      %v2678 = vadd.f32 0.0, %v2677
      %v2679 = vpop.f32.mrf.mxu0
      %v2680 = vadd.f32 0.0, %v2679
      %2681 = vmatmul.bf16.gmra.mxu0 %v2516
      %v2682 = vpop.f32.mrf.mxu0
      %v2683 = vadd.f32 0.0, %v2682
      %v2684 = vpop.f32.mrf.mxu0
      %v2685 = vadd.f32 0.0, %v2684
      %2686 = vdwg.mxu0
      %2687 = vmatpush.bf16.msra.mxu0 %v2581
      %2688 = vmatpush.bf16.msra.mxu0 %v2579
      %2689 = vmatpush.bf16.msra.mxu0 %v2577
      %2690 = vmatpush.bf16.msra.mxu0 %v2575
      %2691 = vmatpush.bf16.msra.mxu0 %v2573
      %2692 = vmatpush.bf16.msra.mxu0 %v2571
      %2693 = vmatpush.bf16.msra.mxu0 %v2569
      %2694 = vmatpush.bf16.msra.mxu0 %v2567
      %2695 = vmatmul.bf16.gmra.mxu0 %v434
      %v2696 = vpop.f32.mrf.mxu0
      %v2697 = vadd.f32 0.0, %v2696
      %v2698 = vpop.f32.mrf.mxu0
      %v2699 = vadd.f32 0.0, %v2698
      %2700 = vmatmul.bf16.gmra.mxu0 %v435
      %v2701 = vpop.f32.mrf.mxu0
      %v2702 = vadd.f32 0.0, %v2701
      %v2703 = vpop.f32.mrf.mxu0
      %v2704 = vadd.f32 0.0, %v2703
      %2705 = vmatmul.bf16.gmra.mxu0 %v436
      %v2706 = vpop.f32.mrf.mxu0
      %v2707 = vadd.f32 0.0, %v2706
      %v2708 = vpop.f32.mrf.mxu0
      %v2709 = vadd.f32 0.0, %v2708
      %2710 = vmatmul.bf16.gmra.mxu0 %v437
      %v2711 = vpop.f32.mrf.mxu0
      %v2712 = vadd.f32 0.0, %v2711
      %v2713 = vpop.f32.mrf.mxu0
      %v2714 = vadd.f32 0.0, %v2713
      %2715 = vmatmul.bf16.gmra.mxu0 %v438
      %v2716 = vpop.f32.mrf.mxu0
      %v2717 = vadd.f32 0.0, %v2716
      %v2718 = vpop.f32.mrf.mxu0
      %v2719 = vadd.f32 0.0, %v2718
      %2720 = vmatmul.bf16.gmra.mxu0 %v439
      %v2721 = vpop.f32.mrf.mxu0
      %v2722 = vadd.f32 0.0, %v2721
      %v2723 = vpop.f32.mrf.mxu0
      %v2724 = vadd.f32 0.0, %v2723
      %2725 = vmatmul.bf16.gmra.mxu0 %v440
      %v2726 = vpop.f32.mrf.mxu0
      %v2727 = vadd.f32 0.0, %v2726
      %v2728 = vpop.f32.mrf.mxu0
      %v2729 = vadd.f32 0.0, %v2728
      %2730 = vmatmul.bf16.gmra.mxu0 %v441
      %v2731 = vpop.f32.mrf.mxu0
      %v2732 = vadd.f32 0.0, %v2731
      %v2733 = vpop.f32.mrf.mxu0
      %v2734 = vadd.f32 0.0, %v2733
      %2735 = vmatmul.bf16.gmra.mxu0 %v442
      %v2736 = vpop.f32.mrf.mxu0
      %v2737 = vadd.f32 0.0, %v2736
      %v2738 = vpop.f32.mrf.mxu0
      %v2739 = vadd.f32 0.0, %v2738
      %2740 = vmatmul.bf16.gmra.mxu0 %v443
      %v2741 = vpop.f32.mrf.mxu0
      %v2742 = vadd.f32 0.0, %v2741
      %v2743 = vpop.f32.mrf.mxu0
      %v2744 = vadd.f32 0.0, %v2743
      %2745 = vmatmul.bf16.gmra.mxu0 %v444
      %v2746 = vpop.f32.mrf.mxu0
      %v2747 = vadd.f32 0.0, %v2746
      %v2748 = vpop.f32.mrf.mxu0
      %v2749 = vadd.f32 0.0, %v2748
      %2750 = vmatmul.bf16.gmra.mxu0 %v445
      %v2751 = vpop.f32.mrf.mxu0
      %v2752 = vadd.f32 0.0, %v2751
      %v2753 = vpop.f32.mrf.mxu0
      %v2754 = vadd.f32 0.0, %v2753
      %2755 = vmatmul.bf16.gmra.mxu0 %v446
      %v2756 = vpop.f32.mrf.mxu0
      %v2757 = vadd.f32 0.0, %v2756
      %v2758 = vpop.f32.mrf.mxu0
      %v2759 = vadd.f32 0.0, %v2758
      %2760 = vmatmul.bf16.gmra.mxu0 %v447
      %v2761 = vpop.f32.mrf.mxu0
      %v2762 = vadd.f32 0.0, %v2761
      %v2763 = vpop.f32.mrf.mxu0
      %v2764 = vadd.f32 0.0, %v2763
      %2765 = vmatmul.bf16.gmra.mxu0 %v448
      %v2766 = vpop.f32.mrf.mxu0
      %v2767 = vadd.f32 0.0, %v2766
      %v2768 = vpop.f32.mrf.mxu0
      %v2769 = vadd.f32 0.0, %v2768
      %2770 = vmatmul.bf16.gmra.mxu0 %v2516
      %v2771 = vpop.f32.mrf.mxu0
      %v2772 = vadd.f32 0.0, %v2771
      %v2773 = vpop.f32.mrf.mxu0
      %v2774 = vadd.f32 0.0, %v2773
      %2775 = vdwg.mxu0
      %v2776 = vadd.f32 %v2431, %v2608
      %v2777 = vadd.f32 %v2432, %v2697
      %v2778 = vadd.f32 %v2433, %v2610
      %v2779 = vadd.f32 %v2434, %v2699
      %v2780 = vadd.f32 %v2435, %v2613
      %v2781 = vadd.f32 %v2436, %v2702
      %v2782 = vadd.f32 %v2437, %v2615
      %v2783 = vadd.f32 %v2438, %v2704
      %v2784 = vadd.f32 %v2439, %v2618
      %v2785 = vadd.f32 %v2440, %v2707
      %v2786 = vadd.f32 %v2441, %v2620
      %v2787 = vadd.f32 %v2442, %v2709
      %v2788 = vadd.f32 %v2443, %v2623
      %v2789 = vadd.f32 %v2444, %v2712
      %v2790 = vadd.f32 %v2445, %v2625
      %v2791 = vadd.f32 %v2446, %v2714
      %v2792 = vadd.f32 %v2447, %v2628
      %v2793 = vadd.f32 %v2448, %v2717
      %v2794 = vadd.f32 %v2449, %v2630
      %v2795 = vadd.f32 %v2450, %v2719
      %v2796 = vadd.f32 %v2451, %v2633
      %v2797 = vadd.f32 %v2452, %v2722
      %v2798 = vadd.f32 %v2453, %v2635
      %v2799 = vadd.f32 %v2454, %v2724
      %v2800 = vadd.f32 %v2455, %v2638
      %v2801 = vadd.f32 %v2456, %v2727
      %v2802 = vadd.f32 %v2457, %v2640
      %v2803 = vadd.f32 %v2458, %v2729
      %v2804 = vadd.f32 %v2459, %v2643
      %v2805 = vadd.f32 %v2460, %v2732
      %v2806 = vadd.f32 %v2461, %v2645
      %v2807 = vadd.f32 %v2462, %v2734
      %v2808 = vadd.f32 %v2463, %v2648
      %v2809 = vadd.f32 %v2464, %v2737
      %v2810 = vadd.f32 %v2465, %v2650
      %v2811 = vadd.f32 %v2466, %v2739
      %v2812 = vadd.f32 %v2467, %v2653
      %v2813 = vadd.f32 %v2468, %v2742
      %v2814 = vadd.f32 %v2469, %v2655
      %v2815 = vadd.f32 %v2470, %v2744
      %v2816 = vadd.f32 %v2471, %v2658
      %v2817 = vadd.f32 %v2472, %v2747
      %v2818 = vadd.f32 %v2473, %v2660
      %v2819 = vadd.f32 %v2474, %v2749
      %v2820 = vadd.f32 %v2475, %v2663
      %v2821 = vadd.f32 %v2476, %v2752
      %v2822 = vadd.f32 %v2477, %v2665
      %v2823 = vadd.f32 %v2478, %v2754
      %v2824 = vadd.f32 %v2479, %v2668
      %v2825 = vadd.f32 %v2480, %v2757
      %v2826 = vadd.f32 %v2481, %v2670
      %v2827 = vadd.f32 %v2482, %v2759
      %v2828 = vadd.f32 %v2483, %v2673
      %v2829 = vadd.f32 %v2484, %v2762
      %v2830 = vadd.f32 %v2485, %v2675
      %v2831 = vadd.f32 %v2486, %v2764
      %v2832 = vadd.f32 %v2487, %v2678
      %v2833 = vadd.f32 %v2488, %v2767
      %v2834 = vadd.f32 %v2489, %v2680
      %v2835 = vadd.f32 %v2490, %v2769
      %v2836 = vadd.f32 %v2491, %v2683
      %v2837 = vadd.f32 %v2492, %v2772
      %v2838 = vadd.f32 %v2493, %v2685
      %v2839 = vadd.f32 %v2494, %v2774
      %2840 = vst [vmem:[#allocation2] sm:$0xff] %v2776
      %2841 = vst [vmem:[#allocation2 + $0x8] sm:$0xff] %v2777
      %2842 = vst [vmem:[#allocation2 + $0x10] sm:$0xff] %v2778
      %2843 = vst [vmem:[#allocation2 + $0x18] sm:$0xff] %v2779
      %2844 = vst [vmem:[#allocation2 + $0x20] sm:$0xff] %v2780
      %2845 = vst [vmem:[#allocation2 + $0x28] sm:$0xff] %v2781
      %2846 = vst [vmem:[#allocation2 + $0x30] sm:$0xff] %v2782
      %2847 = vst [vmem:[#allocation2 + $0x38] sm:$0xff] %v2783
      %2848 = vst [vmem:[#allocation2 + $0x40] sm:$0xff] %v2784
      %2849 = vst [vmem:[#allocation2 + $0x48] sm:$0xff] %v2785
      %2850 = vst [vmem:[#allocation2 + $0x50] sm:$0xff] %v2786
      %2851 = vst [vmem:[#allocation2 + $0x58] sm:$0xff] %v2787
      %2852 = vst [vmem:[#allocation2 + $0x60] sm:$0xff] %v2788
      %2853 = vst [vmem:[#allocation2 + $0x68] sm:$0xff] %v2789
      %2854 = vst [vmem:[#allocation2 + $0x70] sm:$0xff] %v2790
      %2855 = vst [vmem:[#allocation2 + $0x78] sm:$0xff] %v2791
      %2856 = vst [vmem:[#allocation2 + $0x80] sm:$0xff] %v2792
      %2857 = vst [vmem:[#allocation2 + $0x88] sm:$0xff] %v2793
      %2858 = vst [vmem:[#allocation2 + $0x90] sm:$0xff] %v2794
      %2859 = vst [vmem:[#allocation2 + $0x98] sm:$0xff] %v2795
      %2860 = vst [vmem:[#allocation2 + $0xa0] sm:$0xff] %v2796
      %2861 = vst [vmem:[#allocation2 + $0xa8] sm:$0xff] %v2797
      %2862 = vst [vmem:[#allocation2 + $0xb0] sm:$0xff] %v2798
      %2863 = vst [vmem:[#allocation2 + $0xb8] sm:$0xff] %v2799
      %2864 = vst [vmem:[#allocation2 + $0xc0] sm:$0xff] %v2800
      %2865 = vst [vmem:[#allocation2 + $0xc8] sm:$0xff] %v2801
      %2866 = vst [vmem:[#allocation2 + $0xd0] sm:$0xff] %v2802
      %2867 = vst [vmem:[#allocation2 + $0xd8] sm:$0xff] %v2803
      %2868 = vst [vmem:[#allocation2 + $0xe0] sm:$0xff] %v2804
      %2869 = vst [vmem:[#allocation2 + $0xe8] sm:$0xff] %v2805
      %2870 = vst [vmem:[#allocation2 + $0xf0] sm:$0xff] %v2806
      %2871 = vst [vmem:[#allocation2 + $0xf8] sm:$0xff] %v2807
      %2872 = vst [vmem:[#allocation2 + $0x100] sm:$0xff] %v2808
      %2873 = vst [vmem:[#allocation2 + $0x108] sm:$0xff] %v2809
      %2874 = vst [vmem:[#allocation2 + $0x110] sm:$0xff] %v2810
      %2875 = vst [vmem:[#allocation2 + $0x118] sm:$0xff] %v2811
      %2876 = vst [vmem:[#allocation2 + $0x120] sm:$0xff] %v2812
      %2877 = vst [vmem:[#allocation2 + $0x128] sm:$0xff] %v2813
      %2878 = vst [vmem:[#allocation2 + $0x130] sm:$0xff] %v2814
      %2879 = vst [vmem:[#allocation2 + $0x138] sm:$0xff] %v2815
      %2880 = vst [vmem:[#allocation2 + $0x140] sm:$0xff] %v2816
      %2881 = vst [vmem:[#allocation2 + $0x148] sm:$0xff] %v2817
      %2882 = vst [vmem:[#allocation2 + $0x150] sm:$0xff] %v2818
      %2883 = vst [vmem:[#allocation2 + $0x158] sm:$0xff] %v2819
      %2884 = vst [vmem:[#allocation2 + $0x160] sm:$0xff] %v2820
      %2885 = vst [vmem:[#allocation2 + $0x168] sm:$0xff] %v2821
      %2886 = vst [vmem:[#allocation2 + $0x170] sm:$0xff] %v2822
      %2887 = vst [vmem:[#allocation2 + $0x178] sm:$0xff] %v2823
      %2888 = vst [vmem:[#allocation2 + $0x180] sm:$0xff] %v2824
      %2889 = vst [vmem:[#allocation2 + $0x188] sm:$0xff] %v2825
      %2890 = vst [vmem:[#allocation2 + $0x190] sm:$0xff] %v2826
      %2891 = vst [vmem:[#allocation2 + $0x198] sm:$0xff] %v2827
      %2892 = vst [vmem:[#allocation2 + $0x1a0] sm:$0xff] %v2828
      %2893 = vst [vmem:[#allocation2 + $0x1a8] sm:$0xff] %v2829
      %2894 = vst [vmem:[#allocation2 + $0x1b0] sm:$0xff] %v2830
      %2895 = vst [vmem:[#allocation2 + $0x1b8] sm:$0xff] %v2831
      %2896 = vst [vmem:[#allocation2 + $0x1c0] sm:$0xff] %v2832
      %2897 = vst [vmem:[#allocation2 + $0x1c8] sm:$0xff] %v2833
      %2898 = vst [vmem:[#allocation2 + $0x1d0] sm:$0xff] %v2834
      %2899 = vst [vmem:[#allocation2 + $0x1d8] sm:$0xff] %v2835
      %2900 = vst [vmem:[#allocation2 + $0x1e0] sm:$0xff] %v2836
      %2901 = vst [vmem:[#allocation2 + $0x1e8] sm:$0xff] %v2837
      %2902 = vst [vmem:[#allocation2 + $0x1f0] sm:$0xff] %v2838
      %2903 = vst [vmem:[#allocation2 + $0x1f8] sm:$0xff] %v2839
      %v2905 = vshrl.u32 %v283, 16
      %v2907 = vrot.slane %v2905, 4
      %v2908 = vshll.u32 %v283, 16
      %v2910 = vrot.slane %v2908, 5
      %v2911 = vor.u32 %v2907, %v2910
      %v2912 = vrot.slane %v2911, 4
      %v2914 = vshll.u32 %v284, 16
      %v2916 = vrot.slane %v2914, 5
      %v2917 = vsel %vm853, %v2912, %v2916
      %v2918 = vshrl.u32 %v284, 16
      %v2920 = vrot.slane %v2918, 4
      %v2921 = vor.u32 %v2920, %v2916
      %v2922 = vrot.slane %v2921, 4
      %v2924 = vshll.u32 %v285, 16
      %v2926 = vrot.slane %v2924, 5
      %v2927 = vsel %vm853, %v2922, %v2926
      %v2928 = vld [vmem:[#allocation2] sm:$0xff]
      %v2929 = vld [vmem:[#allocation2 + $0x8] sm:$0xff]
      %v2930 = vld [vmem:[#allocation2 + $0x10] sm:$0xff]
      %v2931 = vld [vmem:[#allocation2 + $0x18] sm:$0xff]
      %v2932 = vld [vmem:[#allocation2 + $0x20] sm:$0xff]
      %v2933 = vld [vmem:[#allocation2 + $0x28] sm:$0xff]
      %v2934 = vld [vmem:[#allocation2 + $0x30] sm:$0xff]
      %v2935 = vld [vmem:[#allocation2 + $0x38] sm:$0xff]
      %v2936 = vld [vmem:[#allocation2 + $0x40] sm:$0xff]
      %v2937 = vld [vmem:[#allocation2 + $0x48] sm:$0xff]
      %v2938 = vld [vmem:[#allocation2 + $0x50] sm:$0xff]
      %v2939 = vld [vmem:[#allocation2 + $0x58] sm:$0xff]
      %v2940 = vld [vmem:[#allocation2 + $0x60] sm:$0xff]
      %v2941 = vld [vmem:[#allocation2 + $0x68] sm:$0xff]
      %v2942 = vld [vmem:[#allocation2 + $0x70] sm:$0xff]
      %v2943 = vld [vmem:[#allocation2 + $0x78] sm:$0xff]
      %v2944 = vld [vmem:[#allocation2 + $0x80] sm:$0xff]
      %v2945 = vld [vmem:[#allocation2 + $0x88] sm:$0xff]
      %v2946 = vld [vmem:[#allocation2 + $0x90] sm:$0xff]
      %v2947 = vld [vmem:[#allocation2 + $0x98] sm:$0xff]
      %v2948 = vld [vmem:[#allocation2 + $0xa0] sm:$0xff]
      %v2949 = vld [vmem:[#allocation2 + $0xa8] sm:$0xff]
      %v2950 = vld [vmem:[#allocation2 + $0xb0] sm:$0xff]
      %v2951 = vld [vmem:[#allocation2 + $0xb8] sm:$0xff]
      %v2952 = vld [vmem:[#allocation2 + $0xc0] sm:$0xff]
      %v2953 = vld [vmem:[#allocation2 + $0xc8] sm:$0xff]
      %v2954 = vld [vmem:[#allocation2 + $0xd0] sm:$0xff]
      %v2955 = vld [vmem:[#allocation2 + $0xd8] sm:$0xff]
      %v2956 = vld [vmem:[#allocation2 + $0xe0] sm:$0xff]
      %v2957 = vld [vmem:[#allocation2 + $0xe8] sm:$0xff]
      %v2958 = vld [vmem:[#allocation2 + $0xf0] sm:$0xff]
      %v2959 = vld [vmem:[#allocation2 + $0xf8] sm:$0xff]
      %v2960 = vld [vmem:[#allocation2 + $0x100] sm:$0xff]
      %v2961 = vld [vmem:[#allocation2 + $0x108] sm:$0xff]
      %v2962 = vld [vmem:[#allocation2 + $0x110] sm:$0xff]
      %v2963 = vld [vmem:[#allocation2 + $0x118] sm:$0xff]
      %v2964 = vld [vmem:[#allocation2 + $0x120] sm:$0xff]
      %v2965 = vld [vmem:[#allocation2 + $0x128] sm:$0xff]
      %v2966 = vld [vmem:[#allocation2 + $0x130] sm:$0xff]
      %v2967 = vld [vmem:[#allocation2 + $0x138] sm:$0xff]
      %v2968 = vld [vmem:[#allocation2 + $0x140] sm:$0xff]
      %v2969 = vld [vmem:[#allocation2 + $0x148] sm:$0xff]
      %v2970 = vld [vmem:[#allocation2 + $0x150] sm:$0xff]
      %v2971 = vld [vmem:[#allocation2 + $0x158] sm:$0xff]
      %v2972 = vld [vmem:[#allocation2 + $0x160] sm:$0xff]
      %v2973 = vld [vmem:[#allocation2 + $0x168] sm:$0xff]
      %v2974 = vld [vmem:[#allocation2 + $0x170] sm:$0xff]
      %v2975 = vld [vmem:[#allocation2 + $0x178] sm:$0xff]
      %v2976 = vld [vmem:[#allocation2 + $0x180] sm:$0xff]
      %v2977 = vld [vmem:[#allocation2 + $0x188] sm:$0xff]
      %v2978 = vld [vmem:[#allocation2 + $0x190] sm:$0xff]
      %v2979 = vld [vmem:[#allocation2 + $0x198] sm:$0xff]
      %v2980 = vld [vmem:[#allocation2 + $0x1a0] sm:$0xff]
      %v2981 = vld [vmem:[#allocation2 + $0x1a8] sm:$0xff]
      %v2982 = vld [vmem:[#allocation2 + $0x1b0] sm:$0xff]
      %v2983 = vld [vmem:[#allocation2 + $0x1b8] sm:$0xff]
      %v2984 = vld [vmem:[#allocation2 + $0x1c0] sm:$0xff]
      %v2985 = vld [vmem:[#allocation2 + $0x1c8] sm:$0xff]
      %v2986 = vld [vmem:[#allocation2 + $0x1d0] sm:$0xff]
      %v2987 = vld [vmem:[#allocation2 + $0x1d8] sm:$0xff]
      %v2988 = vld [vmem:[#allocation2 + $0x1e0] sm:$0xff]
      %v2989 = vld [vmem:[#allocation2 + $0x1e8] sm:$0xff]
      %v2990 = vld [vmem:[#allocation2 + $0x1f0] sm:$0xff]
      %v2991 = vld [vmem:[#allocation2 + $0x1f8] sm:$0xff]
      %s2992 = scalar_lea.vmem %s1, 512
      %v2993 = vld [vmem:[%s2992] sm:$0xff]
      %v2994 = vld [vmem:[%s2992 + $0x8] sm:$0xff]
      %v2995 = vld [vmem:[%s2992 + $0x10] sm:$0xff]
      %v2996 = vld [vmem:[%s2992 + $0x18] sm:$0xff]
      %v2997 = vld [vmem:[%s2992 + $0x20] sm:$0xff]
      %v2998 = vld [vmem:[%s2992 + $0x28] sm:$0xff]
      %v2999 = vld [vmem:[%s2992 + $0x30] sm:$0xff]
      %v3000 = vld [vmem:[%s2992 + $0x38] sm:$0xff]
      %v3001 = vld [vmem:[%s2992 + $0x40] sm:$0xff]
      %v3002 = vld [vmem:[%s2992 + $0x48] sm:$0xff]
      %v3003 = vld [vmem:[%s2992 + $0x50] sm:$0xff]
      %v3004 = vld [vmem:[%s2992 + $0x58] sm:$0xff]
      %v3005 = vld [vmem:[%s2992 + $0x60] sm:$0xff]
      %v3006 = vld [vmem:[%s2992 + $0x68] sm:$0xff]
      %v3007 = vld [vmem:[%s2992 + $0x70] sm:$0xff]
      %v3008 = vld [vmem:[%s2992 + $0x78] sm:$0xff]
      %v3009 = vunpack.c.l.b16 %v2917
      %v3010 = vunpack.c.l.b16 %v2927
      %v3011 = vpack.c.b16 %v3010, %v3009
      %v3029 = vunpack.c.l.b16 %v2993
      %v3030 = vunpack.c.h.b16 %v2993
      %v3031 = vunpack.c.l.b16 %v2994
      %v3032 = vunpack.c.h.b16 %v2994
      %v3033 = vunpack.c.l.b16 %v2995
      %v3034 = vunpack.c.h.b16 %v2995
      %v3035 = vunpack.c.l.b16 %v2996
      %v3036 = vunpack.c.h.b16 %v2996
      %v3037 = vunpack.c.l.b16 %v2997
      %v3038 = vunpack.c.h.b16 %v2997
      %v3039 = vunpack.c.l.b16 %v2998
      %v3040 = vunpack.c.h.b16 %v2998
      %v3041 = vunpack.c.l.b16 %v2999
      %v3042 = vunpack.c.h.b16 %v2999
      %v3043 = vunpack.c.l.b16 %v3000
      %v3044 = vunpack.c.h.b16 %v3000
      %v3045 = vunpack.c.l.b16 %v3001
      %v3046 = vunpack.c.h.b16 %v3001
      %v3047 = vunpack.c.l.b16 %v3002
      %v3048 = vunpack.c.h.b16 %v3002
      %v3049 = vunpack.c.l.b16 %v3003
      %v3050 = vunpack.c.h.b16 %v3003
      %v3051 = vunpack.c.l.b16 %v3004
      %v3052 = vunpack.c.h.b16 %v3004
      %v3053 = vunpack.c.l.b16 %v3005
      %v3054 = vunpack.c.h.b16 %v3005
      %v3055 = vunpack.c.l.b16 %v3006
      %v3056 = vunpack.c.h.b16 %v3006
      %v3057 = vunpack.c.l.b16 %v3007
      %v3058 = vunpack.c.h.b16 %v3007
      %v3059 = vunpack.c.l.b16 %v3008
      %v3060 = vunpack.c.h.b16 %v3008
      %v3061 = vpack.c.b16 %v3031, %v3029
      %v3062 = vpack.c.b16 %v3032, %v3030
      %v3063 = vpack.c.b16 %v3035, %v3033
      %v3064 = vpack.c.b16 %v3036, %v3034
      %v3065 = vpack.c.b16 %v3039, %v3037
      %v3066 = vpack.c.b16 %v3040, %v3038
      %v3067 = vpack.c.b16 %v3043, %v3041
      %v3068 = vpack.c.b16 %v3044, %v3042
      %v3069 = vpack.c.b16 %v3047, %v3045
      %v3070 = vpack.c.b16 %v3048, %v3046
      %v3071 = vpack.c.b16 %v3051, %v3049
      %v3072 = vpack.c.b16 %v3052, %v3050
      %v3073 = vpack.c.b16 %v3055, %v3053
      %v3074 = vpack.c.b16 %v3056, %v3054
      %v3075 = vpack.c.b16 %v3059, %v3057
      %v3076 = vpack.c.b16 %v3060, %v3058
      %3093 = vmatpush.bf16.msra.mxu0 %v3075
      %3094 = vmatpush.bf16.msra.mxu0 %v3073
      %3095 = vmatpush.bf16.msra.mxu0 %v3071
      %3096 = vmatpush.bf16.msra.mxu0 %v3069
      %3097 = vmatpush.bf16.msra.mxu0 %v3067
      %3098 = vmatpush.bf16.msra.mxu0 %v3065
      %3099 = vmatpush.bf16.msra.mxu0 %v3063
      %3100 = vmatpush.bf16.msra.mxu0 %v3061
      %3101 = vmatmul.bf16.gmra.mxu0 %v1352
      %v3102 = vpop.f32.mrf.mxu0
      %v3103 = vadd.f32 0.0, %v3102
      %v3104 = vpop.f32.mrf.mxu0
      %v3105 = vadd.f32 0.0, %v3104
      %3106 = vmatmul.bf16.gmra.mxu0 %v1353
      %v3107 = vpop.f32.mrf.mxu0
      %v3108 = vadd.f32 0.0, %v3107
      %v3109 = vpop.f32.mrf.mxu0
      %v3110 = vadd.f32 0.0, %v3109
      %3111 = vmatmul.bf16.gmra.mxu0 %v1354
      %v3112 = vpop.f32.mrf.mxu0
      %v3113 = vadd.f32 0.0, %v3112
      %v3114 = vpop.f32.mrf.mxu0
      %v3115 = vadd.f32 0.0, %v3114
      %3116 = vmatmul.bf16.gmra.mxu0 %v1355
      %v3117 = vpop.f32.mrf.mxu0
      %v3118 = vadd.f32 0.0, %v3117
      %v3119 = vpop.f32.mrf.mxu0
      %v3120 = vadd.f32 0.0, %v3119
      %3121 = vmatmul.bf16.gmra.mxu0 %v1356
      %v3122 = vpop.f32.mrf.mxu0
      %v3123 = vadd.f32 0.0, %v3122
      %v3124 = vpop.f32.mrf.mxu0
      %v3125 = vadd.f32 0.0, %v3124
      %3126 = vmatmul.bf16.gmra.mxu0 %v1357
      %v3127 = vpop.f32.mrf.mxu0
      %v3128 = vadd.f32 0.0, %v3127
      %v3129 = vpop.f32.mrf.mxu0
      %v3130 = vadd.f32 0.0, %v3129
      %3131 = vmatmul.bf16.gmra.mxu0 %v1358
      %v3132 = vpop.f32.mrf.mxu0
      %v3133 = vadd.f32 0.0, %v3132
      %v3134 = vpop.f32.mrf.mxu0
      %v3135 = vadd.f32 0.0, %v3134
      %3136 = vmatmul.bf16.gmra.mxu0 %v1359
      %v3137 = vpop.f32.mrf.mxu0
      %v3138 = vadd.f32 0.0, %v3137
      %v3139 = vpop.f32.mrf.mxu0
      %v3140 = vadd.f32 0.0, %v3139
      %3141 = vmatmul.bf16.gmra.mxu0 %v1360
      %v3142 = vpop.f32.mrf.mxu0
      %v3143 = vadd.f32 0.0, %v3142
      %v3144 = vpop.f32.mrf.mxu0
      %v3145 = vadd.f32 0.0, %v3144
      %3146 = vmatmul.bf16.gmra.mxu0 %v1361
      %v3147 = vpop.f32.mrf.mxu0
      %v3148 = vadd.f32 0.0, %v3147
      %v3149 = vpop.f32.mrf.mxu0
      %v3150 = vadd.f32 0.0, %v3149
      %3151 = vmatmul.bf16.gmra.mxu0 %v1362
      %v3152 = vpop.f32.mrf.mxu0
      %v3153 = vadd.f32 0.0, %v3152
      %v3154 = vpop.f32.mrf.mxu0
      %v3155 = vadd.f32 0.0, %v3154
      %3156 = vmatmul.bf16.gmra.mxu0 %v1363
      %v3157 = vpop.f32.mrf.mxu0
      %v3158 = vadd.f32 0.0, %v3157
      %v3159 = vpop.f32.mrf.mxu0
      %v3160 = vadd.f32 0.0, %v3159
      %3161 = vmatmul.bf16.gmra.mxu0 %v1364
      %v3162 = vpop.f32.mrf.mxu0
      %v3163 = vadd.f32 0.0, %v3162
      %v3164 = vpop.f32.mrf.mxu0
      %v3165 = vadd.f32 0.0, %v3164
      %3166 = vmatmul.bf16.gmra.mxu0 %v1365
      %v3167 = vpop.f32.mrf.mxu0
      %v3168 = vadd.f32 0.0, %v3167
      %v3169 = vpop.f32.mrf.mxu0
      %v3170 = vadd.f32 0.0, %v3169
      %3171 = vmatmul.bf16.gmra.mxu0 %v1366
      %v3172 = vpop.f32.mrf.mxu0
      %v3173 = vadd.f32 0.0, %v3172
      %v3174 = vpop.f32.mrf.mxu0
      %v3175 = vadd.f32 0.0, %v3174
      %3176 = vmatmul.bf16.gmra.mxu0 %v3011
      %v3177 = vpop.f32.mrf.mxu0
      %v3178 = vadd.f32 0.0, %v3177
      %v3179 = vpop.f32.mrf.mxu0
      %v3180 = vadd.f32 0.0, %v3179
      %3181 = vdwg.mxu0
      %3182 = vmatpush.bf16.msra.mxu0 %v3076
      %3183 = vmatpush.bf16.msra.mxu0 %v3074
      %3184 = vmatpush.bf16.msra.mxu0 %v3072
      %3185 = vmatpush.bf16.msra.mxu0 %v3070
      %3186 = vmatpush.bf16.msra.mxu0 %v3068
      %3187 = vmatpush.bf16.msra.mxu0 %v3066
      %3188 = vmatpush.bf16.msra.mxu0 %v3064
      %3189 = vmatpush.bf16.msra.mxu0 %v3062
      %3190 = vmatmul.bf16.gmra.mxu0 %v1352
      %v3191 = vpop.f32.mrf.mxu0
      %v3192 = vadd.f32 0.0, %v3191
      %v3193 = vpop.f32.mrf.mxu0
      %v3194 = vadd.f32 0.0, %v3193
      %3195 = vmatmul.bf16.gmra.mxu0 %v1353
      %v3196 = vpop.f32.mrf.mxu0
      %v3197 = vadd.f32 0.0, %v3196
      %v3198 = vpop.f32.mrf.mxu0
      %v3199 = vadd.f32 0.0, %v3198
      %3200 = vmatmul.bf16.gmra.mxu0 %v1354
      %v3201 = vpop.f32.mrf.mxu0
      %v3202 = vadd.f32 0.0, %v3201
      %v3203 = vpop.f32.mrf.mxu0
      %v3204 = vadd.f32 0.0, %v3203
      %3205 = vmatmul.bf16.gmra.mxu0 %v1355
      %v3206 = vpop.f32.mrf.mxu0
      %v3207 = vadd.f32 0.0, %v3206
      %v3208 = vpop.f32.mrf.mxu0
      %v3209 = vadd.f32 0.0, %v3208
      %3210 = vmatmul.bf16.gmra.mxu0 %v1356
      %v3211 = vpop.f32.mrf.mxu0
      %v3212 = vadd.f32 0.0, %v3211
      %v3213 = vpop.f32.mrf.mxu0
      %v3214 = vadd.f32 0.0, %v3213
      %3215 = vmatmul.bf16.gmra.mxu0 %v1357
      %v3216 = vpop.f32.mrf.mxu0
      %v3217 = vadd.f32 0.0, %v3216
      %v3218 = vpop.f32.mrf.mxu0
      %v3219 = vadd.f32 0.0, %v3218
      %3220 = vmatmul.bf16.gmra.mxu0 %v1358
      %v3221 = vpop.f32.mrf.mxu0
      %v3222 = vadd.f32 0.0, %v3221
      %v3223 = vpop.f32.mrf.mxu0
      %v3224 = vadd.f32 0.0, %v3223
      %3225 = vmatmul.bf16.gmra.mxu0 %v1359
      %v3226 = vpop.f32.mrf.mxu0
      %v3227 = vadd.f32 0.0, %v3226
      %v3228 = vpop.f32.mrf.mxu0
      %v3229 = vadd.f32 0.0, %v3228
      %3230 = vmatmul.bf16.gmra.mxu0 %v1360
      %v3231 = vpop.f32.mrf.mxu0
      %v3232 = vadd.f32 0.0, %v3231
      %v3233 = vpop.f32.mrf.mxu0
      %v3234 = vadd.f32 0.0, %v3233
      %3235 = vmatmul.bf16.gmra.mxu0 %v1361
      %v3236 = vpop.f32.mrf.mxu0
      %v3237 = vadd.f32 0.0, %v3236
      %v3238 = vpop.f32.mrf.mxu0
      %v3239 = vadd.f32 0.0, %v3238
      %3240 = vmatmul.bf16.gmra.mxu0 %v1362
      %v3241 = vpop.f32.mrf.mxu0
      %v3242 = vadd.f32 0.0, %v3241
      %v3243 = vpop.f32.mrf.mxu0
      %v3244 = vadd.f32 0.0, %v3243
      %3245 = vmatmul.bf16.gmra.mxu0 %v1363
      %v3246 = vpop.f32.mrf.mxu0
      %v3247 = vadd.f32 0.0, %v3246
      %v3248 = vpop.f32.mrf.mxu0
      %v3249 = vadd.f32 0.0, %v3248
      %3250 = vmatmul.bf16.gmra.mxu0 %v1364
      %v3251 = vpop.f32.mrf.mxu0
      %v3252 = vadd.f32 0.0, %v3251
      %v3253 = vpop.f32.mrf.mxu0
      %v3254 = vadd.f32 0.0, %v3253
      %3255 = vmatmul.bf16.gmra.mxu0 %v1365
      %v3256 = vpop.f32.mrf.mxu0
      %v3257 = vadd.f32 0.0, %v3256
      %v3258 = vpop.f32.mrf.mxu0
      %v3259 = vadd.f32 0.0, %v3258
      %3260 = vmatmul.bf16.gmra.mxu0 %v1366
      %v3261 = vpop.f32.mrf.mxu0
      %v3262 = vadd.f32 0.0, %v3261
      %v3263 = vpop.f32.mrf.mxu0
      %v3264 = vadd.f32 0.0, %v3263
      %3265 = vmatmul.bf16.gmra.mxu0 %v3011
      %v3266 = vpop.f32.mrf.mxu0
      %v3267 = vadd.f32 0.0, %v3266
      %v3268 = vpop.f32.mrf.mxu0
      %v3269 = vadd.f32 0.0, %v3268
      %3270 = vdwg.mxu0
      %v3271 = vadd.f32 %v2928, %v3103
      %v3272 = vadd.f32 %v2929, %v3192
      %v3273 = vadd.f32 %v2930, %v3105
      %v3274 = vadd.f32 %v2931, %v3194
      %v3275 = vadd.f32 %v2932, %v3108
      %v3276 = vadd.f32 %v2933, %v3197
      %v3277 = vadd.f32 %v2934, %v3110
      %v3278 = vadd.f32 %v2935, %v3199
      %v3279 = vadd.f32 %v2936, %v3113
      %v3280 = vadd.f32 %v2937, %v3202
      %v3281 = vadd.f32 %v2938, %v3115
      %v3282 = vadd.f32 %v2939, %v3204
      %v3283 = vadd.f32 %v2940, %v3118
      %v3284 = vadd.f32 %v2941, %v3207
      %v3285 = vadd.f32 %v2942, %v3120
      %v3286 = vadd.f32 %v2943, %v3209
      %v3287 = vadd.f32 %v2944, %v3123
      %v3288 = vadd.f32 %v2945, %v3212
      %v3289 = vadd.f32 %v2946, %v3125
      %v3290 = vadd.f32 %v2947, %v3214
      %v3291 = vadd.f32 %v2948, %v3128
      %v3292 = vadd.f32 %v2949, %v3217
      %v3293 = vadd.f32 %v2950, %v3130
      %v3294 = vadd.f32 %v2951, %v3219
      %v3295 = vadd.f32 %v2952, %v3133
      %v3296 = vadd.f32 %v2953, %v3222
      %v3297 = vadd.f32 %v2954, %v3135
      %v3298 = vadd.f32 %v2955, %v3224
      %v3299 = vadd.f32 %v2956, %v3138
      %v3300 = vadd.f32 %v2957, %v3227
      %v3301 = vadd.f32 %v2958, %v3140
      %v3302 = vadd.f32 %v2959, %v3229
      %v3303 = vadd.f32 %v2960, %v3143
      %v3304 = vadd.f32 %v2961, %v3232
      %v3305 = vadd.f32 %v2962, %v3145
      %v3306 = vadd.f32 %v2963, %v3234
      %v3307 = vadd.f32 %v2964, %v3148
      %v3308 = vadd.f32 %v2965, %v3237
      %v3309 = vadd.f32 %v2966, %v3150
      %v3310 = vadd.f32 %v2967, %v3239
      %v3311 = vadd.f32 %v2968, %v3153
      %v3312 = vadd.f32 %v2969, %v3242
      %v3313 = vadd.f32 %v2970, %v3155
      %v3314 = vadd.f32 %v2971, %v3244
      %v3315 = vadd.f32 %v2972, %v3158
      %v3316 = vadd.f32 %v2973, %v3247
      %v3317 = vadd.f32 %v2974, %v3160
      %v3318 = vadd.f32 %v2975, %v3249
      %v3319 = vadd.f32 %v2976, %v3163
      %v3320 = vadd.f32 %v2977, %v3252
      %v3321 = vadd.f32 %v2978, %v3165
      %v3322 = vadd.f32 %v2979, %v3254
      %v3323 = vadd.f32 %v2980, %v3168
      %v3324 = vadd.f32 %v2981, %v3257
      %v3325 = vadd.f32 %v2982, %v3170
      %v3326 = vadd.f32 %v2983, %v3259
      %v3327 = vadd.f32 %v2984, %v3173
      %v3328 = vadd.f32 %v2985, %v3262
      %v3329 = vadd.f32 %v2986, %v3175
      %v3330 = vadd.f32 %v2987, %v3264
      %v3331 = vadd.f32 %v2988, %v3178
      %v3332 = vadd.f32 %v2989, %v3267
      %v3333 = vadd.f32 %v2990, %v3180
      %v3334 = vadd.f32 %v2991, %v3269
      %3335 = vst [vmem:[#allocation2] sm:$0xff] %v3271
      %3336 = vst [vmem:[#allocation2 + $0x8] sm:$0xff] %v3272
      %3337 = vst [vmem:[#allocation2 + $0x10] sm:$0xff] %v3273
      %3338 = vst [vmem:[#allocation2 + $0x18] sm:$0xff] %v3274
      %3339 = vst [vmem:[#allocation2 + $0x20] sm:$0xff] %v3275
      %3340 = vst [vmem:[#allocation2 + $0x28] sm:$0xff] %v3276
      %3341 = vst [vmem:[#allocation2 + $0x30] sm:$0xff] %v3277
      %3342 = vst [vmem:[#allocation2 + $0x38] sm:$0xff] %v3278
      %3343 = vst [vmem:[#allocation2 + $0x40] sm:$0xff] %v3279
      %3344 = vst [vmem:[#allocation2 + $0x48] sm:$0xff] %v3280
      %3345 = vst [vmem:[#allocation2 + $0x50] sm:$0xff] %v3281
      %3346 = vst [vmem:[#allocation2 + $0x58] sm:$0xff] %v3282
      %3347 = vst [vmem:[#allocation2 + $0x60] sm:$0xff] %v3283
      %3348 = vst [vmem:[#allocation2 + $0x68] sm:$0xff] %v3284
      %3349 = vst [vmem:[#allocation2 + $0x70] sm:$0xff] %v3285
      %3350 = vst [vmem:[#allocation2 + $0x78] sm:$0xff] %v3286
      %3351 = vst [vmem:[#allocation2 + $0x80] sm:$0xff] %v3287
      %3352 = vst [vmem:[#allocation2 + $0x88] sm:$0xff] %v3288
      %3353 = vst [vmem:[#allocation2 + $0x90] sm:$0xff] %v3289
      %3354 = vst [vmem:[#allocation2 + $0x98] sm:$0xff] %v3290
      %3355 = vst [vmem:[#allocation2 + $0xa0] sm:$0xff] %v3291
      %3356 = vst [vmem:[#allocation2 + $0xa8] sm:$0xff] %v3292
      %3357 = vst [vmem:[#allocation2 + $0xb0] sm:$0xff] %v3293
      %3358 = vst [vmem:[#allocation2 + $0xb8] sm:$0xff] %v3294
      %3359 = vst [vmem:[#allocation2 + $0xc0] sm:$0xff] %v3295
      %3360 = vst [vmem:[#allocation2 + $0xc8] sm:$0xff] %v3296
      %3361 = vst [vmem:[#allocation2 + $0xd0] sm:$0xff] %v3297
      %3362 = vst [vmem:[#allocation2 + $0xd8] sm:$0xff] %v3298
      %3363 = vst [vmem:[#allocation2 + $0xe0] sm:$0xff] %v3299
      %3364 = vst [vmem:[#allocation2 + $0xe8] sm:$0xff] %v3300
      %3365 = vst [vmem:[#allocation2 + $0xf0] sm:$0xff] %v3301
      %3366 = vst [vmem:[#allocation2 + $0xf8] sm:$0xff] %v3302
      %3367 = vst [vmem:[#allocation2 + $0x100] sm:$0xff] %v3303
      %3368 = vst [vmem:[#allocation2 + $0x108] sm:$0xff] %v3304
      %3369 = vst [vmem:[#allocation2 + $0x110] sm:$0xff] %v3305
      %3370 = vst [vmem:[#allocation2 + $0x118] sm:$0xff] %v3306
      %3371 = vst [vmem:[#allocation2 + $0x120] sm:$0xff] %v3307
      %3372 = vst [vmem:[#allocation2 + $0x128] sm:$0xff] %v3308
      %3373 = vst [vmem:[#allocation2 + $0x130] sm:$0xff] %v3309
      %3374 = vst [vmem:[#allocation2 + $0x138] sm:$0xff] %v3310
      %3375 = vst [vmem:[#allocation2 + $0x140] sm:$0xff] %v3311
      %3376 = vst [vmem:[#allocation2 + $0x148] sm:$0xff] %v3312
      %3377 = vst [vmem:[#allocation2 + $0x150] sm:$0xff] %v3313
      %3378 = vst [vmem:[#allocation2 + $0x158] sm:$0xff] %v3314
      %3379 = vst [vmem:[#allocation2 + $0x160] sm:$0xff] %v3315
      %3380 = vst [vmem:[#allocation2 + $0x168] sm:$0xff] %v3316
      %3381 = vst [vmem:[#allocation2 + $0x170] sm:$0xff] %v3317
      %3382 = vst [vmem:[#allocation2 + $0x178] sm:$0xff] %v3318
      %3383 = vst [vmem:[#allocation2 + $0x180] sm:$0xff] %v3319
      %3384 = vst [vmem:[#allocation2 + $0x188] sm:$0xff] %v3320
      %3385 = vst [vmem:[#allocation2 + $0x190] sm:$0xff] %v3321
      %3386 = vst [vmem:[#allocation2 + $0x198] sm:$0xff] %v3322
      %3387 = vst [vmem:[#allocation2 + $0x1a0] sm:$0xff] %v3323
      %3388 = vst [vmem:[#allocation2 + $0x1a8] sm:$0xff] %v3324
      %3389 = vst [vmem:[#allocation2 + $0x1b0] sm:$0xff] %v3325
      %3390 = vst [vmem:[#allocation2 + $0x1b8] sm:$0xff] %v3326
      %3391 = vst [vmem:[#allocation2 + $0x1c0] sm:$0xff] %v3327
      %3392 = vst [vmem:[#allocation2 + $0x1c8] sm:$0xff] %v3328
      %3393 = vst [vmem:[#allocation2 + $0x1d0] sm:$0xff] %v3329
      %3394 = vst [vmem:[#allocation2 + $0x1d8] sm:$0xff] %v3330
      %3395 = vst [vmem:[#allocation2 + $0x1e0] sm:$0xff] %v3331
      %3396 = vst [vmem:[#allocation2 + $0x1e8] sm:$0xff] %v3332
      %3397 = vst [vmem:[#allocation2 + $0x1f0] sm:$0xff] %v3333
      %3398 = vst [vmem:[#allocation2 + $0x1f8] sm:$0xff] %v3334
      %v3400 = vrot.slane %v283, 5
      %v3401 = vrot.slane %v3400, 4
      %v3402 = vrot.slane %v284, 5
      %v3403 = vsel %vm1787, %v3401, %v3402
      %v3404 = vrot.slane %v3402, 4
      %v3405 = vrot.slane %v285, 5
      %v3406 = vsel %vm1787, %v3404, %v3405
      %v3407 = vld [vmem:[#allocation2] sm:$0xff]
      %v3408 = vld [vmem:[#allocation2 + $0x8] sm:$0xff]
      %v3409 = vld [vmem:[#allocation2 + $0x10] sm:$0xff]
      %v3410 = vld [vmem:[#allocation2 + $0x18] sm:$0xff]
      %v3411 = vld [vmem:[#allocation2 + $0x20] sm:$0xff]
      %v3412 = vld [vmem:[#allocation2 + $0x28] sm:$0xff]
      %v3413 = vld [vmem:[#allocation2 + $0x30] sm:$0xff]
      %v3414 = vld [vmem:[#allocation2 + $0x38] sm:$0xff]
      %v3415 = vld [vmem:[#allocation2 + $0x40] sm:$0xff]
      %v3416 = vld [vmem:[#allocation2 + $0x48] sm:$0xff]
      %v3417 = vld [vmem:[#allocation2 + $0x50] sm:$0xff]
      %v3418 = vld [vmem:[#allocation2 + $0x58] sm:$0xff]
      %v3419 = vld [vmem:[#allocation2 + $0x60] sm:$0xff]
      %v3420 = vld [vmem:[#allocation2 + $0x68] sm:$0xff]
      %v3421 = vld [vmem:[#allocation2 + $0x70] sm:$0xff]
      %v3422 = vld [vmem:[#allocation2 + $0x78] sm:$0xff]
      %v3423 = vld [vmem:[#allocation2 + $0x80] sm:$0xff]
      %v3424 = vld [vmem:[#allocation2 + $0x88] sm:$0xff]
      %v3425 = vld [vmem:[#allocation2 + $0x90] sm:$0xff]
      %v3426 = vld [vmem:[#allocation2 + $0x98] sm:$0xff]
      %v3427 = vld [vmem:[#allocation2 + $0xa0] sm:$0xff]
      %v3428 = vld [vmem:[#allocation2 + $0xa8] sm:$0xff]
      %v3429 = vld [vmem:[#allocation2 + $0xb0] sm:$0xff]
      %v3430 = vld [vmem:[#allocation2 + $0xb8] sm:$0xff]
      %v3431 = vld [vmem:[#allocation2 + $0xc0] sm:$0xff]
      %v3432 = vld [vmem:[#allocation2 + $0xc8] sm:$0xff]
      %v3433 = vld [vmem:[#allocation2 + $0xd0] sm:$0xff]
      %v3434 = vld [vmem:[#allocation2 + $0xd8] sm:$0xff]
      %v3435 = vld [vmem:[#allocation2 + $0xe0] sm:$0xff]
      %v3436 = vld [vmem:[#allocation2 + $0xe8] sm:$0xff]
      %v3437 = vld [vmem:[#allocation2 + $0xf0] sm:$0xff]
      %v3438 = vld [vmem:[#allocation2 + $0xf8] sm:$0xff]
      %v3439 = vld [vmem:[#allocation2 + $0x100] sm:$0xff]
      %v3440 = vld [vmem:[#allocation2 + $0x108] sm:$0xff]
      %v3441 = vld [vmem:[#allocation2 + $0x110] sm:$0xff]
      %v3442 = vld [vmem:[#allocation2 + $0x118] sm:$0xff]
      %v3443 = vld [vmem:[#allocation2 + $0x120] sm:$0xff]
      %v3444 = vld [vmem:[#allocation2 + $0x128] sm:$0xff]
      %v3445 = vld [vmem:[#allocation2 + $0x130] sm:$0xff]
      %v3446 = vld [vmem:[#allocation2 + $0x138] sm:$0xff]
      %v3447 = vld [vmem:[#allocation2 + $0x140] sm:$0xff]
      %v3448 = vld [vmem:[#allocation2 + $0x148] sm:$0xff]
      %v3449 = vld [vmem:[#allocation2 + $0x150] sm:$0xff]
      %v3450 = vld [vmem:[#allocation2 + $0x158] sm:$0xff]
      %v3451 = vld [vmem:[#allocation2 + $0x160] sm:$0xff]
      %v3452 = vld [vmem:[#allocation2 + $0x168] sm:$0xff]
      %v3453 = vld [vmem:[#allocation2 + $0x170] sm:$0xff]
      %v3454 = vld [vmem:[#allocation2 + $0x178] sm:$0xff]
      %v3455 = vld [vmem:[#allocation2 + $0x180] sm:$0xff]
      %v3456 = vld [vmem:[#allocation2 + $0x188] sm:$0xff]
      %v3457 = vld [vmem:[#allocation2 + $0x190] sm:$0xff]
      %v3458 = vld [vmem:[#allocation2 + $0x198] sm:$0xff]
      %v3459 = vld [vmem:[#allocation2 + $0x1a0] sm:$0xff]
      %v3460 = vld [vmem:[#allocation2 + $0x1a8] sm:$0xff]
      %v3461 = vld [vmem:[#allocation2 + $0x1b0] sm:$0xff]
      %v3462 = vld [vmem:[#allocation2 + $0x1b8] sm:$0xff]
      %v3463 = vld [vmem:[#allocation2 + $0x1c0] sm:$0xff]
      %v3464 = vld [vmem:[#allocation2 + $0x1c8] sm:$0xff]
      %v3465 = vld [vmem:[#allocation2 + $0x1d0] sm:$0xff]
      %v3466 = vld [vmem:[#allocation2 + $0x1d8] sm:$0xff]
      %v3467 = vld [vmem:[#allocation2 + $0x1e0] sm:$0xff]
      %v3468 = vld [vmem:[#allocation2 + $0x1e8] sm:$0xff]
      %v3469 = vld [vmem:[#allocation2 + $0x1f0] sm:$0xff]
      %v3470 = vld [vmem:[#allocation2 + $0x1f8] sm:$0xff]
      %s3471 = scalar_lea.vmem %s1, 640
      %v3472 = vld [vmem:[%s3471] sm:$0xff]
      %v3473 = vld [vmem:[%s3471 + $0x8] sm:$0xff]
      %v3474 = vld [vmem:[%s3471 + $0x10] sm:$0xff]
      %v3475 = vld [vmem:[%s3471 + $0x18] sm:$0xff]
      %v3476 = vld [vmem:[%s3471 + $0x20] sm:$0xff]
      %v3477 = vld [vmem:[%s3471 + $0x28] sm:$0xff]
      %v3478 = vld [vmem:[%s3471 + $0x30] sm:$0xff]
      %v3479 = vld [vmem:[%s3471 + $0x38] sm:$0xff]
      %v3480 = vld [vmem:[%s3471 + $0x40] sm:$0xff]
      %v3481 = vld [vmem:[%s3471 + $0x48] sm:$0xff]
      %v3482 = vld [vmem:[%s3471 + $0x50] sm:$0xff]
      %v3483 = vld [vmem:[%s3471 + $0x58] sm:$0xff]
      %v3484 = vld [vmem:[%s3471 + $0x60] sm:$0xff]
      %v3485 = vld [vmem:[%s3471 + $0x68] sm:$0xff]
      %v3486 = vld [vmem:[%s3471 + $0x70] sm:$0xff]
      %v3487 = vld [vmem:[%s3471 + $0x78] sm:$0xff]
      %v3488 = vunpack.c.l.b16 %v3403
      %v3489 = vunpack.c.l.b16 %v3406
      %v3490 = vpack.c.b16 %v3489, %v3488
      %v3508 = vunpack.c.l.b16 %v3472
      %v3509 = vunpack.c.h.b16 %v3472
      %v3510 = vunpack.c.l.b16 %v3473
      %v3511 = vunpack.c.h.b16 %v3473
      %v3512 = vunpack.c.l.b16 %v3474
      %v3513 = vunpack.c.h.b16 %v3474
      %v3514 = vunpack.c.l.b16 %v3475
      %v3515 = vunpack.c.h.b16 %v3475
      %v3516 = vunpack.c.l.b16 %v3476
      %v3517 = vunpack.c.h.b16 %v3476
      %v3518 = vunpack.c.l.b16 %v3477
      %v3519 = vunpack.c.h.b16 %v3477
      %v3520 = vunpack.c.l.b16 %v3478
      %v3521 = vunpack.c.h.b16 %v3478
      %v3522 = vunpack.c.l.b16 %v3479
      %v3523 = vunpack.c.h.b16 %v3479
      %v3524 = vunpack.c.l.b16 %v3480
      %v3525 = vunpack.c.h.b16 %v3480
      %v3526 = vunpack.c.l.b16 %v3481
      %v3527 = vunpack.c.h.b16 %v3481
      %v3528 = vunpack.c.l.b16 %v3482
      %v3529 = vunpack.c.h.b16 %v3482
      %v3530 = vunpack.c.l.b16 %v3483
      %v3531 = vunpack.c.h.b16 %v3483
      %v3532 = vunpack.c.l.b16 %v3484
      %v3533 = vunpack.c.h.b16 %v3484
      %v3534 = vunpack.c.l.b16 %v3485
      %v3535 = vunpack.c.h.b16 %v3485
      %v3536 = vunpack.c.l.b16 %v3486
      %v3537 = vunpack.c.h.b16 %v3486
      %v3538 = vunpack.c.l.b16 %v3487
      %v3539 = vunpack.c.h.b16 %v3487
      %v3540 = vpack.c.b16 %v3510, %v3508
      %v3541 = vpack.c.b16 %v3511, %v3509
      %v3542 = vpack.c.b16 %v3514, %v3512
      %v3543 = vpack.c.b16 %v3515, %v3513
      %v3544 = vpack.c.b16 %v3518, %v3516
      %v3545 = vpack.c.b16 %v3519, %v3517
      %v3546 = vpack.c.b16 %v3522, %v3520
      %v3547 = vpack.c.b16 %v3523, %v3521
      %v3548 = vpack.c.b16 %v3526, %v3524
      %v3549 = vpack.c.b16 %v3527, %v3525
      %v3550 = vpack.c.b16 %v3530, %v3528
      %v3551 = vpack.c.b16 %v3531, %v3529
      %v3552 = vpack.c.b16 %v3534, %v3532
      %v3553 = vpack.c.b16 %v3535, %v3533
      %v3554 = vpack.c.b16 %v3538, %v3536
      %v3555 = vpack.c.b16 %v3539, %v3537
      %3572 = vmatpush.bf16.msra.mxu0 %v3554
      %3573 = vmatpush.bf16.msra.mxu0 %v3552
      %3574 = vmatpush.bf16.msra.mxu0 %v3550
      %3575 = vmatpush.bf16.msra.mxu0 %v3548
      %3576 = vmatpush.bf16.msra.mxu0 %v3546
      %3577 = vmatpush.bf16.msra.mxu0 %v3544
      %3578 = vmatpush.bf16.msra.mxu0 %v3542
      %3579 = vmatpush.bf16.msra.mxu0 %v3540
      %3580 = vmatmul.bf16.gmra.mxu0 %v2014
      %v3581 = vpop.f32.mrf.mxu0
      %v3582 = vadd.f32 0.0, %v3581
      %v3583 = vpop.f32.mrf.mxu0
      %v3584 = vadd.f32 0.0, %v3583
      %3585 = vmatmul.bf16.gmra.mxu0 %v2015
      %v3586 = vpop.f32.mrf.mxu0
      %v3587 = vadd.f32 0.0, %v3586
      %v3588 = vpop.f32.mrf.mxu0
      %v3589 = vadd.f32 0.0, %v3588
      %3590 = vmatmul.bf16.gmra.mxu0 %v2016
      %v3591 = vpop.f32.mrf.mxu0
      %v3592 = vadd.f32 0.0, %v3591
      %v3593 = vpop.f32.mrf.mxu0
      %v3594 = vadd.f32 0.0, %v3593
      %3595 = vmatmul.bf16.gmra.mxu0 %v2017
      %v3596 = vpop.f32.mrf.mxu0
      %v3597 = vadd.f32 0.0, %v3596
      %v3598 = vpop.f32.mrf.mxu0
      %v3599 = vadd.f32 0.0, %v3598
      %3600 = vmatmul.bf16.gmra.mxu0 %v2018
      %v3601 = vpop.f32.mrf.mxu0
      %v3602 = vadd.f32 0.0, %v3601
      %v3603 = vpop.f32.mrf.mxu0
      %v3604 = vadd.f32 0.0, %v3603
      %3605 = vmatmul.bf16.gmra.mxu0 %v2019
      %v3606 = vpop.f32.mrf.mxu0
      %v3607 = vadd.f32 0.0, %v3606
      %v3608 = vpop.f32.mrf.mxu0
      %v3609 = vadd.f32 0.0, %v3608
      %3610 = vmatmul.bf16.gmra.mxu0 %v2020
      %v3611 = vpop.f32.mrf.mxu0
      %v3612 = vadd.f32 0.0, %v3611
      %v3613 = vpop.f32.mrf.mxu0
      %v3614 = vadd.f32 0.0, %v3613
      %3615 = vmatmul.bf16.gmra.mxu0 %v2021
      %v3616 = vpop.f32.mrf.mxu0
      %v3617 = vadd.f32 0.0, %v3616
      %v3618 = vpop.f32.mrf.mxu0
      %v3619 = vadd.f32 0.0, %v3618
      %3620 = vmatmul.bf16.gmra.mxu0 %v2022
      %v3621 = vpop.f32.mrf.mxu0
      %v3622 = vadd.f32 0.0, %v3621
      %v3623 = vpop.f32.mrf.mxu0
      %v3624 = vadd.f32 0.0, %v3623
      %3625 = vmatmul.bf16.gmra.mxu0 %v2023
      %v3626 = vpop.f32.mrf.mxu0
      %v3627 = vadd.f32 0.0, %v3626
      %v3628 = vpop.f32.mrf.mxu0
      %v3629 = vadd.f32 0.0, %v3628
      %3630 = vmatmul.bf16.gmra.mxu0 %v2024
      %v3631 = vpop.f32.mrf.mxu0
      %v3632 = vadd.f32 0.0, %v3631
      %v3633 = vpop.f32.mrf.mxu0
      %v3634 = vadd.f32 0.0, %v3633
      %3635 = vmatmul.bf16.gmra.mxu0 %v2025
      %v3636 = vpop.f32.mrf.mxu0
      %v3637 = vadd.f32 0.0, %v3636
      %v3638 = vpop.f32.mrf.mxu0
      %v3639 = vadd.f32 0.0, %v3638
      %3640 = vmatmul.bf16.gmra.mxu0 %v2026
      %v3641 = vpop.f32.mrf.mxu0
      %v3642 = vadd.f32 0.0, %v3641
      %v3643 = vpop.f32.mrf.mxu0
      %v3644 = vadd.f32 0.0, %v3643
      %3645 = vmatmul.bf16.gmra.mxu0 %v2027
      %v3646 = vpop.f32.mrf.mxu0
      %v3647 = vadd.f32 0.0, %v3646
      %v3648 = vpop.f32.mrf.mxu0
      %v3649 = vadd.f32 0.0, %v3648
      %3650 = vmatmul.bf16.gmra.mxu0 %v2028
      %v3651 = vpop.f32.mrf.mxu0
      %v3652 = vadd.f32 0.0, %v3651
      %v3653 = vpop.f32.mrf.mxu0
      %v3654 = vadd.f32 0.0, %v3653
      %3655 = vmatmul.bf16.gmra.mxu0 %v3490
      %v3656 = vpop.f32.mrf.mxu0
      %v3657 = vadd.f32 0.0, %v3656
      %v3658 = vpop.f32.mrf.mxu0
      %v3659 = vadd.f32 0.0, %v3658
      %3660 = vdwg.mxu0
      %3661 = vmatpush.bf16.msra.mxu0 %v3555
      %3662 = vmatpush.bf16.msra.mxu0 %v3553
      %3663 = vmatpush.bf16.msra.mxu0 %v3551
      %3664 = vmatpush.bf16.msra.mxu0 %v3549
      %3665 = vmatpush.bf16.msra.mxu0 %v3547
      %3666 = vmatpush.bf16.msra.mxu0 %v3545
      %3667 = vmatpush.bf16.msra.mxu0 %v3543
      %3668 = vmatpush.bf16.msra.mxu0 %v3541
      %3669 = vmatmul.bf16.gmra.mxu0 %v2014
      %v3670 = vpop.f32.mrf.mxu0
      %v3671 = vadd.f32 0.0, %v3670
      %v3672 = vpop.f32.mrf.mxu0
      %v3673 = vadd.f32 0.0, %v3672
      %3674 = vmatmul.bf16.gmra.mxu0 %v2015
      %v3675 = vpop.f32.mrf.mxu0
      %v3676 = vadd.f32 0.0, %v3675
      %v3677 = vpop.f32.mrf.mxu0
      %v3678 = vadd.f32 0.0, %v3677
      %3679 = vmatmul.bf16.gmra.mxu0 %v2016
      %v3680 = vpop.f32.mrf.mxu0
      %v3681 = vadd.f32 0.0, %v3680
      %v3682 = vpop.f32.mrf.mxu0
      %v3683 = vadd.f32 0.0, %v3682
      %3684 = vmatmul.bf16.gmra.mxu0 %v2017
      %v3685 = vpop.f32.mrf.mxu0
      %v3686 = vadd.f32 0.0, %v3685
      %v3687 = vpop.f32.mrf.mxu0
      %v3688 = vadd.f32 0.0, %v3687
      %3689 = vmatmul.bf16.gmra.mxu0 %v2018
      %v3690 = vpop.f32.mrf.mxu0
      %v3691 = vadd.f32 0.0, %v3690
      %v3692 = vpop.f32.mrf.mxu0
      %v3693 = vadd.f32 0.0, %v3692
      %3694 = vmatmul.bf16.gmra.mxu0 %v2019
      %v3695 = vpop.f32.mrf.mxu0
      %v3696 = vadd.f32 0.0, %v3695
      %v3697 = vpop.f32.mrf.mxu0
      %v3698 = vadd.f32 0.0, %v3697
      %3699 = vmatmul.bf16.gmra.mxu0 %v2020
      %v3700 = vpop.f32.mrf.mxu0
      %v3701 = vadd.f32 0.0, %v3700
      %v3702 = vpop.f32.mrf.mxu0
      %v3703 = vadd.f32 0.0, %v3702
      %3704 = vmatmul.bf16.gmra.mxu0 %v2021
      %v3705 = vpop.f32.mrf.mxu0
      %v3706 = vadd.f32 0.0, %v3705
      %v3707 = vpop.f32.mrf.mxu0
      %v3708 = vadd.f32 0.0, %v3707
      %3709 = vmatmul.bf16.gmra.mxu0 %v2022
      %v3710 = vpop.f32.mrf.mxu0
      %v3711 = vadd.f32 0.0, %v3710
      %v3712 = vpop.f32.mrf.mxu0
      %v3713 = vadd.f32 0.0, %v3712
      %3714 = vmatmul.bf16.gmra.mxu0 %v2023
      %v3715 = vpop.f32.mrf.mxu0
      %v3716 = vadd.f32 0.0, %v3715
      %v3717 = vpop.f32.mrf.mxu0
      %v3718 = vadd.f32 0.0, %v3717
      %3719 = vmatmul.bf16.gmra.mxu0 %v2024
      %v3720 = vpop.f32.mrf.mxu0
      %v3721 = vadd.f32 0.0, %v3720
      %v3722 = vpop.f32.mrf.mxu0
      %v3723 = vadd.f32 0.0, %v3722
      %3724 = vmatmul.bf16.gmra.mxu0 %v2025
      %v3725 = vpop.f32.mrf.mxu0
      %v3726 = vadd.f32 0.0, %v3725
      %v3727 = vpop.f32.mrf.mxu0
      %v3728 = vadd.f32 0.0, %v3727
      %3729 = vmatmul.bf16.gmra.mxu0 %v2026
      %v3730 = vpop.f32.mrf.mxu0
      %v3731 = vadd.f32 0.0, %v3730
      %v3732 = vpop.f32.mrf.mxu0
      %v3733 = vadd.f32 0.0, %v3732
      %3734 = vmatmul.bf16.gmra.mxu0 %v2027
      %v3735 = vpop.f32.mrf.mxu0
      %v3736 = vadd.f32 0.0, %v3735
      %v3737 = vpop.f32.mrf.mxu0
      %v3738 = vadd.f32 0.0, %v3737
      %3739 = vmatmul.bf16.gmra.mxu0 %v2028
      %v3740 = vpop.f32.mrf.mxu0
      %v3741 = vadd.f32 0.0, %v3740
      %v3742 = vpop.f32.mrf.mxu0
      %v3743 = vadd.f32 0.0, %v3742
      %3744 = vmatmul.bf16.gmra.mxu0 %v3490
      %v3745 = vpop.f32.mrf.mxu0
      %v3746 = vadd.f32 0.0, %v3745
      %v3747 = vpop.f32.mrf.mxu0
      %v3748 = vadd.f32 0.0, %v3747
      %3749 = vdwg.mxu0
      %v3750 = vadd.f32 %v3407, %v3582
      %v3751 = vadd.f32 %v3408, %v3671
      %v3752 = vadd.f32 %v3409, %v3584
      %v3753 = vadd.f32 %v3410, %v3673
      %v3754 = vadd.f32 %v3411, %v3587
      %v3755 = vadd.f32 %v3412, %v3676
      %v3756 = vadd.f32 %v3413, %v3589
      %v3757 = vadd.f32 %v3414, %v3678
      %v3758 = vadd.f32 %v3415, %v3592
      %v3759 = vadd.f32 %v3416, %v3681
      %v3760 = vadd.f32 %v3417, %v3594
      %v3761 = vadd.f32 %v3418, %v3683
      %v3762 = vadd.f32 %v3419, %v3597
      %v3763 = vadd.f32 %v3420, %v3686
      %v3764 = vadd.f32 %v3421, %v3599
      %v3765 = vadd.f32 %v3422, %v3688
      %v3766 = vadd.f32 %v3423, %v3602
      %v3767 = vadd.f32 %v3424, %v3691
      %v3768 = vadd.f32 %v3425, %v3604
      %v3769 = vadd.f32 %v3426, %v3693
      %v3770 = vadd.f32 %v3427, %v3607
      %v3771 = vadd.f32 %v3428, %v3696
      %v3772 = vadd.f32 %v3429, %v3609
      %v3773 = vadd.f32 %v3430, %v3698
      %v3774 = vadd.f32 %v3431, %v3612
      %v3775 = vadd.f32 %v3432, %v3701
      %v3776 = vadd.f32 %v3433, %v3614
      %v3777 = vadd.f32 %v3434, %v3703
      %v3778 = vadd.f32 %v3435, %v3617
      %v3779 = vadd.f32 %v3436, %v3706
      %v3780 = vadd.f32 %v3437, %v3619
      %v3781 = vadd.f32 %v3438, %v3708
      %v3782 = vadd.f32 %v3439, %v3622
      %v3783 = vadd.f32 %v3440, %v3711
      %v3784 = vadd.f32 %v3441, %v3624
      %v3785 = vadd.f32 %v3442, %v3713
      %v3786 = vadd.f32 %v3443, %v3627
      %v3787 = vadd.f32 %v3444, %v3716
      %v3788 = vadd.f32 %v3445, %v3629
      %v3789 = vadd.f32 %v3446, %v3718
      %v3790 = vadd.f32 %v3447, %v3632
      %v3791 = vadd.f32 %v3448, %v3721
      %v3792 = vadd.f32 %v3449, %v3634
      %v3793 = vadd.f32 %v3450, %v3723
      %v3794 = vadd.f32 %v3451, %v3637
      %v3795 = vadd.f32 %v3452, %v3726
      %v3796 = vadd.f32 %v3453, %v3639
      %v3797 = vadd.f32 %v3454, %v3728
      %v3798 = vadd.f32 %v3455, %v3642
      %v3799 = vadd.f32 %v3456, %v3731
      %v3800 = vadd.f32 %v3457, %v3644
      %v3801 = vadd.f32 %v3458, %v3733
      %v3802 = vadd.f32 %v3459, %v3647
      %v3803 = vadd.f32 %v3460, %v3736
      %v3804 = vadd.f32 %v3461, %v3649
      %v3805 = vadd.f32 %v3462, %v3738
      %v3806 = vadd.f32 %v3463, %v3652
      %v3807 = vadd.f32 %v3464, %v3741
      %v3808 = vadd.f32 %v3465, %v3654
      %v3809 = vadd.f32 %v3466, %v3743
      %v3810 = vadd.f32 %v3467, %v3657
      %v3811 = vadd.f32 %v3468, %v3746
      %v3812 = vadd.f32 %v3469, %v3659
      %v3813 = vadd.f32 %v3470, %v3748
      %3814 = vst [vmem:[#allocation2] sm:$0xff] %v3750
      %3815 = vst [vmem:[#allocation2 + $0x8] sm:$0xff] %v3751
      %3816 = vst [vmem:[#allocation2 + $0x10] sm:$0xff] %v3752
      %3817 = vst [vmem:[#allocation2 + $0x18] sm:$0xff] %v3753
      %3818 = vst [vmem:[#allocation2 + $0x20] sm:$0xff] %v3754
      %3819 = vst [vmem:[#allocation2 + $0x28] sm:$0xff] %v3755
      %3820 = vst [vmem:[#allocation2 + $0x30] sm:$0xff] %v3756
      %3821 = vst [vmem:[#allocation2 + $0x38] sm:$0xff] %v3757
      %3822 = vst [vmem:[#allocation2 + $0x40] sm:$0xff] %v3758
      %3823 = vst [vmem:[#allocation2 + $0x48] sm:$0xff] %v3759
      %3824 = vst [vmem:[#allocation2 + $0x50] sm:$0xff] %v3760
      %3825 = vst [vmem:[#allocation2 + $0x58] sm:$0xff] %v3761
      %3826 = vst [vmem:[#allocation2 + $0x60] sm:$0xff] %v3762
      %3827 = vst [vmem:[#allocation2 + $0x68] sm:$0xff] %v3763
      %3828 = vst [vmem:[#allocation2 + $0x70] sm:$0xff] %v3764
      %3829 = vst [vmem:[#allocation2 + $0x78] sm:$0xff] %v3765
      %3830 = vst [vmem:[#allocation2 + $0x80] sm:$0xff] %v3766
      %3831 = vst [vmem:[#allocation2 + $0x88] sm:$0xff] %v3767
      %3832 = vst [vmem:[#allocation2 + $0x90] sm:$0xff] %v3768
      %3833 = vst [vmem:[#allocation2 + $0x98] sm:$0xff] %v3769
      %3834 = vst [vmem:[#allocation2 + $0xa0] sm:$0xff] %v3770
      %3835 = vst [vmem:[#allocation2 + $0xa8] sm:$0xff] %v3771
      %3836 = vst [vmem:[#allocation2 + $0xb0] sm:$0xff] %v3772
      %3837 = vst [vmem:[#allocation2 + $0xb8] sm:$0xff] %v3773
      %3838 = vst [vmem:[#allocation2 + $0xc0] sm:$0xff] %v3774
      %3839 = vst [vmem:[#allocation2 + $0xc8] sm:$0xff] %v3775
      %3840 = vst [vmem:[#allocation2 + $0xd0] sm:$0xff] %v3776
      %3841 = vst [vmem:[#allocation2 + $0xd8] sm:$0xff] %v3777
      %3842 = vst [vmem:[#allocation2 + $0xe0] sm:$0xff] %v3778
      %3843 = vst [vmem:[#allocation2 + $0xe8] sm:$0xff] %v3779
      %3844 = vst [vmem:[#allocation2 + $0xf0] sm:$0xff] %v3780
      %3845 = vst [vmem:[#allocation2 + $0xf8] sm:$0xff] %v3781
      %3846 = vst [vmem:[#allocation2 + $0x100] sm:$0xff] %v3782
      %3847 = vst [vmem:[#allocation2 + $0x108] sm:$0xff] %v3783
      %3848 = vst [vmem:[#allocation2 + $0x110] sm:$0xff] %v3784
      %3849 = vst [vmem:[#allocation2 + $0x118] sm:$0xff] %v3785
      %3850 = vst [vmem:[#allocation2 + $0x120] sm:$0xff] %v3786
      %3851 = vst [vmem:[#allocation2 + $0x128] sm:$0xff] %v3787
      %3852 = vst [vmem:[#allocation2 + $0x130] sm:$0xff] %v3788
      %3853 = vst [vmem:[#allocation2 + $0x138] sm:$0xff] %v3789
      %3854 = vst [vmem:[#allocation2 + $0x140] sm:$0xff] %v3790
      %3855 = vst [vmem:[#allocation2 + $0x148] sm:$0xff] %v3791
      %3856 = vst [vmem:[#allocation2 + $0x150] sm:$0xff] %v3792
      %3857 = vst [vmem:[#allocation2 + $0x158] sm:$0xff] %v3793
      %3858 = vst [vmem:[#allocation2 + $0x160] sm:$0xff] %v3794
      %3859 = vst [vmem:[#allocation2 + $0x168] sm:$0xff] %v3795
      %3860 = vst [vmem:[#allocation2 + $0x170] sm:$0xff] %v3796
      %3861 = vst [vmem:[#allocation2 + $0x178] sm:$0xff] %v3797
      %3862 = vst [vmem:[#allocation2 + $0x180] sm:$0xff] %v3798
      %3863 = vst [vmem:[#allocation2 + $0x188] sm:$0xff] %v3799
      %3864 = vst [vmem:[#allocation2 + $0x190] sm:$0xff] %v3800
      %3865 = vst [vmem:[#allocation2 + $0x198] sm:$0xff] %v3801
      %3866 = vst [vmem:[#allocation2 + $0x1a0] sm:$0xff] %v3802
      %3867 = vst [vmem:[#allocation2 + $0x1a8] sm:$0xff] %v3803
      %3868 = vst [vmem:[#allocation2 + $0x1b0] sm:$0xff] %v3804
      %3869 = vst [vmem:[#allocation2 + $0x1b8] sm:$0xff] %v3805
      %3870 = vst [vmem:[#allocation2 + $0x1c0] sm:$0xff] %v3806
      %3871 = vst [vmem:[#allocation2 + $0x1c8] sm:$0xff] %v3807
      %3872 = vst [vmem:[#allocation2 + $0x1d0] sm:$0xff] %v3808
      %3873 = vst [vmem:[#allocation2 + $0x1d8] sm:$0xff] %v3809
      %3874 = vst [vmem:[#allocation2 + $0x1e0] sm:$0xff] %v3810
      %3875 = vst [vmem:[#allocation2 + $0x1e8] sm:$0xff] %v3811
      %3876 = vst [vmem:[#allocation2 + $0x1f0] sm:$0xff] %v3812
      %3877 = vst [vmem:[#allocation2 + $0x1f8] sm:$0xff] %v3813
      %v3878 = vld [vmem:[#allocation2] sm:$0xff]
      %v3879 = vld [vmem:[#allocation2 + $0x8] sm:$0xff]
      %v3880 = vld [vmem:[#allocation2 + $0x10] sm:$0xff]
      %v3881 = vld [vmem:[#allocation2 + $0x18] sm:$0xff]
      %v3882 = vld [vmem:[#allocation2 + $0x20] sm:$0xff]
      %v3883 = vld [vmem:[#allocation2 + $0x28] sm:$0xff]
      %v3884 = vld [vmem:[#allocation2 + $0x30] sm:$0xff]
      %v3885 = vld [vmem:[#allocation2 + $0x38] sm:$0xff]
      %v3886 = vld [vmem:[#allocation2 + $0x40] sm:$0xff]
      %v3887 = vld [vmem:[#allocation2 + $0x48] sm:$0xff]
      %v3888 = vld [vmem:[#allocation2 + $0x50] sm:$0xff]
      %v3889 = vld [vmem:[#allocation2 + $0x58] sm:$0xff]
      %v3890 = vld [vmem:[#allocation2 + $0x60] sm:$0xff]
      %v3891 = vld [vmem:[#allocation2 + $0x68] sm:$0xff]
      %v3892 = vld [vmem:[#allocation2 + $0x70] sm:$0xff]
      %v3893 = vld [vmem:[#allocation2 + $0x78] sm:$0xff]
      %v3894 = vld [vmem:[#allocation2 + $0x80] sm:$0xff]
      %v3895 = vld [vmem:[#allocation2 + $0x88] sm:$0xff]
      %v3896 = vld [vmem:[#allocation2 + $0x90] sm:$0xff]
      %v3897 = vld [vmem:[#allocation2 + $0x98] sm:$0xff]
      %v3898 = vld [vmem:[#allocation2 + $0xa0] sm:$0xff]
      %v3899 = vld [vmem:[#allocation2 + $0xa8] sm:$0xff]
      %v3900 = vld [vmem:[#allocation2 + $0xb0] sm:$0xff]
      %v3901 = vld [vmem:[#allocation2 + $0xb8] sm:$0xff]
      %v3902 = vld [vmem:[#allocation2 + $0xc0] sm:$0xff]
      %v3903 = vld [vmem:[#allocation2 + $0xc8] sm:$0xff]
      %v3904 = vld [vmem:[#allocation2 + $0xd0] sm:$0xff]
      %v3905 = vld [vmem:[#allocation2 + $0xd8] sm:$0xff]
      %v3906 = vld [vmem:[#allocation2 + $0xe0] sm:$0xff]
      %v3907 = vld [vmem:[#allocation2 + $0xe8] sm:$0xff]
      %v3908 = vld [vmem:[#allocation2 + $0xf0] sm:$0xff]
      %v3909 = vld [vmem:[#allocation2 + $0xf8] sm:$0xff]
      %v3910 = vld [vmem:[#allocation2 + $0x100] sm:$0xff]
      %v3911 = vld [vmem:[#allocation2 + $0x108] sm:$0xff]
      %v3912 = vld [vmem:[#allocation2 + $0x110] sm:$0xff]
      %v3913 = vld [vmem:[#allocation2 + $0x118] sm:$0xff]
      %v3914 = vld [vmem:[#allocation2 + $0x120] sm:$0xff]
      %v3915 = vld [vmem:[#allocation2 + $0x128] sm:$0xff]
      %v3916 = vld [vmem:[#allocation2 + $0x130] sm:$0xff]
      %v3917 = vld [vmem:[#allocation2 + $0x138] sm:$0xff]
      %v3918 = vld [vmem:[#allocation2 + $0x140] sm:$0xff]
      %v3919 = vld [vmem:[#allocation2 + $0x148] sm:$0xff]
      %v3920 = vld [vmem:[#allocation2 + $0x150] sm:$0xff]
      %v3921 = vld [vmem:[#allocation2 + $0x158] sm:$0xff]
      %v3922 = vld [vmem:[#allocation2 + $0x160] sm:$0xff]
      %v3923 = vld [vmem:[#allocation2 + $0x168] sm:$0xff]
      %v3924 = vld [vmem:[#allocation2 + $0x170] sm:$0xff]
      %v3925 = vld [vmem:[#allocation2 + $0x178] sm:$0xff]
      %v3926 = vld [vmem:[#allocation2 + $0x180] sm:$0xff]
      %v3927 = vld [vmem:[#allocation2 + $0x188] sm:$0xff]
      %v3928 = vld [vmem:[#allocation2 + $0x190] sm:$0xff]
      %v3929 = vld [vmem:[#allocation2 + $0x198] sm:$0xff]
      %v3930 = vld [vmem:[#allocation2 + $0x1a0] sm:$0xff]
      %v3931 = vld [vmem:[#allocation2 + $0x1a8] sm:$0xff]
      %v3932 = vld [vmem:[#allocation2 + $0x1b0] sm:$0xff]
      %v3933 = vld [vmem:[#allocation2 + $0x1b8] sm:$0xff]
      %v3934 = vld [vmem:[#allocation2 + $0x1c0] sm:$0xff]
      %v3935 = vld [vmem:[#allocation2 + $0x1c8] sm:$0xff]
      %v3936 = vld [vmem:[#allocation2 + $0x1d0] sm:$0xff]
      %v3937 = vld [vmem:[#allocation2 + $0x1d8] sm:$0xff]
      %v3938 = vld [vmem:[#allocation2 + $0x1e0] sm:$0xff]
      %v3939 = vld [vmem:[#allocation2 + $0x1e8] sm:$0xff]
      %v3940 = vld [vmem:[#allocation2 + $0x1f0] sm:$0xff]
      %v3941 = vld [vmem:[#allocation2 + $0x1f8] sm:$0xff]
      %s3942 = scalar_lea.vmem %s1, 768
      %v3943 = vld [vmem:[%s3942] sm:$0xff]
      %v3944 = vld [vmem:[%s3942 + $0x8] sm:$0xff]
      %v3945 = vld [vmem:[%s3942 + $0x10] sm:$0xff]
      %v3946 = vld [vmem:[%s3942 + $0x18] sm:$0xff]
      %v3947 = vld [vmem:[%s3942 + $0x20] sm:$0xff]
      %v3948 = vld [vmem:[%s3942 + $0x28] sm:$0xff]
      %v3949 = vld [vmem:[%s3942 + $0x30] sm:$0xff]
      %v3950 = vld [vmem:[%s3942 + $0x38] sm:$0xff]
      %v3951 = vld [vmem:[%s3942 + $0x40] sm:$0xff]
      %v3952 = vld [vmem:[%s3942 + $0x48] sm:$0xff]
      %v3953 = vld [vmem:[%s3942 + $0x50] sm:$0xff]
      %v3954 = vld [vmem:[%s3942 + $0x58] sm:$0xff]
      %v3955 = vld [vmem:[%s3942 + $0x60] sm:$0xff]
      %v3956 = vld [vmem:[%s3942 + $0x68] sm:$0xff]
      %v3957 = vld [vmem:[%s3942 + $0x70] sm:$0xff]
      %v3958 = vld [vmem:[%s3942 + $0x78] sm:$0xff]
      %v3961 = vunpack.c.l.b16 %v286
      %v3962 = vunpack.c.l.b16 %v287
      %v3963 = vpack.c.b16 %v3962, %v3961
      %v3981 = vunpack.c.l.b16 %v3943
      %v3982 = vunpack.c.h.b16 %v3943
      %v3983 = vunpack.c.l.b16 %v3944
      %v3984 = vunpack.c.h.b16 %v3944
      %v3985 = vunpack.c.l.b16 %v3945
      %v3986 = vunpack.c.h.b16 %v3945
      %v3987 = vunpack.c.l.b16 %v3946
      %v3988 = vunpack.c.h.b16 %v3946
      %v3989 = vunpack.c.l.b16 %v3947
      %v3990 = vunpack.c.h.b16 %v3947
      %v3991 = vunpack.c.l.b16 %v3948
      %v3992 = vunpack.c.h.b16 %v3948
      %v3993 = vunpack.c.l.b16 %v3949
      %v3994 = vunpack.c.h.b16 %v3949
      %v3995 = vunpack.c.l.b16 %v3950
      %v3996 = vunpack.c.h.b16 %v3950
      %v3997 = vunpack.c.l.b16 %v3951
      %v3998 = vunpack.c.h.b16 %v3951
      %v3999 = vunpack.c.l.b16 %v3952
      %v4000 = vunpack.c.h.b16 %v3952
      %v4001 = vunpack.c.l.b16 %v3953
      %v4002 = vunpack.c.h.b16 %v3953
      %v4003 = vunpack.c.l.b16 %v3954
      %v4004 = vunpack.c.h.b16 %v3954
      %v4005 = vunpack.c.l.b16 %v3955
      %v4006 = vunpack.c.h.b16 %v3955
      %v4007 = vunpack.c.l.b16 %v3956
      %v4008 = vunpack.c.h.b16 %v3956
      %v4009 = vunpack.c.l.b16 %v3957
      %v4010 = vunpack.c.h.b16 %v3957
      %v4011 = vunpack.c.l.b16 %v3958
      %v4012 = vunpack.c.h.b16 %v3958
      %v4013 = vpack.c.b16 %v3983, %v3981
      %v4014 = vpack.c.b16 %v3984, %v3982
      %v4015 = vpack.c.b16 %v3987, %v3985
      %v4016 = vpack.c.b16 %v3988, %v3986
      %v4017 = vpack.c.b16 %v3991, %v3989
      %v4018 = vpack.c.b16 %v3992, %v3990
      %v4019 = vpack.c.b16 %v3995, %v3993
      %v4020 = vpack.c.b16 %v3996, %v3994
      %v4021 = vpack.c.b16 %v3999, %v3997
      %v4022 = vpack.c.b16 %v4000, %v3998
      %v4023 = vpack.c.b16 %v4003, %v4001
      %v4024 = vpack.c.b16 %v4004, %v4002
      %v4025 = vpack.c.b16 %v4007, %v4005
      %v4026 = vpack.c.b16 %v4008, %v4006
      %v4027 = vpack.c.b16 %v4011, %v4009
      %v4028 = vpack.c.b16 %v4012, %v4010
      %4045 = vmatpush.bf16.msra.mxu0 %v4027
      %4046 = vmatpush.bf16.msra.mxu0 %v4025
      %4047 = vmatpush.bf16.msra.mxu0 %v4023
      %4048 = vmatpush.bf16.msra.mxu0 %v4021
      %4049 = vmatpush.bf16.msra.mxu0 %v4019
      %4050 = vmatpush.bf16.msra.mxu0 %v4017
      %4051 = vmatpush.bf16.msra.mxu0 %v4015
      %4052 = vmatpush.bf16.msra.mxu0 %v4013
      %4053 = vmatmul.bf16.gmra.mxu0 %v435
      %v4054 = vpop.f32.mrf.mxu0
      %v4055 = vadd.f32 0.0, %v4054
      %v4056 = vpop.f32.mrf.mxu0
      %v4057 = vadd.f32 0.0, %v4056
      %4058 = vmatmul.bf16.gmra.mxu0 %v436
      %v4059 = vpop.f32.mrf.mxu0
      %v4060 = vadd.f32 0.0, %v4059
      %v4061 = vpop.f32.mrf.mxu0
      %v4062 = vadd.f32 0.0, %v4061
      %4063 = vmatmul.bf16.gmra.mxu0 %v437
      %v4064 = vpop.f32.mrf.mxu0
      %v4065 = vadd.f32 0.0, %v4064
      %v4066 = vpop.f32.mrf.mxu0
      %v4067 = vadd.f32 0.0, %v4066
      %4068 = vmatmul.bf16.gmra.mxu0 %v438
      %v4069 = vpop.f32.mrf.mxu0
      %v4070 = vadd.f32 0.0, %v4069
      %v4071 = vpop.f32.mrf.mxu0
      %v4072 = vadd.f32 0.0, %v4071
      %4073 = vmatmul.bf16.gmra.mxu0 %v439
      %v4074 = vpop.f32.mrf.mxu0
      %v4075 = vadd.f32 0.0, %v4074
      %v4076 = vpop.f32.mrf.mxu0
      %v4077 = vadd.f32 0.0, %v4076
      %4078 = vmatmul.bf16.gmra.mxu0 %v440
      %v4079 = vpop.f32.mrf.mxu0
      %v4080 = vadd.f32 0.0, %v4079
      %v4081 = vpop.f32.mrf.mxu0
      %v4082 = vadd.f32 0.0, %v4081
      %4083 = vmatmul.bf16.gmra.mxu0 %v441
      %v4084 = vpop.f32.mrf.mxu0
      %v4085 = vadd.f32 0.0, %v4084
      %v4086 = vpop.f32.mrf.mxu0
      %v4087 = vadd.f32 0.0, %v4086
      %4088 = vmatmul.bf16.gmra.mxu0 %v442
      %v4089 = vpop.f32.mrf.mxu0
      %v4090 = vadd.f32 0.0, %v4089
      %v4091 = vpop.f32.mrf.mxu0
      %v4092 = vadd.f32 0.0, %v4091
      %4093 = vmatmul.bf16.gmra.mxu0 %v443
      %v4094 = vpop.f32.mrf.mxu0
      %v4095 = vadd.f32 0.0, %v4094
      %v4096 = vpop.f32.mrf.mxu0
      %v4097 = vadd.f32 0.0, %v4096
      %4098 = vmatmul.bf16.gmra.mxu0 %v444
      %v4099 = vpop.f32.mrf.mxu0
      %v4100 = vadd.f32 0.0, %v4099
      %v4101 = vpop.f32.mrf.mxu0
      %v4102 = vadd.f32 0.0, %v4101
      %4103 = vmatmul.bf16.gmra.mxu0 %v445
      %v4104 = vpop.f32.mrf.mxu0
      %v4105 = vadd.f32 0.0, %v4104
      %v4106 = vpop.f32.mrf.mxu0
      %v4107 = vadd.f32 0.0, %v4106
      %4108 = vmatmul.bf16.gmra.mxu0 %v446
      %v4109 = vpop.f32.mrf.mxu0
      %v4110 = vadd.f32 0.0, %v4109
      %v4111 = vpop.f32.mrf.mxu0
      %v4112 = vadd.f32 0.0, %v4111
      %4113 = vmatmul.bf16.gmra.mxu0 %v447
      %v4114 = vpop.f32.mrf.mxu0
      %v4115 = vadd.f32 0.0, %v4114
      %v4116 = vpop.f32.mrf.mxu0
      %v4117 = vadd.f32 0.0, %v4116
      %4118 = vmatmul.bf16.gmra.mxu0 %v448
      %v4119 = vpop.f32.mrf.mxu0
      %v4120 = vadd.f32 0.0, %v4119
      %v4121 = vpop.f32.mrf.mxu0
      %v4122 = vadd.f32 0.0, %v4121
      %4123 = vmatmul.bf16.gmra.mxu0 %v2516
      %v4124 = vpop.f32.mrf.mxu0
      %v4125 = vadd.f32 0.0, %v4124
      %v4126 = vpop.f32.mrf.mxu0
      %v4127 = vadd.f32 0.0, %v4126
      %4128 = vmatmul.bf16.gmra.mxu0 %v3963
      %v4129 = vpop.f32.mrf.mxu0
      %v4130 = vadd.f32 0.0, %v4129
      %v4131 = vpop.f32.mrf.mxu0
      %v4132 = vadd.f32 0.0, %v4131
      %4133 = vdwg.mxu0
      %4134 = vmatpush.bf16.msra.mxu0 %v4028
      %4135 = vmatpush.bf16.msra.mxu0 %v4026
      %4136 = vmatpush.bf16.msra.mxu0 %v4024
      %4137 = vmatpush.bf16.msra.mxu0 %v4022
      %4138 = vmatpush.bf16.msra.mxu0 %v4020
      %4139 = vmatpush.bf16.msra.mxu0 %v4018
      %4140 = vmatpush.bf16.msra.mxu0 %v4016
      %4141 = vmatpush.bf16.msra.mxu0 %v4014
      %4142 = vmatmul.bf16.gmra.mxu0 %v435
      %v4143 = vpop.f32.mrf.mxu0
      %v4144 = vadd.f32 0.0, %v4143
      %v4145 = vpop.f32.mrf.mxu0
      %v4146 = vadd.f32 0.0, %v4145
      %4147 = vmatmul.bf16.gmra.mxu0 %v436
      %v4148 = vpop.f32.mrf.mxu0
      %v4149 = vadd.f32 0.0, %v4148
      %v4150 = vpop.f32.mrf.mxu0
      %v4151 = vadd.f32 0.0, %v4150
      %4152 = vmatmul.bf16.gmra.mxu0 %v437
      %v4153 = vpop.f32.mrf.mxu0
      %v4154 = vadd.f32 0.0, %v4153
      %v4155 = vpop.f32.mrf.mxu0
      %v4156 = vadd.f32 0.0, %v4155
      %4157 = vmatmul.bf16.gmra.mxu0 %v438
      %v4158 = vpop.f32.mrf.mxu0
      %v4159 = vadd.f32 0.0, %v4158
      %v4160 = vpop.f32.mrf.mxu0
      %v4161 = vadd.f32 0.0, %v4160
      %4162 = vmatmul.bf16.gmra.mxu0 %v439
      %v4163 = vpop.f32.mrf.mxu0
      %v4164 = vadd.f32 0.0, %v4163
      %v4165 = vpop.f32.mrf.mxu0
      %v4166 = vadd.f32 0.0, %v4165
      %4167 = vmatmul.bf16.gmra.mxu0 %v440
      %v4168 = vpop.f32.mrf.mxu0
      %v4169 = vadd.f32 0.0, %v4168
      %v4170 = vpop.f32.mrf.mxu0
      %v4171 = vadd.f32 0.0, %v4170
      %4172 = vmatmul.bf16.gmra.mxu0 %v441
      %v4173 = vpop.f32.mrf.mxu0
      %v4174 = vadd.f32 0.0, %v4173
      %v4175 = vpop.f32.mrf.mxu0
      %v4176 = vadd.f32 0.0, %v4175
      %4177 = vmatmul.bf16.gmra.mxu0 %v442
      %v4178 = vpop.f32.mrf.mxu0
      %v4179 = vadd.f32 0.0, %v4178
      %v4180 = vpop.f32.mrf.mxu0
      %v4181 = vadd.f32 0.0, %v4180
      %4182 = vmatmul.bf16.gmra.mxu0 %v443
      %v4183 = vpop.f32.mrf.mxu0
      %v4184 = vadd.f32 0.0, %v4183
      %v4185 = vpop.f32.mrf.mxu0
      %v4186 = vadd.f32 0.0, %v4185
      %4187 = vmatmul.bf16.gmra.mxu0 %v444
      %v4188 = vpop.f32.mrf.mxu0
      %v4189 = vadd.f32 0.0, %v4188
      %v4190 = vpop.f32.mrf.mxu0
      %v4191 = vadd.f32 0.0, %v4190
      %4192 = vmatmul.bf16.gmra.mxu0 %v445
      %v4193 = vpop.f32.mrf.mxu0
      %v4194 = vadd.f32 0.0, %v4193
      %v4195 = vpop.f32.mrf.mxu0
      %v4196 = vadd.f32 0.0, %v4195
      %4197 = vmatmul.bf16.gmra.mxu0 %v446
      %v4198 = vpop.f32.mrf.mxu0
      %v4199 = vadd.f32 0.0, %v4198
      %v4200 = vpop.f32.mrf.mxu0
      %v4201 = vadd.f32 0.0, %v4200
      %4202 = vmatmul.bf16.gmra.mxu0 %v447
      %v4203 = vpop.f32.mrf.mxu0
      %v4204 = vadd.f32 0.0, %v4203
      %v4205 = vpop.f32.mrf.mxu0
      %v4206 = vadd.f32 0.0, %v4205
      %4207 = vmatmul.bf16.gmra.mxu0 %v448
      %v4208 = vpop.f32.mrf.mxu0
      %v4209 = vadd.f32 0.0, %v4208
      %v4210 = vpop.f32.mrf.mxu0
      %v4211 = vadd.f32 0.0, %v4210
      %4212 = vmatmul.bf16.gmra.mxu0 %v2516
      %v4213 = vpop.f32.mrf.mxu0
      %v4214 = vadd.f32 0.0, %v4213
      %v4215 = vpop.f32.mrf.mxu0
      %v4216 = vadd.f32 0.0, %v4215
      %4217 = vmatmul.bf16.gmra.mxu0 %v3963
      %v4218 = vpop.f32.mrf.mxu0
      %v4219 = vadd.f32 0.0, %v4218
      %v4220 = vpop.f32.mrf.mxu0
      %v4221 = vadd.f32 0.0, %v4220
      %4222 = vdwg.mxu0
      %v4223 = vadd.f32 %v3878, %v4055
      %v4224 = vadd.f32 %v3879, %v4144
      %v4225 = vadd.f32 %v3880, %v4057
      %v4226 = vadd.f32 %v3881, %v4146
      %v4227 = vadd.f32 %v3882, %v4060
      %v4228 = vadd.f32 %v3883, %v4149
      %v4229 = vadd.f32 %v3884, %v4062
      %v4230 = vadd.f32 %v3885, %v4151
      %v4231 = vadd.f32 %v3886, %v4065
      %v4232 = vadd.f32 %v3887, %v4154
      %v4233 = vadd.f32 %v3888, %v4067
      %v4234 = vadd.f32 %v3889, %v4156
      %v4235 = vadd.f32 %v3890, %v4070
      %v4236 = vadd.f32 %v3891, %v4159
      %v4237 = vadd.f32 %v3892, %v4072
      %v4238 = vadd.f32 %v3893, %v4161
      %v4239 = vadd.f32 %v3894, %v4075
      %v4240 = vadd.f32 %v3895, %v4164
      %v4241 = vadd.f32 %v3896, %v4077
      %v4242 = vadd.f32 %v3897, %v4166
      %v4243 = vadd.f32 %v3898, %v4080
      %v4244 = vadd.f32 %v3899, %v4169
      %v4245 = vadd.f32 %v3900, %v4082
      %v4246 = vadd.f32 %v3901, %v4171
      %v4247 = vadd.f32 %v3902, %v4085
      %v4248 = vadd.f32 %v3903, %v4174
      %v4249 = vadd.f32 %v3904, %v4087
      %v4250 = vadd.f32 %v3905, %v4176
      %v4251 = vadd.f32 %v3906, %v4090
      %v4252 = vadd.f32 %v3907, %v4179
      %v4253 = vadd.f32 %v3908, %v4092
      %v4254 = vadd.f32 %v3909, %v4181
      %v4255 = vadd.f32 %v3910, %v4095
      %v4256 = vadd.f32 %v3911, %v4184
      %v4257 = vadd.f32 %v3912, %v4097
      %v4258 = vadd.f32 %v3913, %v4186
      %v4259 = vadd.f32 %v3914, %v4100
      %v4260 = vadd.f32 %v3915, %v4189
      %v4261 = vadd.f32 %v3916, %v4102
      %v4262 = vadd.f32 %v3917, %v4191
      %v4263 = vadd.f32 %v3918, %v4105
      %v4264 = vadd.f32 %v3919, %v4194
      %v4265 = vadd.f32 %v3920, %v4107
      %v4266 = vadd.f32 %v3921, %v4196
      %v4267 = vadd.f32 %v3922, %v4110
      %v4268 = vadd.f32 %v3923, %v4199
      %v4269 = vadd.f32 %v3924, %v4112
      %v4270 = vadd.f32 %v3925, %v4201
      %v4271 = vadd.f32 %v3926, %v4115
      %v4272 = vadd.f32 %v3927, %v4204
      %v4273 = vadd.f32 %v3928, %v4117
      %v4274 = vadd.f32 %v3929, %v4206
      %v4275 = vadd.f32 %v3930, %v4120
      %v4276 = vadd.f32 %v3931, %v4209
      %v4277 = vadd.f32 %v3932, %v4122
      %v4278 = vadd.f32 %v3933, %v4211
      %v4279 = vadd.f32 %v3934, %v4125
      %v4280 = vadd.f32 %v3935, %v4214
      %v4281 = vadd.f32 %v3936, %v4127
      %v4282 = vadd.f32 %v3937, %v4216
      %v4283 = vadd.f32 %v3938, %v4130
      %v4284 = vadd.f32 %v3939, %v4219
      %v4285 = vadd.f32 %v3940, %v4132
      %v4286 = vadd.f32 %v3941, %v4221
      %4287 = vst [vmem:[#allocation2] sm:$0xff] %v4223
      %4288 = vst [vmem:[#allocation2 + $0x8] sm:$0xff] %v4224
      %4289 = vst [vmem:[#allocation2 + $0x10] sm:$0xff] %v4225
      %4290 = vst [vmem:[#allocation2 + $0x18] sm:$0xff] %v4226
      %4291 = vst [vmem:[#allocation2 + $0x20] sm:$0xff] %v4227
      %4292 = vst [vmem:[#allocation2 + $0x28] sm:$0xff] %v4228
      %4293 = vst [vmem:[#allocation2 + $0x30] sm:$0xff] %v4229
      %4294 = vst [vmem:[#allocation2 + $0x38] sm:$0xff] %v4230
      %4295 = vst [vmem:[#allocation2 + $0x40] sm:$0xff] %v4231
      %4296 = vst [vmem:[#allocation2 + $0x48] sm:$0xff] %v4232
      %4297 = vst [vmem:[#allocation2 + $0x50] sm:$0xff] %v4233
      %4298 = vst [vmem:[#allocation2 + $0x58] sm:$0xff] %v4234
      %4299 = vst [vmem:[#allocation2 + $0x60] sm:$0xff] %v4235
      %4300 = vst [vmem:[#allocation2 + $0x68] sm:$0xff] %v4236
      %4301 = vst [vmem:[#allocation2 + $0x70] sm:$0xff] %v4237
      %4302 = vst [vmem:[#allocation2 + $0x78] sm:$0xff] %v4238
      %4303 = vst [vmem:[#allocation2 + $0x80] sm:$0xff] %v4239
      %4304 = vst [vmem:[#allocation2 + $0x88] sm:$0xff] %v4240
      %4305 = vst [vmem:[#allocation2 + $0x90] sm:$0xff] %v4241
      %4306 = vst [vmem:[#allocation2 + $0x98] sm:$0xff] %v4242
      %4307 = vst [vmem:[#allocation2 + $0xa0] sm:$0xff] %v4243
      %4308 = vst [vmem:[#allocation2 + $0xa8] sm:$0xff] %v4244
      %4309 = vst [vmem:[#allocation2 + $0xb0] sm:$0xff] %v4245
      %4310 = vst [vmem:[#allocation2 + $0xb8] sm:$0xff] %v4246
      %4311 = vst [vmem:[#allocation2 + $0xc0] sm:$0xff] %v4247
      %4312 = vst [vmem:[#allocation2 + $0xc8] sm:$0xff] %v4248
      %4313 = vst [vmem:[#allocation2 + $0xd0] sm:$0xff] %v4249
      %4314 = vst [vmem:[#allocation2 + $0xd8] sm:$0xff] %v4250
      %4315 = vst [vmem:[#allocation2 + $0xe0] sm:$0xff] %v4251
      %4316 = vst [vmem:[#allocation2 + $0xe8] sm:$0xff] %v4252
      %4317 = vst [vmem:[#allocation2 + $0xf0] sm:$0xff] %v4253
      %4318 = vst [vmem:[#allocation2 + $0xf8] sm:$0xff] %v4254
      %4319 = vst [vmem:[#allocation2 + $0x100] sm:$0xff] %v4255
      %4320 = vst [vmem:[#allocation2 + $0x108] sm:$0xff] %v4256
      %4321 = vst [vmem:[#allocation2 + $0x110] sm:$0xff] %v4257
      %4322 = vst [vmem:[#allocation2 + $0x118] sm:$0xff] %v4258
      %4323 = vst [vmem:[#allocation2 + $0x120] sm:$0xff] %v4259
      %4324 = vst [vmem:[#allocation2 + $0x128] sm:$0xff] %v4260
      %4325 = vst [vmem:[#allocation2 + $0x130] sm:$0xff] %v4261
      %4326 = vst [vmem:[#allocation2 + $0x138] sm:$0xff] %v4262
      %4327 = vst [vmem:[#allocation2 + $0x140] sm:$0xff] %v4263
      %4328 = vst [vmem:[#allocation2 + $0x148] sm:$0xff] %v4264
      %4329 = vst [vmem:[#allocation2 + $0x150] sm:$0xff] %v4265
      %4330 = vst [vmem:[#allocation2 + $0x158] sm:$0xff] %v4266
      %4331 = vst [vmem:[#allocation2 + $0x160] sm:$0xff] %v4267
      %4332 = vst [vmem:[#allocation2 + $0x168] sm:$0xff] %v4268
      %4333 = vst [vmem:[#allocation2 + $0x170] sm:$0xff] %v4269
      %4334 = vst [vmem:[#allocation2 + $0x178] sm:$0xff] %v4270
      %4335 = vst [vmem:[#allocation2 + $0x180] sm:$0xff] %v4271
      %4336 = vst [vmem:[#allocation2 + $0x188] sm:$0xff] %v4272
      %4337 = vst [vmem:[#allocation2 + $0x190] sm:$0xff] %v4273
      %4338 = vst [vmem:[#allocation2 + $0x198] sm:$0xff] %v4274
      %4339 = vst [vmem:[#allocation2 + $0x1a0] sm:$0xff] %v4275
      %4340 = vst [vmem:[#allocation2 + $0x1a8] sm:$0xff] %v4276
      %4341 = vst [vmem:[#allocation2 + $0x1b0] sm:$0xff] %v4277
      %4342 = vst [vmem:[#allocation2 + $0x1b8] sm:$0xff] %v4278
      %4343 = vst [vmem:[#allocation2 + $0x1c0] sm:$0xff] %v4279
      %4344 = vst [vmem:[#allocation2 + $0x1c8] sm:$0xff] %v4280
      %4345 = vst [vmem:[#allocation2 + $0x1d0] sm:$0xff] %v4281
      %4346 = vst [vmem:[#allocation2 + $0x1d8] sm:$0xff] %v4282
      %4347 = vst [vmem:[#allocation2 + $0x1e0] sm:$0xff] %v4283
      %4348 = vst [vmem:[#allocation2 + $0x1e8] sm:$0xff] %v4284
      %4349 = vst [vmem:[#allocation2 + $0x1f0] sm:$0xff] %v4285
      %4350 = vst [vmem:[#allocation2 + $0x1f8] sm:$0xff] %v4286
      %v4352 = vshrl.u32 %v286, 16
      %v4354 = vrot.slane %v4352, 4
      %v4355 = vshll.u32 %v286, 16
      %v4357 = vrot.slane %v4355, 5
      %v4358 = vor.u32 %v4354, %v4357
      %v4359 = vrot.slane %v4358, 4
      %v4361 = vshll.u32 %v287, 16
      %v4363 = vrot.slane %v4361, 5
      %v4364 = vsel %vm853, %v4359, %v4363
      %v4365 = vshrl.u32 %v287, 16
      %v4367 = vrot.slane %v4365, 4
      %v4368 = vor.u32 %v4367, %v4363
      %v4369 = vrot.slane %v4368, 4
      %v4371 = vshll.u32 %v288, 16
      %v4373 = vrot.slane %v4371, 5
      %v4374 = vsel %vm853, %v4369, %v4373
      %v4375 = vld [vmem:[#allocation2] sm:$0xff]
      %v4376 = vld [vmem:[#allocation2 + $0x8] sm:$0xff]
      %v4377 = vld [vmem:[#allocation2 + $0x10] sm:$0xff]
      %v4378 = vld [vmem:[#allocation2 + $0x18] sm:$0xff]
      %v4379 = vld [vmem:[#allocation2 + $0x20] sm:$0xff]
      %v4380 = vld [vmem:[#allocation2 + $0x28] sm:$0xff]
      %v4381 = vld [vmem:[#allocation2 + $0x30] sm:$0xff]
      %v4382 = vld [vmem:[#allocation2 + $0x38] sm:$0xff]
      %v4383 = vld [vmem:[#allocation2 + $0x40] sm:$0xff]
      %v4384 = vld [vmem:[#allocation2 + $0x48] sm:$0xff]
      %v4385 = vld [vmem:[#allocation2 + $0x50] sm:$0xff]
      %v4386 = vld [vmem:[#allocation2 + $0x58] sm:$0xff]
      %v4387 = vld [vmem:[#allocation2 + $0x60] sm:$0xff]
      %v4388 = vld [vmem:[#allocation2 + $0x68] sm:$0xff]
      %v4389 = vld [vmem:[#allocation2 + $0x70] sm:$0xff]
      %v4390 = vld [vmem:[#allocation2 + $0x78] sm:$0xff]
      %v4391 = vld [vmem:[#allocation2 + $0x80] sm:$0xff]
      %v4392 = vld [vmem:[#allocation2 + $0x88] sm:$0xff]
      %v4393 = vld [vmem:[#allocation2 + $0x90] sm:$0xff]
      %v4394 = vld [vmem:[#allocation2 + $0x98] sm:$0xff]
      %v4395 = vld [vmem:[#allocation2 + $0xa0] sm:$0xff]
      %v4396 = vld [vmem:[#allocation2 + $0xa8] sm:$0xff]
      %v4397 = vld [vmem:[#allocation2 + $0xb0] sm:$0xff]
      %v4398 = vld [vmem:[#allocation2 + $0xb8] sm:$0xff]
      %v4399 = vld [vmem:[#allocation2 + $0xc0] sm:$0xff]
      %v4400 = vld [vmem:[#allocation2 + $0xc8] sm:$0xff]
      %v4401 = vld [vmem:[#allocation2 + $0xd0] sm:$0xff]
      %v4402 = vld [vmem:[#allocation2 + $0xd8] sm:$0xff]
      %v4403 = vld [vmem:[#allocation2 + $0xe0] sm:$0xff]
      %v4404 = vld [vmem:[#allocation2 + $0xe8] sm:$0xff]
      %v4405 = vld [vmem:[#allocation2 + $0xf0] sm:$0xff]
      %v4406 = vld [vmem:[#allocation2 + $0xf8] sm:$0xff]
      %v4407 = vld [vmem:[#allocation2 + $0x100] sm:$0xff]
      %v4408 = vld [vmem:[#allocation2 + $0x108] sm:$0xff]
      %v4409 = vld [vmem:[#allocation2 + $0x110] sm:$0xff]
      %v4410 = vld [vmem:[#allocation2 + $0x118] sm:$0xff]
      %v4411 = vld [vmem:[#allocation2 + $0x120] sm:$0xff]
      %v4412 = vld [vmem:[#allocation2 + $0x128] sm:$0xff]
      %v4413 = vld [vmem:[#allocation2 + $0x130] sm:$0xff]
      %v4414 = vld [vmem:[#allocation2 + $0x138] sm:$0xff]
      %v4415 = vld [vmem:[#allocation2 + $0x140] sm:$0xff]
      %v4416 = vld [vmem:[#allocation2 + $0x148] sm:$0xff]
      %v4417 = vld [vmem:[#allocation2 + $0x150] sm:$0xff]
      %v4418 = vld [vmem:[#allocation2 + $0x158] sm:$0xff]
      %v4419 = vld [vmem:[#allocation2 + $0x160] sm:$0xff]
      %v4420 = vld [vmem:[#allocation2 + $0x168] sm:$0xff]
      %v4421 = vld [vmem:[#allocation2 + $0x170] sm:$0xff]
      %v4422 = vld [vmem:[#allocation2 + $0x178] sm:$0xff]
      %v4423 = vld [vmem:[#allocation2 + $0x180] sm:$0xff]
      %v4424 = vld [vmem:[#allocation2 + $0x188] sm:$0xff]
      %v4425 = vld [vmem:[#allocation2 + $0x190] sm:$0xff]
      %v4426 = vld [vmem:[#allocation2 + $0x198] sm:$0xff]
      %v4427 = vld [vmem:[#allocation2 + $0x1a0] sm:$0xff]
      %v4428 = vld [vmem:[#allocation2 + $0x1a8] sm:$0xff]
      %v4429 = vld [vmem:[#allocation2 + $0x1b0] sm:$0xff]
      %v4430 = vld [vmem:[#allocation2 + $0x1b8] sm:$0xff]
      %v4431 = vld [vmem:[#allocation2 + $0x1c0] sm:$0xff]
      %v4432 = vld [vmem:[#allocation2 + $0x1c8] sm:$0xff]
      %v4433 = vld [vmem:[#allocation2 + $0x1d0] sm:$0xff]
      %v4434 = vld [vmem:[#allocation2 + $0x1d8] sm:$0xff]
      %v4435 = vld [vmem:[#allocation2 + $0x1e0] sm:$0xff]
      %v4436 = vld [vmem:[#allocation2 + $0x1e8] sm:$0xff]
      %v4437 = vld [vmem:[#allocation2 + $0x1f0] sm:$0xff]
      %v4438 = vld [vmem:[#allocation2 + $0x1f8] sm:$0xff]
      %s4439 = scalar_lea.vmem %s1, 896
      %v4440 = vld [vmem:[%s4439] sm:$0xff]
      %v4441 = vld [vmem:[%s4439 + $0x8] sm:$0xff]
      %v4442 = vld [vmem:[%s4439 + $0x10] sm:$0xff]
      %v4443 = vld [vmem:[%s4439 + $0x18] sm:$0xff]
      %v4444 = vld [vmem:[%s4439 + $0x20] sm:$0xff]
      %v4445 = vld [vmem:[%s4439 + $0x28] sm:$0xff]
      %v4446 = vld [vmem:[%s4439 + $0x30] sm:$0xff]
      %v4447 = vld [vmem:[%s4439 + $0x38] sm:$0xff]
      %v4448 = vld [vmem:[%s4439 + $0x40] sm:$0xff]
      %v4449 = vld [vmem:[%s4439 + $0x48] sm:$0xff]
      %v4450 = vld [vmem:[%s4439 + $0x50] sm:$0xff]
      %v4451 = vld [vmem:[%s4439 + $0x58] sm:$0xff]
      %v4452 = vld [vmem:[%s4439 + $0x60] sm:$0xff]
      %v4453 = vld [vmem:[%s4439 + $0x68] sm:$0xff]
      %v4454 = vld [vmem:[%s4439 + $0x70] sm:$0xff]
      %v4455 = vld [vmem:[%s4439 + $0x78] sm:$0xff]
      %v4456 = vunpack.c.l.b16 %v4364
      %v4457 = vunpack.c.l.b16 %v4374
      %v4458 = vpack.c.b16 %v4457, %v4456
      %v4476 = vunpack.c.l.b16 %v4440
      %v4477 = vunpack.c.h.b16 %v4440
      %v4478 = vunpack.c.l.b16 %v4441
      %v4479 = vunpack.c.h.b16 %v4441
      %v4480 = vunpack.c.l.b16 %v4442
      %v4481 = vunpack.c.h.b16 %v4442
      %v4482 = vunpack.c.l.b16 %v4443
      %v4483 = vunpack.c.h.b16 %v4443
      %v4484 = vunpack.c.l.b16 %v4444
      %v4485 = vunpack.c.h.b16 %v4444
      %v4486 = vunpack.c.l.b16 %v4445
      %v4487 = vunpack.c.h.b16 %v4445
      %v4488 = vunpack.c.l.b16 %v4446
      %v4489 = vunpack.c.h.b16 %v4446
      %v4490 = vunpack.c.l.b16 %v4447
      %v4491 = vunpack.c.h.b16 %v4447
      %v4492 = vunpack.c.l.b16 %v4448
      %v4493 = vunpack.c.h.b16 %v4448
      %v4494 = vunpack.c.l.b16 %v4449
      %v4495 = vunpack.c.h.b16 %v4449
      %v4496 = vunpack.c.l.b16 %v4450
      %v4497 = vunpack.c.h.b16 %v4450
      %v4498 = vunpack.c.l.b16 %v4451
      %v4499 = vunpack.c.h.b16 %v4451
      %v4500 = vunpack.c.l.b16 %v4452
      %v4501 = vunpack.c.h.b16 %v4452
      %v4502 = vunpack.c.l.b16 %v4453
      %v4503 = vunpack.c.h.b16 %v4453
      %v4504 = vunpack.c.l.b16 %v4454
      %v4505 = vunpack.c.h.b16 %v4454
      %v4506 = vunpack.c.l.b16 %v4455
      %v4507 = vunpack.c.h.b16 %v4455
      %v4508 = vpack.c.b16 %v4478, %v4476
      %v4509 = vpack.c.b16 %v4479, %v4477
      %v4510 = vpack.c.b16 %v4482, %v4480
      %v4511 = vpack.c.b16 %v4483, %v4481
      %v4512 = vpack.c.b16 %v4486, %v4484
      %v4513 = vpack.c.b16 %v4487, %v4485
      %v4514 = vpack.c.b16 %v4490, %v4488
      %v4515 = vpack.c.b16 %v4491, %v4489
      %v4516 = vpack.c.b16 %v4494, %v4492
      %v4517 = vpack.c.b16 %v4495, %v4493
      %v4518 = vpack.c.b16 %v4498, %v4496
      %v4519 = vpack.c.b16 %v4499, %v4497
      %v4520 = vpack.c.b16 %v4502, %v4500
      %v4521 = vpack.c.b16 %v4503, %v4501
      %v4522 = vpack.c.b16 %v4506, %v4504
      %v4523 = vpack.c.b16 %v4507, %v4505
      %4540 = vmatpush.bf16.msra.mxu0 %v4522
      %4541 = vmatpush.bf16.msra.mxu0 %v4520
      %4542 = vmatpush.bf16.msra.mxu0 %v4518
      %4543 = vmatpush.bf16.msra.mxu0 %v4516
      %4544 = vmatpush.bf16.msra.mxu0 %v4514
      %4545 = vmatpush.bf16.msra.mxu0 %v4512
      %4546 = vmatpush.bf16.msra.mxu0 %v4510
      %4547 = vmatpush.bf16.msra.mxu0 %v4508
      %4548 = vmatmul.bf16.gmra.mxu0 %v1353
      %v4549 = vpop.f32.mrf.mxu0
      %v4550 = vadd.f32 0.0, %v4549
      %v4551 = vpop.f32.mrf.mxu0
      %v4552 = vadd.f32 0.0, %v4551
      %4553 = vmatmul.bf16.gmra.mxu0 %v1354
      %v4554 = vpop.f32.mrf.mxu0
      %v4555 = vadd.f32 0.0, %v4554
      %v4556 = vpop.f32.mrf.mxu0
      %v4557 = vadd.f32 0.0, %v4556
      %4558 = vmatmul.bf16.gmra.mxu0 %v1355
      %v4559 = vpop.f32.mrf.mxu0
      %v4560 = vadd.f32 0.0, %v4559
      %v4561 = vpop.f32.mrf.mxu0
      %v4562 = vadd.f32 0.0, %v4561
      %4563 = vmatmul.bf16.gmra.mxu0 %v1356
      %v4564 = vpop.f32.mrf.mxu0
      %v4565 = vadd.f32 0.0, %v4564
      %v4566 = vpop.f32.mrf.mxu0
      %v4567 = vadd.f32 0.0, %v4566
      %4568 = vmatmul.bf16.gmra.mxu0 %v1357
      %v4569 = vpop.f32.mrf.mxu0
      %v4570 = vadd.f32 0.0, %v4569
      %v4571 = vpop.f32.mrf.mxu0
      %v4572 = vadd.f32 0.0, %v4571
      %4573 = vmatmul.bf16.gmra.mxu0 %v1358
      %v4574 = vpop.f32.mrf.mxu0
      %v4575 = vadd.f32 0.0, %v4574
      %v4576 = vpop.f32.mrf.mxu0
      %v4577 = vadd.f32 0.0, %v4576
      %4578 = vmatmul.bf16.gmra.mxu0 %v1359
      %v4579 = vpop.f32.mrf.mxu0
      %v4580 = vadd.f32 0.0, %v4579
      %v4581 = vpop.f32.mrf.mxu0
      %v4582 = vadd.f32 0.0, %v4581
      %4583 = vmatmul.bf16.gmra.mxu0 %v1360
      %v4584 = vpop.f32.mrf.mxu0
      %v4585 = vadd.f32 0.0, %v4584
      %v4586 = vpop.f32.mrf.mxu0
      %v4587 = vadd.f32 0.0, %v4586
      %4588 = vmatmul.bf16.gmra.mxu0 %v1361
      %v4589 = vpop.f32.mrf.mxu0
      %v4590 = vadd.f32 0.0, %v4589
      %v4591 = vpop.f32.mrf.mxu0
      %v4592 = vadd.f32 0.0, %v4591
      %4593 = vmatmul.bf16.gmra.mxu0 %v1362
      %v4594 = vpop.f32.mrf.mxu0
      %v4595 = vadd.f32 0.0, %v4594
      %v4596 = vpop.f32.mrf.mxu0
      %v4597 = vadd.f32 0.0, %v4596
      %4598 = vmatmul.bf16.gmra.mxu0 %v1363
      %v4599 = vpop.f32.mrf.mxu0
      %v4600 = vadd.f32 0.0, %v4599
      %v4601 = vpop.f32.mrf.mxu0
      %v4602 = vadd.f32 0.0, %v4601
      %4603 = vmatmul.bf16.gmra.mxu0 %v1364
      %v4604 = vpop.f32.mrf.mxu0
      %v4605 = vadd.f32 0.0, %v4604
      %v4606 = vpop.f32.mrf.mxu0
      %v4607 = vadd.f32 0.0, %v4606
      %4608 = vmatmul.bf16.gmra.mxu0 %v1365
      %v4609 = vpop.f32.mrf.mxu0
      %v4610 = vadd.f32 0.0, %v4609
      %v4611 = vpop.f32.mrf.mxu0
      %v4612 = vadd.f32 0.0, %v4611
      %4613 = vmatmul.bf16.gmra.mxu0 %v1366
      %v4614 = vpop.f32.mrf.mxu0
      %v4615 = vadd.f32 0.0, %v4614
      %v4616 = vpop.f32.mrf.mxu0
      %v4617 = vadd.f32 0.0, %v4616
      %4618 = vmatmul.bf16.gmra.mxu0 %v3011
      %v4619 = vpop.f32.mrf.mxu0
      %v4620 = vadd.f32 0.0, %v4619
      %v4621 = vpop.f32.mrf.mxu0
      %v4622 = vadd.f32 0.0, %v4621
      %4623 = vmatmul.bf16.gmra.mxu0 %v4458
      %v4624 = vpop.f32.mrf.mxu0
      %v4625 = vadd.f32 0.0, %v4624
      %v4626 = vpop.f32.mrf.mxu0
      %v4627 = vadd.f32 0.0, %v4626
      %4628 = vdwg.mxu0
      %4629 = vmatpush.bf16.msra.mxu0 %v4523
      %4630 = vmatpush.bf16.msra.mxu0 %v4521
      %4631 = vmatpush.bf16.msra.mxu0 %v4519
      %4632 = vmatpush.bf16.msra.mxu0 %v4517
      %4633 = vmatpush.bf16.msra.mxu0 %v4515
      %4634 = vmatpush.bf16.msra.mxu0 %v4513
      %4635 = vmatpush.bf16.msra.mxu0 %v4511
      %4636 = vmatpush.bf16.msra.mxu0 %v4509
      %4637 = vmatmul.bf16.gmra.mxu0 %v1353
      %v4638 = vpop.f32.mrf.mxu0
      %v4639 = vadd.f32 0.0, %v4638
      %v4640 = vpop.f32.mrf.mxu0
      %v4641 = vadd.f32 0.0, %v4640
      %4642 = vmatmul.bf16.gmra.mxu0 %v1354
      %v4643 = vpop.f32.mrf.mxu0
      %v4644 = vadd.f32 0.0, %v4643
      %v4645 = vpop.f32.mrf.mxu0
      %v4646 = vadd.f32 0.0, %v4645
      %4647 = vmatmul.bf16.gmra.mxu0 %v1355
      %v4648 = vpop.f32.mrf.mxu0
      %v4649 = vadd.f32 0.0, %v4648
      %v4650 = vpop.f32.mrf.mxu0
      %v4651 = vadd.f32 0.0, %v4650
      %4652 = vmatmul.bf16.gmra.mxu0 %v1356
      %v4653 = vpop.f32.mrf.mxu0
      %v4654 = vadd.f32 0.0, %v4653
      %v4655 = vpop.f32.mrf.mxu0
      %v4656 = vadd.f32 0.0, %v4655
      %4657 = vmatmul.bf16.gmra.mxu0 %v1357
      %v4658 = vpop.f32.mrf.mxu0
      %v4659 = vadd.f32 0.0, %v4658
      %v4660 = vpop.f32.mrf.mxu0
      %v4661 = vadd.f32 0.0, %v4660
      %4662 = vmatmul.bf16.gmra.mxu0 %v1358
      %v4663 = vpop.f32.mrf.mxu0
      %v4664 = vadd.f32 0.0, %v4663
      %v4665 = vpop.f32.mrf.mxu0
      %v4666 = vadd.f32 0.0, %v4665
      %4667 = vmatmul.bf16.gmra.mxu0 %v1359
      %v4668 = vpop.f32.mrf.mxu0
      %v4669 = vadd.f32 0.0, %v4668
      %v4670 = vpop.f32.mrf.mxu0
      %v4671 = vadd.f32 0.0, %v4670
      %4672 = vmatmul.bf16.gmra.mxu0 %v1360
      %v4673 = vpop.f32.mrf.mxu0
      %v4674 = vadd.f32 0.0, %v4673
      %v4675 = vpop.f32.mrf.mxu0
      %v4676 = vadd.f32 0.0, %v4675
      %4677 = vmatmul.bf16.gmra.mxu0 %v1361
      %v4678 = vpop.f32.mrf.mxu0
      %v4679 = vadd.f32 0.0, %v4678
      %v4680 = vpop.f32.mrf.mxu0
      %v4681 = vadd.f32 0.0, %v4680
      %4682 = vmatmul.bf16.gmra.mxu0 %v1362
      %v4683 = vpop.f32.mrf.mxu0
      %v4684 = vadd.f32 0.0, %v4683
      %v4685 = vpop.f32.mrf.mxu0
      %v4686 = vadd.f32 0.0, %v4685
      %4687 = vmatmul.bf16.gmra.mxu0 %v1363
      %v4688 = vpop.f32.mrf.mxu0
      %v4689 = vadd.f32 0.0, %v4688
      %v4690 = vpop.f32.mrf.mxu0
      %v4691 = vadd.f32 0.0, %v4690
      %4692 = vmatmul.bf16.gmra.mxu0 %v1364
      %v4693 = vpop.f32.mrf.mxu0
      %v4694 = vadd.f32 0.0, %v4693
      %v4695 = vpop.f32.mrf.mxu0
      %v4696 = vadd.f32 0.0, %v4695
      %4697 = vmatmul.bf16.gmra.mxu0 %v1365
      %v4698 = vpop.f32.mrf.mxu0
      %v4699 = vadd.f32 0.0, %v4698
      %v4700 = vpop.f32.mrf.mxu0
      %v4701 = vadd.f32 0.0, %v4700
      %4702 = vmatmul.bf16.gmra.mxu0 %v1366
      %v4703 = vpop.f32.mrf.mxu0
      %v4704 = vadd.f32 0.0, %v4703
      %v4705 = vpop.f32.mrf.mxu0
      %v4706 = vadd.f32 0.0, %v4705
      %4707 = vmatmul.bf16.gmra.mxu0 %v3011
      %v4708 = vpop.f32.mrf.mxu0
      %v4709 = vadd.f32 0.0, %v4708
      %v4710 = vpop.f32.mrf.mxu0
      %v4711 = vadd.f32 0.0, %v4710
      %4712 = vmatmul.bf16.gmra.mxu0 %v4458
      %v4713 = vpop.f32.mrf.mxu0
      %v4714 = vadd.f32 0.0, %v4713
      %v4715 = vpop.f32.mrf.mxu0
      %v4716 = vadd.f32 0.0, %v4715
      %4717 = vdwg.mxu0
      %v4718 = vadd.f32 %v4375, %v4550
      %v4719 = vadd.f32 %v4376, %v4639
      %v4720 = vadd.f32 %v4377, %v4552
      %v4721 = vadd.f32 %v4378, %v4641
      %v4722 = vadd.f32 %v4379, %v4555
      %v4723 = vadd.f32 %v4380, %v4644
      %v4724 = vadd.f32 %v4381, %v4557
      %v4725 = vadd.f32 %v4382, %v4646
      %v4726 = vadd.f32 %v4383, %v4560
      %v4727 = vadd.f32 %v4384, %v4649
      %v4728 = vadd.f32 %v4385, %v4562
      %v4729 = vadd.f32 %v4386, %v4651
      %v4730 = vadd.f32 %v4387, %v4565
      %v4731 = vadd.f32 %v4388, %v4654
      %v4732 = vadd.f32 %v4389, %v4567
      %v4733 = vadd.f32 %v4390, %v4656
      %v4734 = vadd.f32 %v4391, %v4570
      %v4735 = vadd.f32 %v4392, %v4659
      %v4736 = vadd.f32 %v4393, %v4572
      %v4737 = vadd.f32 %v4394, %v4661
      %v4738 = vadd.f32 %v4395, %v4575
      %v4739 = vadd.f32 %v4396, %v4664
      %v4740 = vadd.f32 %v4397, %v4577
      %v4741 = vadd.f32 %v4398, %v4666
      %v4742 = vadd.f32 %v4399, %v4580
      %v4743 = vadd.f32 %v4400, %v4669
      %v4744 = vadd.f32 %v4401, %v4582
      %v4745 = vadd.f32 %v4402, %v4671
      %v4746 = vadd.f32 %v4403, %v4585
      %v4747 = vadd.f32 %v4404, %v4674
      %v4748 = vadd.f32 %v4405, %v4587
      %v4749 = vadd.f32 %v4406, %v4676
      %v4750 = vadd.f32 %v4407, %v4590
      %v4751 = vadd.f32 %v4408, %v4679
      %v4752 = vadd.f32 %v4409, %v4592
      %v4753 = vadd.f32 %v4410, %v4681
      %v4754 = vadd.f32 %v4411, %v4595
      %v4755 = vadd.f32 %v4412, %v4684
      %v4756 = vadd.f32 %v4413, %v4597
      %v4757 = vadd.f32 %v4414, %v4686
      %v4758 = vadd.f32 %v4415, %v4600
      %v4759 = vadd.f32 %v4416, %v4689
      %v4760 = vadd.f32 %v4417, %v4602
      %v4761 = vadd.f32 %v4418, %v4691
      %v4762 = vadd.f32 %v4419, %v4605
      %v4763 = vadd.f32 %v4420, %v4694
      %v4764 = vadd.f32 %v4421, %v4607
      %v4765 = vadd.f32 %v4422, %v4696
      %v4766 = vadd.f32 %v4423, %v4610
      %v4767 = vadd.f32 %v4424, %v4699
      %v4768 = vadd.f32 %v4425, %v4612
      %v4769 = vadd.f32 %v4426, %v4701
      %v4770 = vadd.f32 %v4427, %v4615
      %v4771 = vadd.f32 %v4428, %v4704
      %v4772 = vadd.f32 %v4429, %v4617
      %v4773 = vadd.f32 %v4430, %v4706
      %v4774 = vadd.f32 %v4431, %v4620
      %v4775 = vadd.f32 %v4432, %v4709
      %v4776 = vadd.f32 %v4433, %v4622
      %v4777 = vadd.f32 %v4434, %v4711
      %v4778 = vadd.f32 %v4435, %v4625
      %v4779 = vadd.f32 %v4436, %v4714
      %v4780 = vadd.f32 %v4437, %v4627
      %v4781 = vadd.f32 %v4438, %v4716
      %4782 = vst [vmem:[#allocation2] sm:$0xff] %v4718
      %4783 = vst [vmem:[#allocation2 + $0x8] sm:$0xff] %v4719
      %4784 = vst [vmem:[#allocation2 + $0x10] sm:$0xff] %v4720
      %4785 = vst [vmem:[#allocation2 + $0x18] sm:$0xff] %v4721
      %4786 = vst [vmem:[#allocation2 + $0x20] sm:$0xff] %v4722
      %4787 = vst [vmem:[#allocation2 + $0x28] sm:$0xff] %v4723
      %4788 = vst [vmem:[#allocation2 + $0x30] sm:$0xff] %v4724
      %4789 = vst [vmem:[#allocation2 + $0x38] sm:$0xff] %v4725
      %4790 = vst [vmem:[#allocation2 + $0x40] sm:$0xff] %v4726
      %4791 = vst [vmem:[#allocation2 + $0x48] sm:$0xff] %v4727
      %4792 = vst [vmem:[#allocation2 + $0x50] sm:$0xff] %v4728
      %4793 = vst [vmem:[#allocation2 + $0x58] sm:$0xff] %v4729
      %4794 = vst [vmem:[#allocation2 + $0x60] sm:$0xff] %v4730
      %4795 = vst [vmem:[#allocation2 + $0x68] sm:$0xff] %v4731
      %4796 = vst [vmem:[#allocation2 + $0x70] sm:$0xff] %v4732
      %4797 = vst [vmem:[#allocation2 + $0x78] sm:$0xff] %v4733
      %4798 = vst [vmem:[#allocation2 + $0x80] sm:$0xff] %v4734
      %4799 = vst [vmem:[#allocation2 + $0x88] sm:$0xff] %v4735
      %4800 = vst [vmem:[#allocation2 + $0x90] sm:$0xff] %v4736
      %4801 = vst [vmem:[#allocation2 + $0x98] sm:$0xff] %v4737
      %4802 = vst [vmem:[#allocation2 + $0xa0] sm:$0xff] %v4738
      %4803 = vst [vmem:[#allocation2 + $0xa8] sm:$0xff] %v4739
      %4804 = vst [vmem:[#allocation2 + $0xb0] sm:$0xff] %v4740
      %4805 = vst [vmem:[#allocation2 + $0xb8] sm:$0xff] %v4741
      %4806 = vst [vmem:[#allocation2 + $0xc0] sm:$0xff] %v4742
      %4807 = vst [vmem:[#allocation2 + $0xc8] sm:$0xff] %v4743
      %4808 = vst [vmem:[#allocation2 + $0xd0] sm:$0xff] %v4744
      %4809 = vst [vmem:[#allocation2 + $0xd8] sm:$0xff] %v4745
      %4810 = vst [vmem:[#allocation2 + $0xe0] sm:$0xff] %v4746
      %4811 = vst [vmem:[#allocation2 + $0xe8] sm:$0xff] %v4747
      %4812 = vst [vmem:[#allocation2 + $0xf0] sm:$0xff] %v4748
      %4813 = vst [vmem:[#allocation2 + $0xf8] sm:$0xff] %v4749
      %4814 = vst [vmem:[#allocation2 + $0x100] sm:$0xff] %v4750
      %4815 = vst [vmem:[#allocation2 + $0x108] sm:$0xff] %v4751
      %4816 = vst [vmem:[#allocation2 + $0x110] sm:$0xff] %v4752
      %4817 = vst [vmem:[#allocation2 + $0x118] sm:$0xff] %v4753
      %4818 = vst [vmem:[#allocation2 + $0x120] sm:$0xff] %v4754
      %4819 = vst [vmem:[#allocation2 + $0x128] sm:$0xff] %v4755
      %4820 = vst [vmem:[#allocation2 + $0x130] sm:$0xff] %v4756
      %4821 = vst [vmem:[#allocation2 + $0x138] sm:$0xff] %v4757
      %4822 = vst [vmem:[#allocation2 + $0x140] sm:$0xff] %v4758
      %4823 = vst [vmem:[#allocation2 + $0x148] sm:$0xff] %v4759
      %4824 = vst [vmem:[#allocation2 + $0x150] sm:$0xff] %v4760
      %4825 = vst [vmem:[#allocation2 + $0x158] sm:$0xff] %v4761
      %4826 = vst [vmem:[#allocation2 + $0x160] sm:$0xff] %v4762
      %4827 = vst [vmem:[#allocation2 + $0x168] sm:$0xff] %v4763
      %4828 = vst [vmem:[#allocation2 + $0x170] sm:$0xff] %v4764
      %4829 = vst [vmem:[#allocation2 + $0x178] sm:$0xff] %v4765
      %4830 = vst [vmem:[#allocation2 + $0x180] sm:$0xff] %v4766
      %4831 = vst [vmem:[#allocation2 + $0x188] sm:$0xff] %v4767
      %4832 = vst [vmem:[#allocation2 + $0x190] sm:$0xff] %v4768
      %4833 = vst [vmem:[#allocation2 + $0x198] sm:$0xff] %v4769
      %4834 = vst [vmem:[#allocation2 + $0x1a0] sm:$0xff] %v4770
      %4835 = vst [vmem:[#allocation2 + $0x1a8] sm:$0xff] %v4771
      %4836 = vst [vmem:[#allocation2 + $0x1b0] sm:$0xff] %v4772
      %4837 = vst [vmem:[#allocation2 + $0x1b8] sm:$0xff] %v4773
      %4838 = vst [vmem:[#allocation2 + $0x1c0] sm:$0xff] %v4774
      %4839 = vst [vmem:[#allocation2 + $0x1c8] sm:$0xff] %v4775
      %4840 = vst [vmem:[#allocation2 + $0x1d0] sm:$0xff] %v4776
      %4841 = vst [vmem:[#allocation2 + $0x1d8] sm:$0xff] %v4777
      %4842 = vst [vmem:[#allocation2 + $0x1e0] sm:$0xff] %v4778
      %4843 = vst [vmem:[#allocation2 + $0x1e8] sm:$0xff] %v4779
      %4844 = vst [vmem:[#allocation2 + $0x1f0] sm:$0xff] %v4780
      %4845 = vst [vmem:[#allocation2 + $0x1f8] sm:$0xff] %v4781
      %v4847 = vrot.slane %v286, 5
      %v4848 = vrot.slane %v4847, 4
      %v4849 = vrot.slane %v287, 5
      %v4850 = vsel %vm1787, %v4848, %v4849
      %v4851 = vrot.slane %v4849, 4
      %v4852 = vrot.slane %v288, 5
      %v4853 = vsel %vm1787, %v4851, %v4852
      %v4854 = vld [vmem:[#allocation2] sm:$0xff]
      %v4855 = vld [vmem:[#allocation2 + $0x8] sm:$0xff]
      %v4856 = vld [vmem:[#allocation2 + $0x10] sm:$0xff]
      %v4857 = vld [vmem:[#allocation2 + $0x18] sm:$0xff]
      %v4858 = vld [vmem:[#allocation2 + $0x20] sm:$0xff]
      %v4859 = vld [vmem:[#allocation2 + $0x28] sm:$0xff]
      %v4860 = vld [vmem:[#allocation2 + $0x30] sm:$0xff]
      %v4861 = vld [vmem:[#allocation2 + $0x38] sm:$0xff]
      %v4862 = vld [vmem:[#allocation2 + $0x40] sm:$0xff]
      %v4863 = vld [vmem:[#allocation2 + $0x48] sm:$0xff]
      %v4864 = vld [vmem:[#allocation2 + $0x50] sm:$0xff]
      %v4865 = vld [vmem:[#allocation2 + $0x58] sm:$0xff]
      %v4866 = vld [vmem:[#allocation2 + $0x60] sm:$0xff]
      %v4867 = vld [vmem:[#allocation2 + $0x68] sm:$0xff]
      %v4868 = vld [vmem:[#allocation2 + $0x70] sm:$0xff]
      %v4869 = vld [vmem:[#allocation2 + $0x78] sm:$0xff]
      %v4870 = vld [vmem:[#allocation2 + $0x80] sm:$0xff]
      %v4871 = vld [vmem:[#allocation2 + $0x88] sm:$0xff]
      %v4872 = vld [vmem:[#allocation2 + $0x90] sm:$0xff]
      %v4873 = vld [vmem:[#allocation2 + $0x98] sm:$0xff]
      %v4874 = vld [vmem:[#allocation2 + $0xa0] sm:$0xff]
      %v4875 = vld [vmem:[#allocation2 + $0xa8] sm:$0xff]
      %v4876 = vld [vmem:[#allocation2 + $0xb0] sm:$0xff]
      %v4877 = vld [vmem:[#allocation2 + $0xb8] sm:$0xff]
      %v4878 = vld [vmem:[#allocation2 + $0xc0] sm:$0xff]
      %v4879 = vld [vmem:[#allocation2 + $0xc8] sm:$0xff]
      %v4880 = vld [vmem:[#allocation2 + $0xd0] sm:$0xff]
      %v4881 = vld [vmem:[#allocation2 + $0xd8] sm:$0xff]
      %v4882 = vld [vmem:[#allocation2 + $0xe0] sm:$0xff]
      %v4883 = vld [vmem:[#allocation2 + $0xe8] sm:$0xff]
      %v4884 = vld [vmem:[#allocation2 + $0xf0] sm:$0xff]
      %v4885 = vld [vmem:[#allocation2 + $0xf8] sm:$0xff]
      %v4886 = vld [vmem:[#allocation2 + $0x100] sm:$0xff]
      %v4887 = vld [vmem:[#allocation2 + $0x108] sm:$0xff]
      %v4888 = vld [vmem:[#allocation2 + $0x110] sm:$0xff]
      %v4889 = vld [vmem:[#allocation2 + $0x118] sm:$0xff]
      %v4890 = vld [vmem:[#allocation2 + $0x120] sm:$0xff]
      %v4891 = vld [vmem:[#allocation2 + $0x128] sm:$0xff]
      %v4892 = vld [vmem:[#allocation2 + $0x130] sm:$0xff]
      %v4893 = vld [vmem:[#allocation2 + $0x138] sm:$0xff]
      %v4894 = vld [vmem:[#allocation2 + $0x140] sm:$0xff]
      %v4895 = vld [vmem:[#allocation2 + $0x148] sm:$0xff]
      %v4896 = vld [vmem:[#allocation2 + $0x150] sm:$0xff]
      %v4897 = vld [vmem:[#allocation2 + $0x158] sm:$0xff]
      %v4898 = vld [vmem:[#allocation2 + $0x160] sm:$0xff]
      %v4899 = vld [vmem:[#allocation2 + $0x168] sm:$0xff]
      %v4900 = vld [vmem:[#allocation2 + $0x170] sm:$0xff]
      %v4901 = vld [vmem:[#allocation2 + $0x178] sm:$0xff]
      %v4902 = vld [vmem:[#allocation2 + $0x180] sm:$0xff]
      %v4903 = vld [vmem:[#allocation2 + $0x188] sm:$0xff]
      %v4904 = vld [vmem:[#allocation2 + $0x190] sm:$0xff]
      %v4905 = vld [vmem:[#allocation2 + $0x198] sm:$0xff]
      %v4906 = vld [vmem:[#allocation2 + $0x1a0] sm:$0xff]
      %v4907 = vld [vmem:[#allocation2 + $0x1a8] sm:$0xff]
      %v4908 = vld [vmem:[#allocation2 + $0x1b0] sm:$0xff]
      %v4909 = vld [vmem:[#allocation2 + $0x1b8] sm:$0xff]
      %v4910 = vld [vmem:[#allocation2 + $0x1c0] sm:$0xff]
      %v4911 = vld [vmem:[#allocation2 + $0x1c8] sm:$0xff]
      %v4912 = vld [vmem:[#allocation2 + $0x1d0] sm:$0xff]
      %v4913 = vld [vmem:[#allocation2 + $0x1d8] sm:$0xff]
      %v4914 = vld [vmem:[#allocation2 + $0x1e0] sm:$0xff]
      %v4915 = vld [vmem:[#allocation2 + $0x1e8] sm:$0xff]
      %v4916 = vld [vmem:[#allocation2 + $0x1f0] sm:$0xff]
      %v4917 = vld [vmem:[#allocation2 + $0x1f8] sm:$0xff]
      %s4918 = scalar_lea.vmem %s1, 1024
      %v4919 = vld [vmem:[%s4918] sm:$0xff]
      %v4920 = vld [vmem:[%s4918 + $0x8] sm:$0xff]
      %v4921 = vld [vmem:[%s4918 + $0x10] sm:$0xff]
      %v4922 = vld [vmem:[%s4918 + $0x18] sm:$0xff]
      %v4923 = vld [vmem:[%s4918 + $0x20] sm:$0xff]
      %v4924 = vld [vmem:[%s4918 + $0x28] sm:$0xff]
      %v4925 = vld [vmem:[%s4918 + $0x30] sm:$0xff]
      %v4926 = vld [vmem:[%s4918 + $0x38] sm:$0xff]
      %v4927 = vld [vmem:[%s4918 + $0x40] sm:$0xff]
      %v4928 = vld [vmem:[%s4918 + $0x48] sm:$0xff]
      %v4929 = vld [vmem:[%s4918 + $0x50] sm:$0xff]
      %v4930 = vld [vmem:[%s4918 + $0x58] sm:$0xff]
      %v4931 = vld [vmem:[%s4918 + $0x60] sm:$0xff]
      %v4932 = vld [vmem:[%s4918 + $0x68] sm:$0xff]
      %v4933 = vld [vmem:[%s4918 + $0x70] sm:$0xff]
      %v4934 = vld [vmem:[%s4918 + $0x78] sm:$0xff]
      %v4935 = vunpack.c.l.b16 %v4850
      %v4936 = vunpack.c.l.b16 %v4853
      %v4937 = vpack.c.b16 %v4936, %v4935
      %v4955 = vunpack.c.l.b16 %v4919
      %v4956 = vunpack.c.h.b16 %v4919
      %v4957 = vunpack.c.l.b16 %v4920
      %v4958 = vunpack.c.h.b16 %v4920
      %v4959 = vunpack.c.l.b16 %v4921
      %v4960 = vunpack.c.h.b16 %v4921
      %v4961 = vunpack.c.l.b16 %v4922
      %v4962 = vunpack.c.h.b16 %v4922
      %v4963 = vunpack.c.l.b16 %v4923
      %v4964 = vunpack.c.h.b16 %v4923
      %v4965 = vunpack.c.l.b16 %v4924
      %v4966 = vunpack.c.h.b16 %v4924
      %v4967 = vunpack.c.l.b16 %v4925
      %v4968 = vunpack.c.h.b16 %v4925
      %v4969 = vunpack.c.l.b16 %v4926
      %v4970 = vunpack.c.h.b16 %v4926
      %v4971 = vunpack.c.l.b16 %v4927
      %v4972 = vunpack.c.h.b16 %v4927
      %v4973 = vunpack.c.l.b16 %v4928
      %v4974 = vunpack.c.h.b16 %v4928
      %v4975 = vunpack.c.l.b16 %v4929
      %v4976 = vunpack.c.h.b16 %v4929
      %v4977 = vunpack.c.l.b16 %v4930
      %v4978 = vunpack.c.h.b16 %v4930
      %v4979 = vunpack.c.l.b16 %v4931
      %v4980 = vunpack.c.h.b16 %v4931
      %v4981 = vunpack.c.l.b16 %v4932
      %v4982 = vunpack.c.h.b16 %v4932
      %v4983 = vunpack.c.l.b16 %v4933
      %v4984 = vunpack.c.h.b16 %v4933
      %v4985 = vunpack.c.l.b16 %v4934
      %v4986 = vunpack.c.h.b16 %v4934
      %v4987 = vpack.c.b16 %v4957, %v4955
      %v4988 = vpack.c.b16 %v4958, %v4956
      %v4989 = vpack.c.b16 %v4961, %v4959
      %v4990 = vpack.c.b16 %v4962, %v4960
      %v4991 = vpack.c.b16 %v4965, %v4963
      %v4992 = vpack.c.b16 %v4966, %v4964
      %v4993 = vpack.c.b16 %v4969, %v4967
      %v4994 = vpack.c.b16 %v4970, %v4968
      %v4995 = vpack.c.b16 %v4973, %v4971
      %v4996 = vpack.c.b16 %v4974, %v4972
      %v4997 = vpack.c.b16 %v4977, %v4975
      %v4998 = vpack.c.b16 %v4978, %v4976
      %v4999 = vpack.c.b16 %v4981, %v4979
      %v5000 = vpack.c.b16 %v4982, %v4980
      %v5001 = vpack.c.b16 %v4985, %v4983
      %v5002 = vpack.c.b16 %v4986, %v4984
      %5019 = vmatpush.bf16.msra.mxu0 %v5001
      %5020 = vmatpush.bf16.msra.mxu0 %v4999
      %5021 = vmatpush.bf16.msra.mxu0 %v4997
      %5022 = vmatpush.bf16.msra.mxu0 %v4995
      %5023 = vmatpush.bf16.msra.mxu0 %v4993
      %5024 = vmatpush.bf16.msra.mxu0 %v4991
      %5025 = vmatpush.bf16.msra.mxu0 %v4989
      %5026 = vmatpush.bf16.msra.mxu0 %v4987
      %5027 = vmatmul.bf16.gmra.mxu0 %v2015
      %v5028 = vpop.f32.mrf.mxu0
      %v5029 = vadd.f32 0.0, %v5028
      %v5030 = vpop.f32.mrf.mxu0
      %v5031 = vadd.f32 0.0, %v5030
      %5032 = vmatmul.bf16.gmra.mxu0 %v2016
      %v5033 = vpop.f32.mrf.mxu0
      %v5034 = vadd.f32 0.0, %v5033
      %v5035 = vpop.f32.mrf.mxu0
      %v5036 = vadd.f32 0.0, %v5035
      %5037 = vmatmul.bf16.gmra.mxu0 %v2017
      %v5038 = vpop.f32.mrf.mxu0
      %v5039 = vadd.f32 0.0, %v5038
      %v5040 = vpop.f32.mrf.mxu0
      %v5041 = vadd.f32 0.0, %v5040
      %5042 = vmatmul.bf16.gmra.mxu0 %v2018
      %v5043 = vpop.f32.mrf.mxu0
      %v5044 = vadd.f32 0.0, %v5043
      %v5045 = vpop.f32.mrf.mxu0
      %v5046 = vadd.f32 0.0, %v5045
      %5047 = vmatmul.bf16.gmra.mxu0 %v2019
      %v5048 = vpop.f32.mrf.mxu0
      %v5049 = vadd.f32 0.0, %v5048
      %v5050 = vpop.f32.mrf.mxu0
      %v5051 = vadd.f32 0.0, %v5050
      %5052 = vmatmul.bf16.gmra.mxu0 %v2020
      %v5053 = vpop.f32.mrf.mxu0
      %v5054 = vadd.f32 0.0, %v5053
      %v5055 = vpop.f32.mrf.mxu0
      %v5056 = vadd.f32 0.0, %v5055
      %5057 = vmatmul.bf16.gmra.mxu0 %v2021
      %v5058 = vpop.f32.mrf.mxu0
      %v5059 = vadd.f32 0.0, %v5058
      %v5060 = vpop.f32.mrf.mxu0
      %v5061 = vadd.f32 0.0, %v5060
      %5062 = vmatmul.bf16.gmra.mxu0 %v2022
      %v5063 = vpop.f32.mrf.mxu0
      %v5064 = vadd.f32 0.0, %v5063
      %v5065 = vpop.f32.mrf.mxu0
      %v5066 = vadd.f32 0.0, %v5065
      %5067 = vmatmul.bf16.gmra.mxu0 %v2023
      %v5068 = vpop.f32.mrf.mxu0
      %v5069 = vadd.f32 0.0, %v5068
      %v5070 = vpop.f32.mrf.mxu0
      %v5071 = vadd.f32 0.0, %v5070
      %5072 = vmatmul.bf16.gmra.mxu0 %v2024
      %v5073 = vpop.f32.mrf.mxu0
      %v5074 = vadd.f32 0.0, %v5073
      %v5075 = vpop.f32.mrf.mxu0
      %v5076 = vadd.f32 0.0, %v5075
      %5077 = vmatmul.bf16.gmra.mxu0 %v2025
      %v5078 = vpop.f32.mrf.mxu0
      %v5079 = vadd.f32 0.0, %v5078
      %v5080 = vpop.f32.mrf.mxu0
      %v5081 = vadd.f32 0.0, %v5080
      %5082 = vmatmul.bf16.gmra.mxu0 %v2026
      %v5083 = vpop.f32.mrf.mxu0
      %v5084 = vadd.f32 0.0, %v5083
      %v5085 = vpop.f32.mrf.mxu0
      %v5086 = vadd.f32 0.0, %v5085
      %5087 = vmatmul.bf16.gmra.mxu0 %v2027
      %v5088 = vpop.f32.mrf.mxu0
      %v5089 = vadd.f32 0.0, %v5088
      %v5090 = vpop.f32.mrf.mxu0
      %v5091 = vadd.f32 0.0, %v5090
      %5092 = vmatmul.bf16.gmra.mxu0 %v2028
      %v5093 = vpop.f32.mrf.mxu0
      %v5094 = vadd.f32 0.0, %v5093
      %v5095 = vpop.f32.mrf.mxu0
      %v5096 = vadd.f32 0.0, %v5095
      %5097 = vmatmul.bf16.gmra.mxu0 %v3490
      %v5098 = vpop.f32.mrf.mxu0
      %v5099 = vadd.f32 0.0, %v5098
      %v5100 = vpop.f32.mrf.mxu0
      %v5101 = vadd.f32 0.0, %v5100
      %5102 = vmatmul.bf16.gmra.mxu0 %v4937
      %v5103 = vpop.f32.mrf.mxu0
      %v5104 = vadd.f32 0.0, %v5103
      %v5105 = vpop.f32.mrf.mxu0
      %v5106 = vadd.f32 0.0, %v5105
      %5107 = vdwg.mxu0
      %5108 = vmatpush.bf16.msra.mxu0 %v5002
      %5109 = vmatpush.bf16.msra.mxu0 %v5000
      %5110 = vmatpush.bf16.msra.mxu0 %v4998
      %5111 = vmatpush.bf16.msra.mxu0 %v4996
      %5112 = vmatpush.bf16.msra.mxu0 %v4994
      %5113 = vmatpush.bf16.msra.mxu0 %v4992
      %5114 = vmatpush.bf16.msra.mxu0 %v4990
      %5115 = vmatpush.bf16.msra.mxu0 %v4988
      %5116 = vmatmul.bf16.gmra.mxu0 %v2015
      %v5117 = vpop.f32.mrf.mxu0
      %v5118 = vadd.f32 0.0, %v5117
      %v5119 = vpop.f32.mrf.mxu0
      %v5120 = vadd.f32 0.0, %v5119
      %5121 = vmatmul.bf16.gmra.mxu0 %v2016
      %v5122 = vpop.f32.mrf.mxu0
      %v5123 = vadd.f32 0.0, %v5122
      %v5124 = vpop.f32.mrf.mxu0
      %v5125 = vadd.f32 0.0, %v5124
      %5126 = vmatmul.bf16.gmra.mxu0 %v2017
      %v5127 = vpop.f32.mrf.mxu0
      %v5128 = vadd.f32 0.0, %v5127
      %v5129 = vpop.f32.mrf.mxu0
      %v5130 = vadd.f32 0.0, %v5129
      %5131 = vmatmul.bf16.gmra.mxu0 %v2018
      %v5132 = vpop.f32.mrf.mxu0
      %v5133 = vadd.f32 0.0, %v5132
      %v5134 = vpop.f32.mrf.mxu0
      %v5135 = vadd.f32 0.0, %v5134
      %5136 = vmatmul.bf16.gmra.mxu0 %v2019
      %v5137 = vpop.f32.mrf.mxu0
      %v5138 = vadd.f32 0.0, %v5137
      %v5139 = vpop.f32.mrf.mxu0
      %v5140 = vadd.f32 0.0, %v5139
      %5141 = vmatmul.bf16.gmra.mxu0 %v2020
      %v5142 = vpop.f32.mrf.mxu0
      %v5143 = vadd.f32 0.0, %v5142
      %v5144 = vpop.f32.mrf.mxu0
      %v5145 = vadd.f32 0.0, %v5144
      %5146 = vmatmul.bf16.gmra.mxu0 %v2021
      %v5147 = vpop.f32.mrf.mxu0
      %v5148 = vadd.f32 0.0, %v5147
      %v5149 = vpop.f32.mrf.mxu0
      %v5150 = vadd.f32 0.0, %v5149
      %5151 = vmatmul.bf16.gmra.mxu0 %v2022
      %v5152 = vpop.f32.mrf.mxu0
      %v5153 = vadd.f32 0.0, %v5152
      %v5154 = vpop.f32.mrf.mxu0
      %v5155 = vadd.f32 0.0, %v5154
      %5156 = vmatmul.bf16.gmra.mxu0 %v2023
      %v5157 = vpop.f32.mrf.mxu0
      %v5158 = vadd.f32 0.0, %v5157
      %v5159 = vpop.f32.mrf.mxu0
      %v5160 = vadd.f32 0.0, %v5159
      %5161 = vmatmul.bf16.gmra.mxu0 %v2024
      %v5162 = vpop.f32.mrf.mxu0
      %v5163 = vadd.f32 0.0, %v5162
      %v5164 = vpop.f32.mrf.mxu0
      %v5165 = vadd.f32 0.0, %v5164
      %5166 = vmatmul.bf16.gmra.mxu0 %v2025
      %v5167 = vpop.f32.mrf.mxu0
      %v5168 = vadd.f32 0.0, %v5167
      %v5169 = vpop.f32.mrf.mxu0
      %v5170 = vadd.f32 0.0, %v5169
      %5171 = vmatmul.bf16.gmra.mxu0 %v2026
      %v5172 = vpop.f32.mrf.mxu0
      %v5173 = vadd.f32 0.0, %v5172
      %v5174 = vpop.f32.mrf.mxu0
      %v5175 = vadd.f32 0.0, %v5174
      %5176 = vmatmul.bf16.gmra.mxu0 %v2027
      %v5177 = vpop.f32.mrf.mxu0
      %v5178 = vadd.f32 0.0, %v5177
      %v5179 = vpop.f32.mrf.mxu0
      %v5180 = vadd.f32 0.0, %v5179
      %5181 = vmatmul.bf16.gmra.mxu0 %v2028
      %v5182 = vpop.f32.mrf.mxu0
      %v5183 = vadd.f32 0.0, %v5182
      %v5184 = vpop.f32.mrf.mxu0
      %v5185 = vadd.f32 0.0, %v5184
      %5186 = vmatmul.bf16.gmra.mxu0 %v3490
      %v5187 = vpop.f32.mrf.mxu0
      %v5188 = vadd.f32 0.0, %v5187
      %v5189 = vpop.f32.mrf.mxu0
      %v5190 = vadd.f32 0.0, %v5189
      %5191 = vmatmul.bf16.gmra.mxu0 %v4937
      %v5192 = vpop.f32.mrf.mxu0
      %v5193 = vadd.f32 0.0, %v5192
      %v5194 = vpop.f32.mrf.mxu0
      %v5195 = vadd.f32 0.0, %v5194
      %5196 = vdwg.mxu0
      %v5197 = vadd.f32 %v4854, %v5029
      %v5198 = vadd.f32 %v4855, %v5118
      %v5199 = vadd.f32 %v4856, %v5031
      %v5200 = vadd.f32 %v4857, %v5120
      %v5201 = vadd.f32 %v4858, %v5034
      %v5202 = vadd.f32 %v4859, %v5123
      %v5203 = vadd.f32 %v4860, %v5036
      %v5204 = vadd.f32 %v4861, %v5125
      %v5205 = vadd.f32 %v4862, %v5039
      %v5206 = vadd.f32 %v4863, %v5128
      %v5207 = vadd.f32 %v4864, %v5041
      %v5208 = vadd.f32 %v4865, %v5130
      %v5209 = vadd.f32 %v4866, %v5044
      %v5210 = vadd.f32 %v4867, %v5133
      %v5211 = vadd.f32 %v4868, %v5046
      %v5212 = vadd.f32 %v4869, %v5135
      %v5213 = vadd.f32 %v4870, %v5049
      %v5214 = vadd.f32 %v4871, %v5138
      %v5215 = vadd.f32 %v4872, %v5051
      %v5216 = vadd.f32 %v4873, %v5140
      %v5217 = vadd.f32 %v4874, %v5054
      %v5218 = vadd.f32 %v4875, %v5143
      %v5219 = vadd.f32 %v4876, %v5056
      %v5220 = vadd.f32 %v4877, %v5145
      %v5221 = vadd.f32 %v4878, %v5059
      %v5222 = vadd.f32 %v4879, %v5148
      %v5223 = vadd.f32 %v4880, %v5061
      %v5224 = vadd.f32 %v4881, %v5150
      %v5225 = vadd.f32 %v4882, %v5064
      %v5226 = vadd.f32 %v4883, %v5153
      %v5227 = vadd.f32 %v4884, %v5066
      %v5228 = vadd.f32 %v4885, %v5155
      %v5229 = vadd.f32 %v4886, %v5069
      %v5230 = vadd.f32 %v4887, %v5158
      %v5231 = vadd.f32 %v4888, %v5071
      %v5232 = vadd.f32 %v4889, %v5160
      %v5233 = vadd.f32 %v4890, %v5074
      %v5234 = vadd.f32 %v4891, %v5163
      %v5235 = vadd.f32 %v4892, %v5076
      %v5236 = vadd.f32 %v4893, %v5165
      %v5237 = vadd.f32 %v4894, %v5079
      %v5238 = vadd.f32 %v4895, %v5168
      %v5239 = vadd.f32 %v4896, %v5081
      %v5240 = vadd.f32 %v4897, %v5170
      %v5241 = vadd.f32 %v4898, %v5084
      %v5242 = vadd.f32 %v4899, %v5173
      %v5243 = vadd.f32 %v4900, %v5086
      %v5244 = vadd.f32 %v4901, %v5175
      %v5245 = vadd.f32 %v4902, %v5089
      %v5246 = vadd.f32 %v4903, %v5178
      %v5247 = vadd.f32 %v4904, %v5091
      %v5248 = vadd.f32 %v4905, %v5180
      %v5249 = vadd.f32 %v4906, %v5094
      %v5250 = vadd.f32 %v4907, %v5183
      %v5251 = vadd.f32 %v4908, %v5096
      %v5252 = vadd.f32 %v4909, %v5185
      %v5253 = vadd.f32 %v4910, %v5099
      %v5254 = vadd.f32 %v4911, %v5188
      %v5255 = vadd.f32 %v4912, %v5101
      %v5256 = vadd.f32 %v4913, %v5190
      %v5257 = vadd.f32 %v4914, %v5104
      %v5258 = vadd.f32 %v4915, %v5193
      %v5259 = vadd.f32 %v4916, %v5106
      %v5260 = vadd.f32 %v4917, %v5195
      %5261 = vst [vmem:[#allocation2] sm:$0xff] %v5197
      %5262 = vst [vmem:[#allocation2 + $0x8] sm:$0xff] %v5198
      %5263 = vst [vmem:[#allocation2 + $0x10] sm:$0xff] %v5199
      %5264 = vst [vmem:[#allocation2 + $0x18] sm:$0xff] %v5200
      %5265 = vst [vmem:[#allocation2 + $0x20] sm:$0xff] %v5201
      %5266 = vst [vmem:[#allocation2 + $0x28] sm:$0xff] %v5202
      %5267 = vst [vmem:[#allocation2 + $0x30] sm:$0xff] %v5203
      %5268 = vst [vmem:[#allocation2 + $0x38] sm:$0xff] %v5204
      %5269 = vst [vmem:[#allocation2 + $0x40] sm:$0xff] %v5205
      %5270 = vst [vmem:[#allocation2 + $0x48] sm:$0xff] %v5206
      %5271 = vst [vmem:[#allocation2 + $0x50] sm:$0xff] %v5207
      %5272 = vst [vmem:[#allocation2 + $0x58] sm:$0xff] %v5208
      %5273 = vst [vmem:[#allocation2 + $0x60] sm:$0xff] %v5209
      %5274 = vst [vmem:[#allocation2 + $0x68] sm:$0xff] %v5210
      %5275 = vst [vmem:[#allocation2 + $0x70] sm:$0xff] %v5211
      %5276 = vst [vmem:[#allocation2 + $0x78] sm:$0xff] %v5212
      %5277 = vst [vmem:[#allocation2 + $0x80] sm:$0xff] %v5213
      %5278 = vst [vmem:[#allocation2 + $0x88] sm:$0xff] %v5214
      %5279 = vst [vmem:[#allocation2 + $0x90] sm:$0xff] %v5215
      %5280 = vst [vmem:[#allocation2 + $0x98] sm:$0xff] %v5216
      %5281 = vst [vmem:[#allocation2 + $0xa0] sm:$0xff] %v5217
      %5282 = vst [vmem:[#allocation2 + $0xa8] sm:$0xff] %v5218
      %5283 = vst [vmem:[#allocation2 + $0xb0] sm:$0xff] %v5219
      %5284 = vst [vmem:[#allocation2 + $0xb8] sm:$0xff] %v5220
      %5285 = vst [vmem:[#allocation2 + $0xc0] sm:$0xff] %v5221
      %5286 = vst [vmem:[#allocation2 + $0xc8] sm:$0xff] %v5222
      %5287 = vst [vmem:[#allocation2 + $0xd0] sm:$0xff] %v5223
      %5288 = vst [vmem:[#allocation2 + $0xd8] sm:$0xff] %v5224
      %5289 = vst [vmem:[#allocation2 + $0xe0] sm:$0xff] %v5225
      %5290 = vst [vmem:[#allocation2 + $0xe8] sm:$0xff] %v5226
      %5291 = vst [vmem:[#allocation2 + $0xf0] sm:$0xff] %v5227
      %5292 = vst [vmem:[#allocation2 + $0xf8] sm:$0xff] %v5228
      %5293 = vst [vmem:[#allocation2 + $0x100] sm:$0xff] %v5229
      %5294 = vst [vmem:[#allocation2 + $0x108] sm:$0xff] %v5230
      %5295 = vst [vmem:[#allocation2 + $0x110] sm:$0xff] %v5231
      %5296 = vst [vmem:[#allocation2 + $0x118] sm:$0xff] %v5232
      %5297 = vst [vmem:[#allocation2 + $0x120] sm:$0xff] %v5233
      %5298 = vst [vmem:[#allocation2 + $0x128] sm:$0xff] %v5234
      %5299 = vst [vmem:[#allocation2 + $0x130] sm:$0xff] %v5235
      %5300 = vst [vmem:[#allocation2 + $0x138] sm:$0xff] %v5236
      %5301 = vst [vmem:[#allocation2 + $0x140] sm:$0xff] %v5237
      %5302 = vst [vmem:[#allocation2 + $0x148] sm:$0xff] %v5238
      %5303 = vst [vmem:[#allocation2 + $0x150] sm:$0xff] %v5239
      %5304 = vst [vmem:[#allocation2 + $0x158] sm:$0xff] %v5240
      %5305 = vst [vmem:[#allocation2 + $0x160] sm:$0xff] %v5241
      %5306 = vst [vmem:[#allocation2 + $0x168] sm:$0xff] %v5242
      %5307 = vst [vmem:[#allocation2 + $0x170] sm:$0xff] %v5243
      %5308 = vst [vmem:[#allocation2 + $0x178] sm:$0xff] %v5244
      %5309 = vst [vmem:[#allocation2 + $0x180] sm:$0xff] %v5245
      %5310 = vst [vmem:[#allocation2 + $0x188] sm:$0xff] %v5246
      %5311 = vst [vmem:[#allocation2 + $0x190] sm:$0xff] %v5247
      %5312 = vst [vmem:[#allocation2 + $0x198] sm:$0xff] %v5248
      %5313 = vst [vmem:[#allocation2 + $0x1a0] sm:$0xff] %v5249
      %5314 = vst [vmem:[#allocation2 + $0x1a8] sm:$0xff] %v5250
      %5315 = vst [vmem:[#allocation2 + $0x1b0] sm:$0xff] %v5251
      %5316 = vst [vmem:[#allocation2 + $0x1b8] sm:$0xff] %v5252
      %5317 = vst [vmem:[#allocation2 + $0x1c0] sm:$0xff] %v5253
      %5318 = vst [vmem:[#allocation2 + $0x1c8] sm:$0xff] %v5254
      %5319 = vst [vmem:[#allocation2 + $0x1d0] sm:$0xff] %v5255
      %5320 = vst [vmem:[#allocation2 + $0x1d8] sm:$0xff] %v5256
      %5321 = vst [vmem:[#allocation2 + $0x1e0] sm:$0xff] %v5257
      %5322 = vst [vmem:[#allocation2 + $0x1e8] sm:$0xff] %v5258
      %5323 = vst [vmem:[#allocation2 + $0x1f0] sm:$0xff] %v5259
      %5324 = vst [vmem:[#allocation2 + $0x1f8] sm:$0xff] %v5260
      %v5325 = vld [vmem:[#allocation2] sm:$0xff]
      %v5326 = vld [vmem:[#allocation2 + $0x8] sm:$0xff]
      %v5327 = vld [vmem:[#allocation2 + $0x10] sm:$0xff]
      %v5328 = vld [vmem:[#allocation2 + $0x18] sm:$0xff]
      %v5329 = vld [vmem:[#allocation2 + $0x20] sm:$0xff]
      %v5330 = vld [vmem:[#allocation2 + $0x28] sm:$0xff]
      %v5331 = vld [vmem:[#allocation2 + $0x30] sm:$0xff]
      %v5332 = vld [vmem:[#allocation2 + $0x38] sm:$0xff]
      %v5333 = vld [vmem:[#allocation2 + $0x40] sm:$0xff]
      %v5334 = vld [vmem:[#allocation2 + $0x48] sm:$0xff]
      %v5335 = vld [vmem:[#allocation2 + $0x50] sm:$0xff]
      %v5336 = vld [vmem:[#allocation2 + $0x58] sm:$0xff]
      %v5337 = vld [vmem:[#allocation2 + $0x60] sm:$0xff]
      %v5338 = vld [vmem:[#allocation2 + $0x68] sm:$0xff]
      %v5339 = vld [vmem:[#allocation2 + $0x70] sm:$0xff]
      %v5340 = vld [vmem:[#allocation2 + $0x78] sm:$0xff]
      %v5341 = vld [vmem:[#allocation2 + $0x80] sm:$0xff]
      %v5342 = vld [vmem:[#allocation2 + $0x88] sm:$0xff]
      %v5343 = vld [vmem:[#allocation2 + $0x90] sm:$0xff]
      %v5344 = vld [vmem:[#allocation2 + $0x98] sm:$0xff]
      %v5345 = vld [vmem:[#allocation2 + $0xa0] sm:$0xff]
      %v5346 = vld [vmem:[#allocation2 + $0xa8] sm:$0xff]
      %v5347 = vld [vmem:[#allocation2 + $0xb0] sm:$0xff]
      %v5348 = vld [vmem:[#allocation2 + $0xb8] sm:$0xff]
      %v5349 = vld [vmem:[#allocation2 + $0xc0] sm:$0xff]
      %v5350 = vld [vmem:[#allocation2 + $0xc8] sm:$0xff]
      %v5351 = vld [vmem:[#allocation2 + $0xd0] sm:$0xff]
      %v5352 = vld [vmem:[#allocation2 + $0xd8] sm:$0xff]
      %v5353 = vld [vmem:[#allocation2 + $0xe0] sm:$0xff]
      %v5354 = vld [vmem:[#allocation2 + $0xe8] sm:$0xff]
      %v5355 = vld [vmem:[#allocation2 + $0xf0] sm:$0xff]
      %v5356 = vld [vmem:[#allocation2 + $0xf8] sm:$0xff]
      %v5357 = vld [vmem:[#allocation2 + $0x100] sm:$0xff]
      %v5358 = vld [vmem:[#allocation2 + $0x108] sm:$0xff]
      %v5359 = vld [vmem:[#allocation2 + $0x110] sm:$0xff]
      %v5360 = vld [vmem:[#allocation2 + $0x118] sm:$0xff]
      %v5361 = vld [vmem:[#allocation2 + $0x120] sm:$0xff]
      %v5362 = vld [vmem:[#allocation2 + $0x128] sm:$0xff]
      %v5363 = vld [vmem:[#allocation2 + $0x130] sm:$0xff]
      %v5364 = vld [vmem:[#allocation2 + $0x138] sm:$0xff]
      %v5365 = vld [vmem:[#allocation2 + $0x140] sm:$0xff]
      %v5366 = vld [vmem:[#allocation2 + $0x148] sm:$0xff]
      %v5367 = vld [vmem:[#allocation2 + $0x150] sm:$0xff]
      %v5368 = vld [vmem:[#allocation2 + $0x158] sm:$0xff]
      %v5369 = vld [vmem:[#allocation2 + $0x160] sm:$0xff]
      %v5370 = vld [vmem:[#allocation2 + $0x168] sm:$0xff]
      %v5371 = vld [vmem:[#allocation2 + $0x170] sm:$0xff]
      %v5372 = vld [vmem:[#allocation2 + $0x178] sm:$0xff]
      %v5373 = vld [vmem:[#allocation2 + $0x180] sm:$0xff]
      %v5374 = vld [vmem:[#allocation2 + $0x188] sm:$0xff]
      %v5375 = vld [vmem:[#allocation2 + $0x190] sm:$0xff]
      %v5376 = vld [vmem:[#allocation2 + $0x198] sm:$0xff]
      %v5377 = vld [vmem:[#allocation2 + $0x1a0] sm:$0xff]
      %v5378 = vld [vmem:[#allocation2 + $0x1a8] sm:$0xff]
      %v5379 = vld [vmem:[#allocation2 + $0x1b0] sm:$0xff]
      %v5380 = vld [vmem:[#allocation2 + $0x1b8] sm:$0xff]
      %v5381 = vld [vmem:[#allocation2 + $0x1c0] sm:$0xff]
      %v5382 = vld [vmem:[#allocation2 + $0x1c8] sm:$0xff]
      %v5383 = vld [vmem:[#allocation2 + $0x1d0] sm:$0xff]
      %v5384 = vld [vmem:[#allocation2 + $0x1d8] sm:$0xff]
      %v5385 = vld [vmem:[#allocation2 + $0x1e0] sm:$0xff]
      %v5386 = vld [vmem:[#allocation2 + $0x1e8] sm:$0xff]
      %v5387 = vld [vmem:[#allocation2 + $0x1f0] sm:$0xff]
      %v5388 = vld [vmem:[#allocation2 + $0x1f8] sm:$0xff]
      %v5389 = vld [vmem:[%s2] sm:$0x3]
      %v5391 = vperm.slane %v5389, 0
      %v5392 = vperm.slane %v5389, 1
      %v5395 = vadd.f32 %v5325, %v5391
      %v5396 = vadd.f32 %v5326, %v5392
      %v5397 = vadd.f32 %v5327, %v5391
      %v5398 = vadd.f32 %v5328, %v5392
      %v5399 = vadd.f32 %v5329, %v5391
      %v5400 = vadd.f32 %v5330, %v5392
      %v5401 = vadd.f32 %v5331, %v5391
      %v5402 = vadd.f32 %v5332, %v5392
      %v5403 = vadd.f32 %v5333, %v5391
      %v5404 = vadd.f32 %v5334, %v5392
      %v5405 = vadd.f32 %v5335, %v5391
      %v5406 = vadd.f32 %v5336, %v5392
      %v5407 = vadd.f32 %v5337, %v5391
      %v5408 = vadd.f32 %v5338, %v5392
      %v5409 = vadd.f32 %v5339, %v5391
      %v5410 = vadd.f32 %v5340, %v5392
      %v5411 = vadd.f32 %v5341, %v5391
      %v5412 = vadd.f32 %v5342, %v5392
      %v5413 = vadd.f32 %v5343, %v5391
      %v5414 = vadd.f32 %v5344, %v5392
      %v5415 = vadd.f32 %v5345, %v5391
      %v5416 = vadd.f32 %v5346, %v5392
      %v5417 = vadd.f32 %v5347, %v5391
      %v5418 = vadd.f32 %v5348, %v5392
      %v5419 = vadd.f32 %v5349, %v5391
      %v5420 = vadd.f32 %v5350, %v5392
      %v5421 = vadd.f32 %v5351, %v5391
      %v5422 = vadd.f32 %v5352, %v5392
      %v5423 = vadd.f32 %v5353, %v5391
      %v5424 = vadd.f32 %v5354, %v5392
      %v5425 = vadd.f32 %v5355, %v5391
      %v5426 = vadd.f32 %v5356, %v5392
      %v5427 = vadd.f32 %v5357, %v5391
      %v5428 = vadd.f32 %v5358, %v5392
      %v5429 = vadd.f32 %v5359, %v5391
      %v5430 = vadd.f32 %v5360, %v5392
      %v5431 = vadd.f32 %v5361, %v5391
      %v5432 = vadd.f32 %v5362, %v5392
      %v5433 = vadd.f32 %v5363, %v5391
      %v5434 = vadd.f32 %v5364, %v5392
      %v5435 = vadd.f32 %v5365, %v5391
      %v5436 = vadd.f32 %v5366, %v5392
      %v5437 = vadd.f32 %v5367, %v5391
      %v5438 = vadd.f32 %v5368, %v5392
      %v5439 = vadd.f32 %v5369, %v5391
      %v5440 = vadd.f32 %v5370, %v5392
      %v5441 = vadd.f32 %v5371, %v5391
      %v5442 = vadd.f32 %v5372, %v5392
      %v5443 = vadd.f32 %v5373, %v5391
      %v5444 = vadd.f32 %v5374, %v5392
      %v5445 = vadd.f32 %v5375, %v5391
      %v5446 = vadd.f32 %v5376, %v5392
      %v5447 = vadd.f32 %v5377, %v5391
      %v5448 = vadd.f32 %v5378, %v5392
      %v5449 = vadd.f32 %v5379, %v5391
      %v5450 = vadd.f32 %v5380, %v5392
      %v5451 = vadd.f32 %v5381, %v5391
      %v5452 = vadd.f32 %v5382, %v5392
      %v5453 = vadd.f32 %v5383, %v5391
      %v5454 = vadd.f32 %v5384, %v5392
      %v5455 = vadd.f32 %v5385, %v5391
      %v5456 = vadd.f32 %v5386, %v5392
      %v5457 = vadd.f32 %v5387, %v5391
      %v5458 = vadd.f32 %v5388, %v5392
      %v5459 = vmax.f32 %v5395, 0.0
      %v5460 = vmax.f32 %v5397, 0.0
      %v5461 = vmax.f32 %v5399, 0.0
      %v5462 = vmax.f32 %v5401, 0.0
      %v5463 = vmax.f32 %v5403, 0.0
      %v5464 = vmax.f32 %v5405, 0.0
      %v5465 = vmax.f32 %v5407, 0.0
      %v5466 = vmax.f32 %v5409, 0.0
      %v5467 = vmax.f32 %v5411, 0.0
      %v5468 = vmax.f32 %v5413, 0.0
      %v5469 = vmax.f32 %v5415, 0.0
      %v5470 = vmax.f32 %v5417, 0.0
      %v5471 = vmax.f32 %v5419, 0.0
      %v5472 = vmax.f32 %v5421, 0.0
      %v5473 = vmax.f32 %v5423, 0.0
      %v5474 = vmax.f32 %v5425, 0.0
      %v5475 = vmax.f32 %v5427, 0.0
      %v5476 = vmax.f32 %v5429, 0.0
      %v5477 = vmax.f32 %v5431, 0.0
      %v5478 = vmax.f32 %v5433, 0.0
      %v5479 = vmax.f32 %v5435, 0.0
      %v5480 = vmax.f32 %v5437, 0.0
      %v5481 = vmax.f32 %v5439, 0.0
      %v5482 = vmax.f32 %v5441, 0.0
      %v5483 = vmax.f32 %v5443, 0.0
      %v5484 = vmax.f32 %v5445, 0.0
      %v5485 = vmax.f32 %v5447, 0.0
      %v5486 = vmax.f32 %v5449, 0.0
      %v5487 = vmax.f32 %v5451, 0.0
      %v5488 = vmax.f32 %v5453, 0.0
      %v5489 = vmax.f32 %v5455, 0.0
      %v5490 = vmax.f32 %v5457, 0.0
      %v5491 = vadd.f32 %v5459, %v5396
      %v5492 = vadd.f32 %v5460, %v5398
      %v5493 = vadd.f32 %v5461, %v5400
      %v5494 = vadd.f32 %v5462, %v5402
      %v5495 = vadd.f32 %v5463, %v5404
      %v5496 = vadd.f32 %v5464, %v5406
      %v5497 = vadd.f32 %v5465, %v5408
      %v5498 = vadd.f32 %v5466, %v5410
      %v5499 = vadd.f32 %v5467, %v5412
      %v5500 = vadd.f32 %v5468, %v5414
      %v5501 = vadd.f32 %v5469, %v5416
      %v5502 = vadd.f32 %v5470, %v5418
      %v5503 = vadd.f32 %v5471, %v5420
      %v5504 = vadd.f32 %v5472, %v5422
      %v5505 = vadd.f32 %v5473, %v5424
      %v5506 = vadd.f32 %v5474, %v5426
      %v5507 = vadd.f32 %v5475, %v5428
      %v5508 = vadd.f32 %v5476, %v5430
      %v5509 = vadd.f32 %v5477, %v5432
      %v5510 = vadd.f32 %v5478, %v5434
      %v5511 = vadd.f32 %v5479, %v5436
      %v5512 = vadd.f32 %v5480, %v5438
      %v5513 = vadd.f32 %v5481, %v5440
      %v5514 = vadd.f32 %v5482, %v5442
      %v5515 = vadd.f32 %v5483, %v5444
      %v5516 = vadd.f32 %v5484, %v5446
      %v5517 = vadd.f32 %v5485, %v5448
      %v5518 = vadd.f32 %v5486, %v5450
      %v5519 = vadd.f32 %v5487, %v5452
      %v5520 = vadd.f32 %v5488, %v5454
      %v5521 = vadd.f32 %v5489, %v5456
      %v5522 = vadd.f32 %v5490, %v5458
      %5523 = vst [vmem:[%s170] sm:$0xff] %v5491
      %5524 = vst [vmem:[%s170 + $0x8] sm:$0xff] %v5492
      %5525 = vst [vmem:[%s170 + $0x10] sm:$0xff] %v5493
      %5526 = vst [vmem:[%s170 + $0x18] sm:$0xff] %v5494
      %5527 = vst [vmem:[%s170 + $0x20] sm:$0xff] %v5495
      %5528 = vst [vmem:[%s170 + $0x28] sm:$0xff] %v5496
      %5529 = vst [vmem:[%s170 + $0x30] sm:$0xff] %v5497
      %5530 = vst [vmem:[%s170 + $0x38] sm:$0xff] %v5498
      %5531 = vst [vmem:[%s170 + $0x40] sm:$0xff] %v5499
      %5532 = vst [vmem:[%s170 + $0x48] sm:$0xff] %v5500
      %5533 = vst [vmem:[%s170 + $0x50] sm:$0xff] %v5501
      %5534 = vst [vmem:[%s170 + $0x58] sm:$0xff] %v5502
      %5535 = vst [vmem:[%s170 + $0x60] sm:$0xff] %v5503
      %5536 = vst [vmem:[%s170 + $0x68] sm:$0xff] %v5504
      %5537 = vst [vmem:[%s170 + $0x70] sm:$0xff] %v5505
      %5538 = vst [vmem:[%s170 + $0x78] sm:$0xff] %v5506
      %5539 = vst [vmem:[%s170 + $0x80] sm:$0xff] %v5507
      %5540 = vst [vmem:[%s170 + $0x88] sm:$0xff] %v5508
      %5541 = vst [vmem:[%s170 + $0x90] sm:$0xff] %v5509
      %5542 = vst [vmem:[%s170 + $0x98] sm:$0xff] %v5510
      %5543 = vst [vmem:[%s170 + $0xa0] sm:$0xff] %v5511
      %5544 = vst [vmem:[%s170 + $0xa8] sm:$0xff] %v5512
      %5545 = vst [vmem:[%s170 + $0xb0] sm:$0xff] %v5513
      %5546 = vst [vmem:[%s170 + $0xb8] sm:$0xff] %v5514
      %5547 = vst [vmem:[%s170 + $0xc0] sm:$0xff] %v5515
      %5548 = vst [vmem:[%s170 + $0xc8] sm:$0xff] %v5516
      %5549 = vst [vmem:[%s170 + $0xd0] sm:$0xff] %v5517
      %5550 = vst [vmem:[%s170 + $0xd8] sm:$0xff] %v5518
      %5551 = vst [vmem:[%s170 + $0xe0] sm:$0xff] %v5519
      %5552 = vst [vmem:[%s170 + $0xe8] sm:$0xff] %v5520
      %5553 = vst [vmem:[%s170 + $0xf0] sm:$0xff] %v5521
      %5554 = vst [vmem:[%s170 + $0xf8] sm:$0xff] %v5522
      %p5555 = scmp.lt.s32.totalorder %s14, 1
      %s5556 = scalar_select %p5555, %s14, 1
      %s5557 = smul.addr %s5556, 32
      %s5558 = smul.addr %s5557, 8
      %s5559 = scalar_lea.vmem %s3, %s5558
      // Predicated region
      $region33: #{resblock_conv_skip_forward.1} parent=31 // pred_check
        %p5560 = pneg %p100
      $region34: #{resblock_conv_skip_forward.1} parent=31 // pred_check_branch
        %5562 = sbr.rel (%p5560) target = $region36
      $region35: #{resblock_conv_skip_forward.1} parent=31 // pred_region
        _
      $region36: #{resblock_conv_skip_forward.1} parent=31 // pred_fallthru
        _
    $region32: #{resblock_conv_skip_forward.1} parent=5 // pred_fallthru
      _
    %p5563 = scmp.le.s32.totalorder 2, %s9
    // Predicated region
    $region37: #{resblock_conv_skip_forward.1} parent=5 // pred_check
      %p5564 = pneg %p5563
    $region38: #{resblock_conv_skip_forward.1} parent=5 // pred_check_branch
      %5566 = sbr.rel (%p5564) target = $region40
    $region39: #{resblock_conv_skip_forward.1} parent=5 // pred_region
      %s5567 = ssub.s32 %s9, 2
      // Predicated region
      $region41: #{resblock_conv_skip_forward.1} parent=39 // pred_check
        %p5568 = pneg %p106
      $region42: #{resblock_conv_skip_forward.1} parent=39 // pred_check_branch
        %5570 = sbr.rel (%p5568) target = $region44
      $region43: #{resblock_conv_skip_forward.1} parent=39 // pred_region
        %p5571 = scmp.lt.s32.totalorder %s15, 1
        %s5572 = scalar_select %p5571, %s15, 1
        %s5573 = smul.addr %s5572, 32
        %s5574 = smul.addr %s5573, 8
        %s5575 = scalar_lea.vmem %s3, %s5574
      $region44: #{resblock_conv_skip_forward.1} parent=39 // pred_fallthru
        _
    $region40: #{resblock_conv_skip_forward.1} parent=5 // pred_fallthru
      _
  $region6: #{resblock_conv_skip_forward.1} parent=0 // loop_footer
    %s13 = sadd.s32 1, %s9
  $region7: #{resblock_conv_skip_forward.1} parent=0 // loop_footer_branch
    %8 = sbr.rel target = $region3
  $region8: #{resblock_conv_skip_forward.1} parent=0 // loop_exit
    _

</llo_original>
